<compile_context>
chip_gen: v5e
topology: v5e:2x2
jax: 0.10.0
libtpu: 0.0.40
codegen_flags: <defaults>
</compile_context>

<pallas_src>
import math
import functools

import numpy as np
import jax
import jax.numpy as jnp
from jax import lax
from jax.experimental import pallas as pl
from jax.experimental.pallas import tpu as pltpu


# -----------------------------------------------------------------------------
# Single fused kernel: one grid step = one batch item's full forward pass.
# -----------------------------------------------------------------------------
def _fused_kernel(x_ref, mask_ref, pe_ref, w_in_ref, b_in_ref,
                  wqkv_ref, bqkv_ref, wo_ref, bo_ref,
                  g1_ref, be1_ref, g2_ref, be2_ref,
                  w1_ref, b1_ref, w2_ref, b2_ref,
                  wh_ref, bh_ref, o_ref, *, nhead, nlayers, eps=1e-5):
    # ---- TimeDistributed(input_block): Flatten -> Linear -> ReLU, then + pos. enc.
    x = x_ref[...]                                                     # (T, Fin)
    h = jnp.dot(x, w_in_ref[...], preferred_element_type=jnp.float32) + b_in_ref[...]
    h = jnp.maximum(h, 0.0)                                            # input block ReLU
    h = h + pe_ref[...]                                                # PositionalEncoding

    T, D = h.shape
    hd = D // nhead
    scale = 1.0 / math.sqrt(hd)

    for l in range(nlayers):                      # static unroll (nlayers is tiny)
        # ---- multi-head self-attention: all heads & Q/K/V in one batched einsum.
        hb = jnp.broadcast_to(h, (3 * nhead, T, D))                    # (3H, T, D)
        qkv = jnp.einsum("htd,hdk->htk", hb, wqkv_ref[l],
                         preferred_element_type=jnp.float32) + bqkv_ref[l]  # (3H, T, hd)
        q = qkv[:nhead]                                                # (H, T, hd)
        k = qkv[nhead:2 * nhead]
        v = qkv[2 * nhead:]

        s = jnp.einsum("hqd,hkd->hqk", q, k,
                       preferred_element_type=jnp.float32) * scale     # (H, T, T)
        s = s - jnp.max(s, axis=-1, keepdims=True)
        p = jnp.exp(s)
        p = p * pl.reciprocal(jnp.sum(p, axis=-1, keepdims=True), approx=False)
        ah = jnp.einsum("hqk,hkd->hqd", p, v,
                        preferred_element_type=jnp.float32)            # (H, T, hd)
        # concat(heads) @ Wo  ==  sum_h head_h @ Wo[h*hd:(h+1)*hd, :]
        attn = jnp.sum(jnp.einsum("htd,hdo->hto", ah, wo_ref[l],
                                  preferred_element_type=jnp.float32),
                       axis=0) + bo_ref[l]                             # (T, D)

        # ---- residual + LayerNorm1 (post-norm, norm_first=False)
        y = h + attn
        mu = jnp.mean(y, axis=-1, keepdims=True)
        var = jnp.mean((y - mu) ** 2, axis=-1, keepdims=True)
        y = (y - mu) * lax.rsqrt(var + eps) * g1_ref[l] + be1_ref[l]

        # ---- feed-forward: linear1 -> relu -> linear2
        f = jnp.dot(y, w1_ref[l], preferred_element_type=jnp.float32) + b1_ref[l]
        f = jnp.maximum(f, 0.0)
        f = jnp.dot(f, w2_ref[l], preferred_element_type=jnp.float32) + b2_ref[l]

        # ---- residual + LayerNorm2
        z = y + f
        mu2 = jnp.mean(z, axis=-1, keepdims=True)
        var2 = jnp.mean((z - mu2) ** 2, axis=-1, keepdims=True)
        h = (z - mu2) * lax.rsqrt(var2 + eps) * g2_ref[l] + be2_ref[l]

    # ---- head: TimeDistributed(Linear(D,1)) -> ReLU -> mask (lane reduction)
    logits = jnp.sum(h * wh_ref[...], axis=-1, keepdims=True) + bh_ref[...]   # (T, 1)
    o_ref[...] = jnp.maximum(logits, 0.0) * mask_ref[...]


def fused_forward(x3, mask3, pk, nhead):
    B, T, Fin = x3.shape
    L = pk["wqkv"].shape[0]

    kernel = functools.partial(_fused_kernel, nhead=nhead, nlayers=L)

    def full(a):
        # Whole-array block, constant block index -> stays resident across grid steps.
        n = a.ndim
        return pl.BlockSpec(a.shape, lambda b: (0,) * n)

    weights = [pk["pe"], pk["w_in"], pk["b_in"],
               pk["wqkv"], pk["bqkv"], pk["wo"], pk["bo"],
               pk["g1"], pk["be1"], pk["g2"], pk["be2"],
               pk["w1"], pk["b1"], pk["w2"], pk["b2"],
               pk["w_head"], pk["b_head"]]

    return pl.pallas_call(
        kernel,
        out_shape=jax.ShapeDtypeStruct((B, T, 1), jnp.float32),
        grid=(B,),
        in_specs=[pl.BlockSpec((None, T, Fin), lambda b: (b, 0, 0)),
                  pl.BlockSpec((None, T, 1), lambda b: (b, 0, 0))]
                 + [full(w) for w in weights],
        out_specs=pl.BlockSpec((None, T, 1), lambda b: (b, 0, 0)),
        compiler_params=pltpu.CompilerParams(dimension_semantics=("parallel",)),
    )(x3, mask3, *weights)


# -----------------------------------------------------------------------------
# Host-side weight packing (head-major QKV slab, per-head output projection).
# -----------------------------------------------------------------------------
def pack_params(params, T):
    D = params["w_in"].shape[1]
    nhead = params["nhead"]
    hd = D // nhead
    layers = params["layers"]

    def heads_w(w):   # (D, D) -> (H, D, hd): head h owns columns [h*hd, (h+1)*hd)
        return jnp.transpose(w.reshape(D, nhead, hd), (1, 0, 2))

    def heads_b(b):   # (1, D) -> (H, 1, hd)
        return b.reshape(nhead, hd)[:, None, :]

    wqkv = jnp.stack([jnp.concatenate([heads_w(lp["wq"]), heads_w(lp["wk"]),
                                       heads_w(lp["wv"])], axis=0)
                      for lp in layers])                                  # (L, 3H, D, hd)
    bqkv = jnp.stack([jnp.concatenate([heads_b(lp["bq"]), heads_b(lp["bk"]),
                                       heads_b(lp["bv"])], axis=0)
                      for lp in layers])                                  # (L, 3H, 1, hd)
    wo = jnp.stack([lp["wo"].reshape(nhead, hd, D) for lp in layers])     # (L, H, hd, D)

    stack = lambda key: jnp.stack([lp[key] for lp in layers])

    return {
        "pe": params["pe"][:T],
        "w_in": params["w_in"], "b_in": params["b_in"],
        "wqkv": wqkv, "bqkv": bqkv, "wo": wo, "bo": stack("bo"),
        "g1": stack("g1"), "be1": stack("be1"),
        "g2": stack("g2"), "be2": stack("be2"),
        "w1": stack("w1"), "b1": stack("b1"),
        "w2": stack("w2"), "b2": stack("b2"),
        "w_head": params["w_head"], "b_head": params["b_head"],
    }


def forward(x, params, outputs_mask):
    B, T = x.shape[0], x.shape[1]
    Fin = int(np.prod(x.shape[2:]))
    x3 = x.reshape(B, T, Fin).astype(jnp.float32)
    mask3 = outputs_mask.reshape(B, T, 1).astype(jnp.float32)
    packed = pack_params(params, T)
    return fused_forward(x3, mask3, packed, params["nhead"])


# -----------------------------------------------------------------------------
# Pure-JAX reference (for correctness check)
# -----------------------------------------------------------------------------
def _layernorm(x, g, b, eps=1e-5):
    mu = jnp.mean(x, axis=-1, keepdims=True)
    var = jnp.mean((x - mu) ** 2, axis=-1, keepdims=True)
    return (x - mu) * lax.rsqrt(var + eps) * g + b


def reference_forward(x, params, outputs_mask):
    B, T = x.shape[0], x.shape[1]
    D = params["w_in"].shape[1]
    nhead = params["nhead"]
    hd = D // nhead

    feats = jax.nn.relu(x.reshape(B * T, -1) @ params["w_in"] + params["b_in"])
    h = feats.reshape(B, T, D) + params["pe"][None, :T, :]

    for lp in params["layers"]:
        q = h @ lp["wq"] + lp["bq"]
        k = h @ lp["wk"] + lp["bk"]
        v = h @ lp["wv"] + lp["bv"]
        qh = q.reshape(B, T, nhead, hd).transpose(0, 2, 1, 3)
        kh = k.reshape(B, T, nhead, hd).transpose(0, 2, 1, 3)
        vh = v.reshape(B, T, nhead, hd).transpose(0, 2, 1, 3)
        s = jnp.einsum("bhqd,bhkd->bhqk", qh, kh) / math.sqrt(hd)
        p = jax.nn.softmax(s, axis=-1)
        o = jnp.einsum("bhqk,bhkd->bhqd", p, vh).transpose(0, 2, 1, 3).reshape(B, T, D)
        o = o @ lp["wo"] + lp["bo"]
        y = _layernorm(h + o, lp["g1"], lp["be1"])
        f = jax.nn.relu(y @ lp["w1"] + lp["b1"]) @ lp["w2"] + lp["b2"]
        h = _layernorm(y + f, lp["g2"], lp["be2"])

    out = jax.nn.relu(h.reshape(B * T, D) @ params["w_head"].T + params["b_head"])
    return (out * outputs_mask.reshape(B * T, 1)).reshape(B, T, 1)


# -----------------------------------------------------------------------------
# Deterministic parameter construction
# -----------------------------------------------------------------------------
def init_params(key, fin, d_model, nhead, nlayers, dff, n_frames):
    keys = jax.random.split(key, 3 + nlayers)
    p = {"nhead": nhead}

    s_in = 1.0 / math.sqrt(fin)
    p["w_in"] = jax.random.normal(keys[0], (fin, d_model), jnp.float32) * s_in
    p["b_in"] = jax.random.normal(keys[1], (1, d_model), jnp.float32) * 0.01

    # sinusoidal positional encoding buffer (max_len = n_of_frames + 1, d_model even)
    max_len = n_frames + 1
    pos = np.arange(max_len, dtype=np.float32)[:, None]
    div = np.exp(np.arange(0, d_model, 2, dtype=np.float32) * (-math.log(10000.0) / d_model))
    pe = np.zeros((max_len, d_model), np.float32)
    pe[:, 0::2] = np.sin(pos * div)
    pe[:, 1::2] = np.cos(pos * div)
    p["pe"] = jnp.asarray(pe)

    sd = 1.0 / math.sqrt(d_model)
    sf = 1.0 / math.sqrt(dff)
    layers = []
    for l in range(nlayers):
        lk = jax.random.split(keys[3 + l], 12)
        lp = {
            "wq": jax.random.normal(lk[0], (d_model, d_model), jnp.float32) * sd,
            "wk": jax.random.normal(lk[1], (d_model, d_model), jnp.float32) * sd,
            "wv": jax.random.normal(lk[2], (d_model, d_model), jnp.float32) * sd,
            "wo": jax.random.normal(lk[3], (d_model, d_model), jnp.float32) * sd,
            "bq": jax.random.normal(lk[4], (1, d_model), jnp.float32) * 0.01,
            "bk": jax.random.normal(lk[5], (1, d_model), jnp.float32) * 0.01,
            "bv": jax.random.normal(lk[6], (1, d_model), jnp.float32) * 0.01,
            "bo": jax.random.normal(lk[7], (1, d_model), jnp.float32) * 0.01,
            "w1": jax.random.normal(lk[8], (d_model, dff), jnp.float32) * sd,
            "b1": jax.random.normal(lk[9], (1, dff), jnp.float32) * 0.01,
            "w2": jax.random.normal(lk[10], (dff, d_model), jnp.float32) * sf,
            "b2": jax.random.normal(lk[11], (1, d_model), jnp.float32) * 0.01,
            "g1": jnp.ones((1, d_model), jnp.float32),
            "be1": jnp.zeros((1, d_model), jnp.float32),
            "g2": jnp.ones((1, d_model), jnp.float32),
            "be2": jnp.zeros((1, d_model), jnp.float32),
        }
        layers.append(lp)
    p["layers"] = layers

    hk = jax.random.split(keys[2], 2)
    p["w_head"] = jax.random.normal(hk[0], (1, d_model), jnp.float32) * sd  # Linear(D,1).weight
    p["b_head"] = jax.random.normal(hk[1], (1, 1), jnp.float32) * 0.01
    return p


if __name__ == "__main__":
    # Small shapes consistent with the module's (B, T, C, H, W) input convention.
    B, T, C, H, W = 2, 8, 4, 16, 16              # n_of_frames = 8
    D_MODEL, NHEAD, NLAYERS, DFF = 32, 4, 2, 64  # input_feature_dim == d_model == 32

    root = jax.random.PRNGKey(0)
    k_x, k_m, k_p = jax.random.split(root, 3)

    x = jax.random.normal(k_x, (B, T, C, H, W), jnp.float32)
    outputs_mask = (jax.random.uniform(k_m, (B, T, 1)) > 0.3).astype(jnp.float32)
    params = init_params(k_p, C * H * W, D_MODEL, NHEAD, NLAYERS, DFF, T)

    out = jax.block_until_ready(forward(x, params, outputs_mask))
    ref = jax.block_until_ready(reference_forward(x, params, outputs_mask))

    assert out.shape == (B, T, 1)
    np.testing.assert_allclose(np.asarray(out), np.asarray(ref), rtol=1e-4, atol=1e-4)

    print("KERNEL_OK")
</pallas_src>

<mosaic_0001>
module attributes {stable_mosaic.version = 11 : i64} {
  func.func @_fused_kernel(%arg0: i32, %arg1: memref<1x8x1024xf32, #tpu.memory_space<vmem>>, %arg2: memref<1x8x1xf32, #tpu.memory_space<vmem>>, %arg3: memref<8x32xf32, #tpu.memory_space<vmem>>, %arg4: memref<1024x32xf32, #tpu.memory_space<vmem>>, %arg5: memref<1x32xf32, #tpu.memory_space<vmem>>, %arg6: memref<2x12x32x8xf32, #tpu.memory_space<vmem>>, %arg7: memref<2x12x1x8xf32, #tpu.memory_space<vmem>>, %arg8: memref<2x4x8x32xf32, #tpu.memory_space<vmem>>, %arg9: memref<2x1x32xf32, #tpu.memory_space<vmem>>, %arg10: memref<2x1x32xf32, #tpu.memory_space<vmem>>, %arg11: memref<2x1x32xf32, #tpu.memory_space<vmem>>, %arg12: memref<2x1x32xf32, #tpu.memory_space<vmem>>, %arg13: memref<2x1x32xf32, #tpu.memory_space<vmem>>, %arg14: memref<2x32x64xf32, #tpu.memory_space<vmem>>, %arg15: memref<2x1x64xf32, #tpu.memory_space<vmem>>, %arg16: memref<2x64x32xf32, #tpu.memory_space<vmem>>, %arg17: memref<2x1x32xf32, #tpu.memory_space<vmem>>, %arg18: memref<1x32xf32, #tpu.memory_space<vmem>>, %arg19: memref<1x1xf32, #tpu.memory_space<vmem>>, %arg20: memref<1x8x1xf32, #tpu.memory_space<vmem>>) attributes {dimension_semantics = [#tpu.dimension_semantics<parallel>], iteration_bounds = array<i64: 2>, scalar_prefetch = 0 : i64, scratch_operands = 0 : i64, tpu.core_type = #tpu.core_type<tc>, window_params = [{transform_indices = @transform_0, window_bounds = array<i64: 1, 8, 1024>}, {transform_indices = @transform_1, window_bounds = array<i64: 1, 8, 1>}, {pipeline_mode = #tpu.pipeline_mode<synchronous>, transform_indices = @transform_2, window_bounds = array<i64: 8, 32>}, {pipeline_mode = #tpu.pipeline_mode<synchronous>, transform_indices = @transform_3, window_bounds = array<i64: 1024, 32>}, {pipeline_mode = #tpu.pipeline_mode<synchronous>, transform_indices = @transform_4, window_bounds = array<i64: 1, 32>}, {pipeline_mode = #tpu.pipeline_mode<synchronous>, transform_indices = @transform_5, window_bounds = array<i64: 2, 12, 32, 8>}, {pipeline_mode = #tpu.pipeline_mode<synchronous>, transform_indices = @transform_6, window_bounds = array<i64: 2, 12, 1, 8>}, {pipeline_mode = #tpu.pipeline_mode<synchronous>, transform_indices = @transform_7, window_bounds = array<i64: 2, 4, 8, 32>}, {pipeline_mode = #tpu.pipeline_mode<synchronous>, transform_indices = @transform_8, window_bounds = array<i64: 2, 1, 32>}, {pipeline_mode = #tpu.pipeline_mode<synchronous>, transform_indices = @transform_9, window_bounds = array<i64: 2, 1, 32>}, {pipeline_mode = #tpu.pipeline_mode<synchronous>, transform_indices = @transform_10, window_bounds = array<i64: 2, 1, 32>}, {pipeline_mode = #tpu.pipeline_mode<synchronous>, transform_indices = @transform_11, window_bounds = array<i64: 2, 1, 32>}, {pipeline_mode = #tpu.pipeline_mode<synchronous>, transform_indices = @transform_12, window_bounds = array<i64: 2, 1, 32>}, {pipeline_mode = #tpu.pipeline_mode<synchronous>, transform_indices = @transform_13, window_bounds = array<i64: 2, 32, 64>}, {pipeline_mode = #tpu.pipeline_mode<synchronous>, transform_indices = @transform_14, window_bounds = array<i64: 2, 1, 64>}, {pipeline_mode = #tpu.pipeline_mode<synchronous>, transform_indices = @transform_15, window_bounds = array<i64: 2, 64, 32>}, {pipeline_mode = #tpu.pipeline_mode<synchronous>, transform_indices = @transform_16, window_bounds = array<i64: 2, 1, 32>}, {pipeline_mode = #tpu.pipeline_mode<synchronous>, transform_indices = @transform_17, window_bounds = array<i64: 1, 32>}, {pipeline_mode = #tpu.pipeline_mode<synchronous>, transform_indices = @transform_18, window_bounds = array<i64: 1, 1>}, {transform_indices = @transform_19, window_bounds = array<i64: 1, 8, 1>}]} {
    %c0 = arith.constant 0 : index
    %c0_0 = arith.constant 0 : index
    %c0_1 = arith.constant 0 : index
    %0 = vector.load %arg1[%c0, %c0_0, %c0_1] : memref<1x8x1024xf32, #tpu.memory_space<vmem>>, vector<1x8x1024xf32>
    %1 = vector.shape_cast %0 : vector<1x8x1024xf32> to vector<8x1024xf32>
    %c0_2 = arith.constant 0 : index
    %c0_3 = arith.constant 0 : index
    %2 = vector.load %arg4[%c0_2, %c0_3] : memref<1024x32xf32, #tpu.memory_space<vmem>>, vector<1024x32xf32>
    %cst = arith.constant dense<0.000000e+00> : vector<8x32xf32>
    %3 = tpu.matmul %1, %2, %cst {dimension_numbers = #tpu.dot_dimension_numbers<[1], [0], [0], [1], [0, 0, 1, 1], [], []>} : vector<8x1024xf32>, vector<1024x32xf32>, vector<8x32xf32> -> vector<8x32xf32>
    %c0_4 = arith.constant 0 : index
    %c0_5 = arith.constant 0 : index
    %4 = vector.load %arg5[%c0_4, %c0_5] : memref<1x32xf32, #tpu.memory_space<vmem>>, vector<1x32xf32>
    %5 = vector.broadcast %4 : vector<1x32xf32> to vector<8x32xf32>
    %6 = arith.addf %3, %5 : vector<8x32xf32>
    %cst_6 = arith.constant 0.000000e+00 : f32
    %7 = vector.broadcast %cst_6 : f32 to vector<8x32xf32>
    %8 = arith.maximumf %6, %7 : vector<8x32xf32>
    %c0_7 = arith.constant 0 : index
    %c0_8 = arith.constant 0 : index
    %9 = vector.load %arg3[%c0_7, %c0_8] : memref<8x32xf32, #tpu.memory_space<vmem>>, vector<8x32xf32>
    %10 = arith.addf %8, %9 : vector<8x32xf32>
    %11 = vector.shape_cast %10 : vector<8x32xf32> to vector<1x8x32xf32>
    %12 = vector.broadcast %11 : vector<1x8x32xf32> to vector<12x8x32xf32>
    %c0_9 = arith.constant 0 : index
    %c0_10 = arith.constant 0 : index
    %c0_11 = arith.constant 0 : index
    %c0_12 = arith.constant 0 : index
    %13 = vector.load %arg6[%c0_9, %c0_10, %c0_11, %c0_12] : memref<2x12x32x8xf32, #tpu.memory_space<vmem>>, vector<1x12x32x8xf32>
    %14 = vector.shape_cast %13 : vector<1x12x32x8xf32> to vector<12x32x8xf32>
    "tpu.trace_start"() <{level = 10 : i32, message = "htd,hdk->htk"}> : () -> ()
    %cst_13 = arith.constant dense<0.000000e+00> : vector<12x8x8xf32>
    %15 = tpu.matmul %12, %14, %cst_13 {dimension_numbers = #tpu.dot_dimension_numbers<[2], [1], [1], [2], [0, 0, 0, 1, 1, 2], [0], [0]>} : vector<12x8x32xf32>, vector<12x32x8xf32>, vector<12x8x8xf32> -> vector<12x8x8xf32>
    "tpu.trace_stop"() : () -> ()
    %c0_14 = arith.constant 0 : index
    %c0_15 = arith.constant 0 : index
    %c0_16 = arith.constant 0 : index
    %c0_17 = arith.constant 0 : index
    %16 = vector.load %arg7[%c0_14, %c0_15, %c0_16, %c0_17] : memref<2x12x1x8xf32, #tpu.memory_space<vmem>>, vector<1x12x1x8xf32>
    %17 = vector.shape_cast %16 : vector<1x12x1x8xf32> to vector<12x1x8xf32>
    %18 = vector.broadcast %17 : vector<12x1x8xf32> to vector<12x8x8xf32>
    %19 = arith.addf %15, %18 : vector<12x8x8xf32>
    %20 = vector.extract_strided_slice %19 {offsets = [0, 0, 0], sizes = [4, 8, 8], strides = [1, 1, 1]} : vector<12x8x8xf32> to vector<4x8x8xf32>
    %21 = vector.extract_strided_slice %19 {offsets = [4, 0, 0], sizes = [4, 8, 8], strides = [1, 1, 1]} : vector<12x8x8xf32> to vector<4x8x8xf32>
    %22 = vector.extract_strided_slice %19 {offsets = [8, 0, 0], sizes = [4, 8, 8], strides = [1, 1, 1]} : vector<12x8x8xf32> to vector<4x8x8xf32>
    "tpu.trace_start"() <{level = 10 : i32, message = "hqd,hkd->hqk"}> : () -> ()
    %cst_18 = arith.constant dense<0.000000e+00> : vector<4x8x8xf32>
    %23 = tpu.matmul %20, %21, %cst_18 {dimension_numbers = #tpu.dot_dimension_numbers<[2], [2], [1], [1], [0, 0, 0, 1, 1, 1], [0], [0]>} : vector<4x8x8xf32>, vector<4x8x8xf32>, vector<4x8x8xf32> -> vector<4x8x8xf32>
    "tpu.trace_stop"() : () -> ()
    %cst_19 = arith.constant 0.353553385 : f32
    %24 = vector.broadcast %cst_19 : f32 to vector<4x8x8xf32>
    %25 = arith.mulf %23, %24 : vector<4x8x8xf32>
    %cst_20 = arith.constant dense<0xFF800000> : vector<4x8xf32>
    %26 = vector.multi_reduction <maximumf>, %25, %cst_20 [2] : vector<4x8x8xf32> to vector<4x8xf32>
    %27 = vector.shape_cast %26 : vector<4x8xf32> to vector<4x8x1xf32>
    %28 = vector.broadcast %27 : vector<4x8x1xf32> to vector<4x8x8xf32>
    %29 = arith.subf %25, %28 : vector<4x8x8xf32>
    %30 = math.exp %29 : vector<4x8x8xf32>
    %cst_21 = arith.constant dense<0.000000e+00> : vector<4x8xf32>
    %31 = vector.multi_reduction <add>, %30, %cst_21 [2] : vector<4x8x8xf32> to vector<4x8xf32>
    %32 = vector.shape_cast %31 : vector<4x8xf32> to vector<4x8x1xf32>
    %33 = tpu.reciprocal %32 : vector<4x8x1xf32> -> vector<4x8x1xf32>
    %34 = vector.broadcast %33 : vector<4x8x1xf32> to vector<4x8x8xf32>
    %35 = arith.mulf %30, %34 : vector<4x8x8xf32>
    "tpu.trace_start"() <{level = 10 : i32, message = "hqk,hkd->hqd"}> : () -> ()
    %cst_22 = arith.constant dense<0.000000e+00> : vector<4x8x8xf32>
    %36 = tpu.matmul %35, %22, %cst_22 {dimension_numbers = #tpu.dot_dimension_numbers<[2], [1], [1], [2], [0, 0, 0, 1, 1, 2], [0], [0]>} : vector<4x8x8xf32>, vector<4x8x8xf32>, vector<4x8x8xf32> -> vector<4x8x8xf32>
    "tpu.trace_stop"() : () -> ()
    %c0_23 = arith.constant 0 : index
    %c0_24 = arith.constant 0 : index
    %c0_25 = arith.constant 0 : index
    %c0_26 = arith.constant 0 : index
    %37 = vector.load %arg8[%c0_23, %c0_24, %c0_25, %c0_26] : memref<2x4x8x32xf32, #tpu.memory_space<vmem>>, vector<1x4x8x32xf32>
    %38 = vector.shape_cast %37 : vector<1x4x8x32xf32> to vector<4x8x32xf32>
    "tpu.trace_start"() <{level = 10 : i32, message = "htd,hdo->hto"}> : () -> ()
    %cst_27 = arith.constant dense<0.000000e+00> : vector<4x8x32xf32>
    %39 = tpu.matmul %36, %38, %cst_27 {dimension_numbers = #tpu.dot_dimension_numbers<[2], [1], [1], [2], [0, 0, 0, 1, 1, 2], [0], [0]>} : vector<4x8x8xf32>, vector<4x8x32xf32>, vector<4x8x32xf32> -> vector<4x8x32xf32>
    "tpu.trace_stop"() : () -> ()
    %cst_28 = arith.constant dense<0.000000e+00> : vector<8x32xf32>
    %40 = vector.multi_reduction <add>, %39, %cst_28 [0] : vector<4x8x32xf32> to vector<8x32xf32>
    %c0_29 = arith.constant 0 : index
    %c0_30 = arith.constant 0 : index
    %c0_31 = arith.constant 0 : index
    %41 = vector.load %arg9[%c0_29, %c0_30, %c0_31] : memref<2x1x32xf32, #tpu.memory_space<vmem>>, vector<1x1x32xf32>
    %42 = vector.shape_cast %41 : vector<1x1x32xf32> to vector<1x32xf32>
    %43 = vector.broadcast %42 : vector<1x32xf32> to vector<8x32xf32>
    %44 = arith.addf %40, %43 : vector<8x32xf32>
    %45 = arith.addf %10, %44 : vector<8x32xf32>
    %cst_32 = arith.constant dense<0.000000e+00> : vector<8xf32>
    %46 = vector.multi_reduction <add>, %45, %cst_32 [1] : vector<8x32xf32> to vector<8xf32>
    %47 = vector.shape_cast %46 : vector<8xf32> to vector<8x1xf32>
    %cst_33 = arith.constant 3.200000e+01 : f32
    %48 = vector.broadcast %cst_33 : f32 to vector<8x1xf32>
    %49 = arith.divf %47, %48 : vector<8x1xf32>
    %50 = vector.broadcast %49 : vector<8x1xf32> to vector<8x32xf32>
    %51 = arith.subf %45, %50 : vector<8x32xf32>
    %52 = arith.mulf %51, %51 : vector<8x32xf32>
    %cst_34 = arith.constant dense<0.000000e+00> : vector<8xf32>
    %53 = vector.multi_reduction <add>, %52, %cst_34 [1] : vector<8x32xf32> to vector<8xf32>
    %54 = vector.shape_cast %53 : vector<8xf32> to vector<8x1xf32>
    %cst_35 = arith.constant 3.200000e+01 : f32
    %55 = vector.broadcast %cst_35 : f32 to vector<8x1xf32>
    %56 = arith.divf %54, %55 : vector<8x1xf32>
    %57 = vector.broadcast %49 : vector<8x1xf32> to vector<8x32xf32>
    %58 = arith.subf %45, %57 : vector<8x32xf32>
    %cst_36 = arith.constant 9.99999974E-6 : f32
    %59 = vector.broadcast %cst_36 : f32 to vector<8x1xf32>
    %60 = arith.addf %56, %59 : vector<8x1xf32>
    %61 = math.rsqrt %60 : vector<8x1xf32>
    %62 = vector.broadcast %61 : vector<8x1xf32> to vector<8x32xf32>
    %63 = arith.mulf %58, %62 : vector<8x32xf32>
    %c0_37 = arith.constant 0 : index
    %c0_38 = arith.constant 0 : index
    %c0_39 = arith.constant 0 : index
    %64 = vector.load %arg10[%c0_37, %c0_38, %c0_39] : memref<2x1x32xf32, #tpu.memory_space<vmem>>, vector<1x1x32xf32>
    %65 = vector.shape_cast %64 : vector<1x1x32xf32> to vector<1x32xf32>
    %66 = vector.broadcast %65 : vector<1x32xf32> to vector<8x32xf32>
    %67 = arith.mulf %63, %66 : vector<8x32xf32>
    %c0_40 = arith.constant 0 : index
    %c0_41 = arith.constant 0 : index
    %c0_42 = arith.constant 0 : index
    %68 = vector.load %arg11[%c0_40, %c0_41, %c0_42] : memref<2x1x32xf32, #tpu.memory_space<vmem>>, vector<1x1x32xf32>
    %69 = vector.shape_cast %68 : vector<1x1x32xf32> to vector<1x32xf32>
    %70 = vector.broadcast %69 : vector<1x32xf32> to vector<8x32xf32>
    %71 = arith.addf %67, %70 : vector<8x32xf32>
    %c0_43 = arith.constant 0 : index
    %c0_44 = arith.constant 0 : index
    %c0_45 = arith.constant 0 : index
    %72 = vector.load %arg14[%c0_43, %c0_44, %c0_45] : memref<2x32x64xf32, #tpu.memory_space<vmem>>, vector<1x32x64xf32>
    %73 = vector.shape_cast %72 : vector<1x32x64xf32> to vector<32x64xf32>
    %cst_46 = arith.constant dense<0.000000e+00> : vector<8x64xf32>
    %74 = tpu.matmul %71, %73, %cst_46 {dimension_numbers = #tpu.dot_dimension_numbers<[1], [0], [0], [1], [0, 0, 1, 1], [], []>} : vector<8x32xf32>, vector<32x64xf32>, vector<8x64xf32> -> vector<8x64xf32>
    %c0_47 = arith.constant 0 : index
    %c0_48 = arith.constant 0 : index
    %c0_49 = arith.constant 0 : index
    %75 = vector.load %arg15[%c0_47, %c0_48, %c0_49] : memref<2x1x64xf32, #tpu.memory_space<vmem>>, vector<1x1x64xf32>
    %76 = vector.shape_cast %75 : vector<1x1x64xf32> to vector<1x64xf32>
    %77 = vector.broadcast %76 : vector<1x64xf32> to vector<8x64xf32>
    %78 = arith.addf %74, %77 : vector<8x64xf32>
    %cst_50 = arith.constant 0.000000e+00 : f32
    %79 = vector.broadcast %cst_50 : f32 to vector<8x64xf32>
    %80 = arith.maximumf %78, %79 : vector<8x64xf32>
    %c0_51 = arith.constant 0 : index
    %c0_52 = arith.constant 0 : index
    %c0_53 = arith.constant 0 : index
    %81 = vector.load %arg16[%c0_51, %c0_52, %c0_53] : memref<2x64x32xf32, #tpu.memory_space<vmem>>, vector<1x64x32xf32>
    %82 = vector.shape_cast %81 : vector<1x64x32xf32> to vector<64x32xf32>
    %cst_54 = arith.constant dense<0.000000e+00> : vector<8x32xf32>
    %83 = tpu.matmul %80, %82, %cst_54 {dimension_numbers = #tpu.dot_dimension_numbers<[1], [0], [0], [1], [0, 0, 1, 1], [], []>} : vector<8x64xf32>, vector<64x32xf32>, vector<8x32xf32> -> vector<8x32xf32>
    %c0_55 = arith.constant 0 : index
    %c0_56 = arith.constant 0 : index
    %c0_57 = arith.constant 0 : index
    %84 = vector.load %arg17[%c0_55, %c0_56, %c0_57] : memref<2x1x32xf32, #tpu.memory_space<vmem>>, vector<1x1x32xf32>
    %85 = vector.shape_cast %84 : vector<1x1x32xf32> to vector<1x32xf32>
    %86 = vector.broadcast %85 : vector<1x32xf32> to vector<8x32xf32>
    %87 = arith.addf %83, %86 : vector<8x32xf32>
    %88 = arith.addf %71, %87 : vector<8x32xf32>
    %cst_58 = arith.constant dense<0.000000e+00> : vector<8xf32>
    %89 = vector.multi_reduction <add>, %88, %cst_58 [1] : vector<8x32xf32> to vector<8xf32>
    %90 = vector.shape_cast %89 : vector<8xf32> to vector<8x1xf32>
    %cst_59 = arith.constant 3.200000e+01 : f32
    %91 = vector.broadcast %cst_59 : f32 to vector<8x1xf32>
    %92 = arith.divf %90, %91 : vector<8x1xf32>
    %93 = vector.broadcast %92 : vector<8x1xf32> to vector<8x32xf32>
    %94 = arith.subf %88, %93 : vector<8x32xf32>
    %95 = arith.mulf %94, %94 : vector<8x32xf32>
    %cst_60 = arith.constant dense<0.000000e+00> : vector<8xf32>
    %96 = vector.multi_reduction <add>, %95, %cst_60 [1] : vector<8x32xf32> to vector<8xf32>
    %97 = vector.shape_cast %96 : vector<8xf32> to vector<8x1xf32>
    %cst_61 = arith.constant 3.200000e+01 : f32
    %98 = vector.broadcast %cst_61 : f32 to vector<8x1xf32>
    %99 = arith.divf %97, %98 : vector<8x1xf32>
    %100 = vector.broadcast %92 : vector<8x1xf32> to vector<8x32xf32>
    %101 = arith.subf %88, %100 : vector<8x32xf32>
    %cst_62 = arith.constant 9.99999974E-6 : f32
    %102 = vector.broadcast %cst_62 : f32 to vector<8x1xf32>
    %103 = arith.addf %99, %102 : vector<8x1xf32>
    %104 = math.rsqrt %103 : vector<8x1xf32>
    %105 = vector.broadcast %104 : vector<8x1xf32> to vector<8x32xf32>
    %106 = arith.mulf %101, %105 : vector<8x32xf32>
    %c0_63 = arith.constant 0 : index
    %c0_64 = arith.constant 0 : index
    %c0_65 = arith.constant 0 : index
    %107 = vector.load %arg12[%c0_63, %c0_64, %c0_65] : memref<2x1x32xf32, #tpu.memory_space<vmem>>, vector<1x1x32xf32>
    %108 = vector.shape_cast %107 : vector<1x1x32xf32> to vector<1x32xf32>
    %109 = vector.broadcast %108 : vector<1x32xf32> to vector<8x32xf32>
    %110 = arith.mulf %106, %109 : vector<8x32xf32>
    %c0_66 = arith.constant 0 : index
    %c0_67 = arith.constant 0 : index
    %c0_68 = arith.constant 0 : index
    %111 = vector.load %arg13[%c0_66, %c0_67, %c0_68] : memref<2x1x32xf32, #tpu.memory_space<vmem>>, vector<1x1x32xf32>
    %112 = vector.shape_cast %111 : vector<1x1x32xf32> to vector<1x32xf32>
    %113 = vector.broadcast %112 : vector<1x32xf32> to vector<8x32xf32>
    %114 = arith.addf %110, %113 : vector<8x32xf32>
    %115 = vector.shape_cast %114 : vector<8x32xf32> to vector<1x8x32xf32>
    %116 = vector.broadcast %115 : vector<1x8x32xf32> to vector<12x8x32xf32>
    %c1 = arith.constant 1 : index
    %c0_69 = arith.constant 0 : index
    %c0_70 = arith.constant 0 : index
    %c0_71 = arith.constant 0 : index
    %117 = vector.load %arg6[%c1, %c0_69, %c0_70, %c0_71] : memref<2x12x32x8xf32, #tpu.memory_space<vmem>>, vector<1x12x32x8xf32>
    %118 = vector.shape_cast %117 : vector<1x12x32x8xf32> to vector<12x32x8xf32>
    "tpu.trace_start"() <{level = 10 : i32, message = "htd,hdk->htk"}> : () -> ()
    %cst_72 = arith.constant dense<0.000000e+00> : vector<12x8x8xf32>
    %119 = tpu.matmul %116, %118, %cst_72 {dimension_numbers = #tpu.dot_dimension_numbers<[2], [1], [1], [2], [0, 0, 0, 1, 1, 2], [0], [0]>} : vector<12x8x32xf32>, vector<12x32x8xf32>, vector<12x8x8xf32> -> vector<12x8x8xf32>
    "tpu.trace_stop"() : () -> ()
    %c1_73 = arith.constant 1 : index
    %c0_74 = arith.constant 0 : index
    %c0_75 = arith.constant 0 : index
    %c0_76 = arith.constant 0 : index
    %120 = vector.load %arg7[%c1_73, %c0_74, %c0_75, %c0_76] : memref<2x12x1x8xf32, #tpu.memory_space<vmem>>, vector<1x12x1x8xf32>
    %121 = vector.shape_cast %120 : vector<1x12x1x8xf32> to vector<12x1x8xf32>
    %122 = vector.broadcast %121 : vector<12x1x8xf32> to vector<12x8x8xf32>
    %123 = arith.addf %119, %122 : vector<12x8x8xf32>
    %124 = vector.extract_strided_slice %123 {offsets = [0, 0, 0], sizes = [4, 8, 8], strides = [1, 1, 1]} : vector<12x8x8xf32> to vector<4x8x8xf32>
    %125 = vector.extract_strided_slice %123 {offsets = [4, 0, 0], sizes = [4, 8, 8], strides = [1, 1, 1]} : vector<12x8x8xf32> to vector<4x8x8xf32>
    %126 = vector.extract_strided_slice %123 {offsets = [8, 0, 0], sizes = [4, 8, 8], strides = [1, 1, 1]} : vector<12x8x8xf32> to vector<4x8x8xf32>
    "tpu.trace_start"() <{level = 10 : i32, message = "hqd,hkd->hqk"}> : () -> ()
    %cst_77 = arith.constant dense<0.000000e+00> : vector<4x8x8xf32>
    %127 = tpu.matmul %124, %125, %cst_77 {dimension_numbers = #tpu.dot_dimension_numbers<[2], [2], [1], [1], [0, 0, 0, 1, 1, 1], [0], [0]>} : vector<4x8x8xf32>, vector<4x8x8xf32>, vector<4x8x8xf32> -> vector<4x8x8xf32>
    "tpu.trace_stop"() : () -> ()
    %cst_78 = arith.constant 0.353553385 : f32
    %128 = vector.broadcast %cst_78 : f32 to vector<4x8x8xf32>
    %129 = arith.mulf %127, %128 : vector<4x8x8xf32>
    %cst_79 = arith.constant dense<0xFF800000> : vector<4x8xf32>
    %130 = vector.multi_reduction <maximumf>, %129, %cst_79 [2] : vector<4x8x8xf32> to vector<4x8xf32>
    %131 = vector.shape_cast %130 : vector<4x8xf32> to vector<4x8x1xf32>
    %132 = vector.broadcast %131 : vector<4x8x1xf32> to vector<4x8x8xf32>
    %133 = arith.subf %129, %132 : vector<4x8x8xf32>
    %134 = math.exp %133 : vector<4x8x8xf32>
    %cst_80 = arith.constant dense<0.000000e+00> : vector<4x8xf32>
    %135 = vector.multi_reduction <add>, %134, %cst_80 [2] : vector<4x8x8xf32> to vector<4x8xf32>
    %136 = vector.shape_cast %135 : vector<4x8xf32> to vector<4x8x1xf32>
    %137 = tpu.reciprocal %136 : vector<4x8x1xf32> -> vector<4x8x1xf32>
    %138 = vector.broadcast %137 : vector<4x8x1xf32> to vector<4x8x8xf32>
    %139 = arith.mulf %134, %138 : vector<4x8x8xf32>
    "tpu.trace_start"() <{level = 10 : i32, message = "hqk,hkd->hqd"}> : () -> ()
    %cst_81 = arith.constant dense<0.000000e+00> : vector<4x8x8xf32>
    %140 = tpu.matmul %139, %126, %cst_81 {dimension_numbers = #tpu.dot_dimension_numbers<[2], [1], [1], [2], [0, 0, 0, 1, 1, 2], [0], [0]>} : vector<4x8x8xf32>, vector<4x8x8xf32>, vector<4x8x8xf32> -> vector<4x8x8xf32>
    "tpu.trace_stop"() : () -> ()
    %c1_82 = arith.constant 1 : index
    %c0_83 = arith.constant 0 : index
    %c0_84 = arith.constant 0 : index
    %c0_85 = arith.constant 0 : index
    %141 = vector.load %arg8[%c1_82, %c0_83, %c0_84, %c0_85] : memref<2x4x8x32xf32, #tpu.memory_space<vmem>>, vector<1x4x8x32xf32>
    %142 = vector.shape_cast %141 : vector<1x4x8x32xf32> to vector<4x8x32xf32>
    "tpu.trace_start"() <{level = 10 : i32, message = "htd,hdo->hto"}> : () -> ()
    %cst_86 = arith.constant dense<0.000000e+00> : vector<4x8x32xf32>
    %143 = tpu.matmul %140, %142, %cst_86 {dimension_numbers = #tpu.dot_dimension_numbers<[2], [1], [1], [2], [0, 0, 0, 1, 1, 2], [0], [0]>} : vector<4x8x8xf32>, vector<4x8x32xf32>, vector<4x8x32xf32> -> vector<4x8x32xf32>
    "tpu.trace_stop"() : () -> ()
    %cst_87 = arith.constant dense<0.000000e+00> : vector<8x32xf32>
    %144 = vector.multi_reduction <add>, %143, %cst_87 [0] : vector<4x8x32xf32> to vector<8x32xf32>
    %c1_88 = arith.constant 1 : index
    %c0_89 = arith.constant 0 : index
    %c0_90 = arith.constant 0 : index
    %145 = vector.load %arg9[%c1_88, %c0_89, %c0_90] : memref<2x1x32xf32, #tpu.memory_space<vmem>>, vector<1x1x32xf32>
    %146 = vector.shape_cast %145 : vector<1x1x32xf32> to vector<1x32xf32>
    %147 = vector.broadcast %146 : vector<1x32xf32> to vector<8x32xf32>
    %148 = arith.addf %144, %147 : vector<8x32xf32>
    %149 = arith.addf %114, %148 : vector<8x32xf32>
    %cst_91 = arith.constant dense<0.000000e+00> : vector<8xf32>
    %150 = vector.multi_reduction <add>, %149, %cst_91 [1] : vector<8x32xf32> to vector<8xf32>
    %151 = vector.shape_cast %150 : vector<8xf32> to vector<8x1xf32>
    %cst_92 = arith.constant 3.200000e+01 : f32
    %152 = vector.broadcast %cst_92 : f32 to vector<8x1xf32>
    %153 = arith.divf %151, %152 : vector<8x1xf32>
    %154 = vector.broadcast %153 : vector<8x1xf32> to vector<8x32xf32>
    %155 = arith.subf %149, %154 : vector<8x32xf32>
    %156 = arith.mulf %155, %155 : vector<8x32xf32>
    %cst_93 = arith.constant dense<0.000000e+00> : vector<8xf32>
    %157 = vector.multi_reduction <add>, %156, %cst_93 [1] : vector<8x32xf32> to vector<8xf32>
    %158 = vector.shape_cast %157 : vector<8xf32> to vector<8x1xf32>
    %cst_94 = arith.constant 3.200000e+01 : f32
    %159 = vector.broadcast %cst_94 : f32 to vector<8x1xf32>
    %160 = arith.divf %158, %159 : vector<8x1xf32>
    %161 = vector.broadcast %153 : vector<8x1xf32> to vector<8x32xf32>
    %162 = arith.subf %149, %161 : vector<8x32xf32>
    %cst_95 = arith.constant 9.99999974E-6 : f32
    %163 = vector.broadcast %cst_95 : f32 to vector<8x1xf32>
    %164 = arith.addf %160, %163 : vector<8x1xf32>
    %165 = math.rsqrt %164 : vector<8x1xf32>
    %166 = vector.broadcast %165 : vector<8x1xf32> to vector<8x32xf32>
    %167 = arith.mulf %162, %166 : vector<8x32xf32>
    %c1_96 = arith.constant 1 : index
    %c0_97 = arith.constant 0 : index
    %c0_98 = arith.constant 0 : index
    %168 = vector.load %arg10[%c1_96, %c0_97, %c0_98] : memref<2x1x32xf32, #tpu.memory_space<vmem>>, vector<1x1x32xf32>
    %169 = vector.shape_cast %168 : vector<1x1x32xf32> to vector<1x32xf32>
    %170 = vector.broadcast %169 : vector<1x32xf32> to vector<8x32xf32>
    %171 = arith.mulf %167, %170 : vector<8x32xf32>
    %c1_99 = arith.constant 1 : index
    %c0_100 = arith.constant 0 : index
    %c0_101 = arith.constant 0 : index
    %172 = vector.load %arg11[%c1_99, %c0_100, %c0_101] : memref<2x1x32xf32, #tpu.memory_space<vmem>>, vector<1x1x32xf32>
    %173 = vector.shape_cast %172 : vector<1x1x32xf32> to vector<1x32xf32>
    %174 = vector.broadcast %173 : vector<1x32xf32> to vector<8x32xf32>
    %175 = arith.addf %171, %174 : vector<8x32xf32>
    %c1_102 = arith.constant 1 : index
    %c0_103 = arith.constant 0 : index
    %c0_104 = arith.constant 0 : index
    %176 = vector.load %arg14[%c1_102, %c0_103, %c0_104] : memref<2x32x64xf32, #tpu.memory_space<vmem>>, vector<1x32x64xf32>
    %177 = vector.shape_cast %176 : vector<1x32x64xf32> to vector<32x64xf32>
    %cst_105 = arith.constant dense<0.000000e+00> : vector<8x64xf32>
    %178 = tpu.matmul %175, %177, %cst_105 {dimension_numbers = #tpu.dot_dimension_numbers<[1], [0], [0], [1], [0, 0, 1, 1], [], []>} : vector<8x32xf32>, vector<32x64xf32>, vector<8x64xf32> -> vector<8x64xf32>
    %c1_106 = arith.constant 1 : index
    %c0_107 = arith.constant 0 : index
    %c0_108 = arith.constant 0 : index
    %179 = vector.load %arg15[%c1_106, %c0_107, %c0_108] : memref<2x1x64xf32, #tpu.memory_space<vmem>>, vector<1x1x64xf32>
    %180 = vector.shape_cast %179 : vector<1x1x64xf32> to vector<1x64xf32>
    %181 = vector.broadcast %180 : vector<1x64xf32> to vector<8x64xf32>
    %182 = arith.addf %178, %181 : vector<8x64xf32>
    %cst_109 = arith.constant 0.000000e+00 : f32
    %183 = vector.broadcast %cst_109 : f32 to vector<8x64xf32>
    %184 = arith.maximumf %182, %183 : vector<8x64xf32>
    %c1_110 = arith.constant 1 : index
    %c0_111 = arith.constant 0 : index
    %c0_112 = arith.constant 0 : index
    %185 = vector.load %arg16[%c1_110, %c0_111, %c0_112] : memref<2x64x32xf32, #tpu.memory_space<vmem>>, vector<1x64x32xf32>
    %186 = vector.shape_cast %185 : vector<1x64x32xf32> to vector<64x32xf32>
    %cst_113 = arith.constant dense<0.000000e+00> : vector<8x32xf32>
    %187 = tpu.matmul %184, %186, %cst_113 {dimension_numbers = #tpu.dot_dimension_numbers<[1], [0], [0], [1], [0, 0, 1, 1], [], []>} : vector<8x64xf32>, vector<64x32xf32>, vector<8x32xf32> -> vector<8x32xf32>
    %c1_114 = arith.constant 1 : index
    %c0_115 = arith.constant 0 : index
    %c0_116 = arith.constant 0 : index
    %188 = vector.load %arg17[%c1_114, %c0_115, %c0_116] : memref<2x1x32xf32, #tpu.memory_space<vmem>>, vector<1x1x32xf32>
    %189 = vector.shape_cast %188 : vector<1x1x32xf32> to vector<1x32xf32>
    %190 = vector.broadcast %189 : vector<1x32xf32> to vector<8x32xf32>
    %191 = arith.addf %187, %190 : vector<8x32xf32>
    %192 = arith.addf %175, %191 : vector<8x32xf32>
    %cst_117 = arith.constant dense<0.000000e+00> : vector<8xf32>
    %193 = vector.multi_reduction <add>, %192, %cst_117 [1] : vector<8x32xf32> to vector<8xf32>
    %194 = vector.shape_cast %193 : vector<8xf32> to vector<8x1xf32>
    %cst_118 = arith.constant 3.200000e+01 : f32
    %195 = vector.broadcast %cst_118 : f32 to vector<8x1xf32>
    %196 = arith.divf %194, %195 : vector<8x1xf32>
    %197 = vector.broadcast %196 : vector<8x1xf32> to vector<8x32xf32>
    %198 = arith.subf %192, %197 : vector<8x32xf32>
    %199 = arith.mulf %198, %198 : vector<8x32xf32>
    %cst_119 = arith.constant dense<0.000000e+00> : vector<8xf32>
    %200 = vector.multi_reduction <add>, %199, %cst_119 [1] : vector<8x32xf32> to vector<8xf32>
    %201 = vector.shape_cast %200 : vector<8xf32> to vector<8x1xf32>
    %cst_120 = arith.constant 3.200000e+01 : f32
    %202 = vector.broadcast %cst_120 : f32 to vector<8x1xf32>
    %203 = arith.divf %201, %202 : vector<8x1xf32>
    %204 = vector.broadcast %196 : vector<8x1xf32> to vector<8x32xf32>
    %205 = arith.subf %192, %204 : vector<8x32xf32>
    %cst_121 = arith.constant 9.99999974E-6 : f32
    %206 = vector.broadcast %cst_121 : f32 to vector<8x1xf32>
    %207 = arith.addf %203, %206 : vector<8x1xf32>
    %208 = math.rsqrt %207 : vector<8x1xf32>
    %209 = vector.broadcast %208 : vector<8x1xf32> to vector<8x32xf32>
    %210 = arith.mulf %205, %209 : vector<8x32xf32>
    %c1_122 = arith.constant 1 : index
    %c0_123 = arith.constant 0 : index
    %c0_124 = arith.constant 0 : index
    %211 = vector.load %arg12[%c1_122, %c0_123, %c0_124] : memref<2x1x32xf32, #tpu.memory_space<vmem>>, vector<1x1x32xf32>
    %212 = vector.shape_cast %211 : vector<1x1x32xf32> to vector<1x32xf32>
    %213 = vector.broadcast %212 : vector<1x32xf32> to vector<8x32xf32>
    %214 = arith.mulf %210, %213 : vector<8x32xf32>
    %c1_125 = arith.constant 1 : index
    %c0_126 = arith.constant 0 : index
    %c0_127 = arith.constant 0 : index
    %215 = vector.load %arg13[%c1_125, %c0_126, %c0_127] : memref<2x1x32xf32, #tpu.memory_space<vmem>>, vector<1x1x32xf32>
    %216 = vector.shape_cast %215 : vector<1x1x32xf32> to vector<1x32xf32>
    %217 = vector.broadcast %216 : vector<1x32xf32> to vector<8x32xf32>
    %218 = arith.addf %214, %217 : vector<8x32xf32>
    %c0_128 = arith.constant 0 : index
    %c0_129 = arith.constant 0 : index
    %219 = vector.load %arg18[%c0_128, %c0_129] : memref<1x32xf32, #tpu.memory_space<vmem>>, vector<1x32xf32>
    %220 = vector.broadcast %219 : vector<1x32xf32> to vector<8x32xf32>
    %221 = arith.mulf %218, %220 : vector<8x32xf32>
    %cst_130 = arith.constant dense<0.000000e+00> : vector<8xf32>
    %222 = vector.multi_reduction <add>, %221, %cst_130 [1] : vector<8x32xf32> to vector<8xf32>
    %223 = vector.shape_cast %222 : vector<8xf32> to vector<8x1xf32>
    %c0_131 = arith.constant 0 : index
    %c0_132 = arith.constant 0 : index
    %224 = vector.load %arg19[%c0_131, %c0_132] : memref<1x1xf32, #tpu.memory_space<vmem>>, vector<1x1xf32>
    %225 = vector.broadcast %224 : vector<1x1xf32> to vector<8x1xf32>
    %226 = arith.addf %223, %225 : vector<8x1xf32>
    %cst_133 = arith.constant 0.000000e+00 : f32
    %227 = vector.broadcast %cst_133 : f32 to vector<8x1xf32>
    %228 = arith.maximumf %226, %227 : vector<8x1xf32>
    %c0_134 = arith.constant 0 : index
    %c0_135 = arith.constant 0 : index
    %c0_136 = arith.constant 0 : index
    %229 = vector.load %arg2[%c0_134, %c0_135, %c0_136] : memref<1x8x1xf32, #tpu.memory_space<vmem>>, vector<1x8x1xf32>
    %230 = vector.shape_cast %229 : vector<1x8x1xf32> to vector<8x1xf32>
    %231 = arith.mulf %228, %230 : vector<8x1xf32>
    %c0_137 = arith.constant 0 : index
    %c0_138 = arith.constant 0 : index
    %c0_139 = arith.constant 0 : index
    %232 = vector.load %arg20[%c0_137, %c0_138, %c0_139] : memref<1x8x1xf32, #tpu.memory_space<vmem>>, vector<1x8x1xf32>
    %233 = vector.shape_cast %232 : vector<1x8x1xf32> to vector<8x1xf32>
    %234 = vector.shape_cast %231 : vector<8x1xf32> to vector<1x8x1xf32>
    tpu.vector_store %arg20[%c0_137, %c0_138, %c0_139], %234 {strides = array<i32>} : memref<1x8x1xf32, #tpu.memory_space<vmem>>, vector<1x8x1xf32>,
    return
  }
  func.func @transform_0(%arg0: i32) -> (i32, i32, i32) {
    %c0_i32 = arith.constant 0 : i32
    %c0_i32_0 = arith.constant 0 : i32
    %c0_i32_1 = arith.constant 0 : i32
    return %arg0, %c0_i32, %c0_i32_0 : i32, i32, i32
  }
  func.func @transform_1(%arg0: i32) -> (i32, i32, i32) {
    %c0_i32 = arith.constant 0 : i32
    %c0_i32_0 = arith.constant 0 : i32
    %c0_i32_1 = arith.constant 0 : i32
    return %arg0, %c0_i32, %c0_i32_0 : i32, i32, i32
  }
  func.func @transform_2(%arg0: i32) -> (i32, i32) {
    %c0_i32 = arith.constant 0 : i32
    %c0_i32_0 = arith.constant 0 : i32
    %c0_i32_1 = arith.constant 0 : i32
    return %c0_i32, %c0_i32_0 : i32, i32
  }
  func.func @transform_3(%arg0: i32) -> (i32, i32) {
    %c0_i32 = arith.constant 0 : i32
    %c0_i32_0 = arith.constant 0 : i32
    %c0_i32_1 = arith.constant 0 : i32
    return %c0_i32, %c0_i32_0 : i32, i32
  }
  func.func @transform_4(%arg0: i32) -> (i32, i32) {
    %c0_i32 = arith.constant 0 : i32
    %c0_i32_0 = arith.constant 0 : i32
    %c0_i32_1 = arith.constant 0 : i32
    return %c0_i32, %c0_i32_0 : i32, i32
  }
  func.func @transform_5(%arg0: i32) -> (i32, i32, i32, i32) {
    %c0_i32 = arith.constant 0 : i32
    %c0_i32_0 = arith.constant 0 : i32
    %c0_i32_1 = arith.constant 0 : i32
    %c0_i32_2 = arith.constant 0 : i32
    %c0_i32_3 = arith.constant 0 : i32
    return %c0_i32, %c0_i32_0, %c0_i32_1, %c0_i32_2 : i32, i32, i32, i32
  }
  func.func @transform_6(%arg0: i32) -> (i32, i32, i32, i32) {
    %c0_i32 = arith.constant 0 : i32
    %c0_i32_0 = arith.constant 0 : i32
    %c0_i32_1 = arith.constant 0 : i32
    %c0_i32_2 = arith.constant 0 : i32
    %c0_i32_3 = arith.constant 0 : i32
    return %c0_i32, %c0_i32_0, %c0_i32_1, %c0_i32_2 : i32, i32, i32, i32
  }
  func.func @transform_7(%arg0: i32) -> (i32, i32, i32, i32) {
    %c0_i32 = arith.constant 0 : i32
    %c0_i32_0 = arith.constant 0 : i32
    %c0_i32_1 = arith.constant 0 : i32
    %c0_i32_2 = arith.constant 0 : i32
    %c0_i32_3 = arith.constant 0 : i32
    return %c0_i32, %c0_i32_0, %c0_i32_1, %c0_i32_2 : i32, i32, i32, i32
  }
  func.func @transform_8(%arg0: i32) -> (i32, i32, i32) {
    %c0_i32 = arith.constant 0 : i32
    %c0_i32_0 = arith.constant 0 : i32
    %c0_i32_1 = arith.constant 0 : i32
    %c0_i32_2 = arith.constant 0 : i32
    return %c0_i32, %c0_i32_0, %c0_i32_1 : i32, i32, i32
  }
  func.func @transform_9(%arg0: i32) -> (i32, i32, i32) {
    %c0_i32 = arith.constant 0 : i32
    %c0_i32_0 = arith.constant 0 : i32
    %c0_i32_1 = arith.constant 0 : i32
    %c0_i32_2 = arith.constant 0 : i32
    return %c0_i32, %c0_i32_0, %c0_i32_1 : i32, i32, i32
  }
  func.func @transform_10(%arg0: i32) -> (i32, i32, i32) {
    %c0_i32 = arith.constant 0 : i32
    %c0_i32_0 = arith.constant 0 : i32
    %c0_i32_1 = arith.constant 0 : i32
    %c0_i32_2 = arith.constant 0 : i32
    return %c0_i32, %c0_i32_0, %c0_i32_1 : i32, i32, i32
  }
  func.func @transform_11(%arg0: i32) -> (i32, i32, i32) {
    %c0_i32 = arith.constant 0 : i32
    %c0_i32_0 = arith.constant 0 : i32
    %c0_i32_1 = arith.constant 0 : i32
    %c0_i32_2 = arith.constant 0 : i32
    return %c0_i32, %c0_i32_0, %c0_i32_1 : i32, i32, i32
  }
  func.func @transform_12(%arg0: i32) -> (i32, i32, i32) {
    %c0_i32 = arith.constant 0 : i32
    %c0_i32_0 = arith.constant 0 : i32
    %c0_i32_1 = arith.constant 0 : i32
    %c0_i32_2 = arith.constant 0 : i32
    return %c0_i32, %c0_i32_0, %c0_i32_1 : i32, i32, i32
  }
  func.func @transform_13(%arg0: i32) -> (i32, i32, i32) {
    %c0_i32 = arith.constant 0 : i32
    %c0_i32_0 = arith.constant 0 : i32
    %c0_i32_1 = arith.constant 0 : i32
    %c0_i32_2 = arith.constant 0 : i32
    return %c0_i32, %c0_i32_0, %c0_i32_1 : i32, i32, i32
  }
  func.func @transform_14(%arg0: i32) -> (i32, i32, i32) {
    %c0_i32 = arith.constant 0 : i32
    %c0_i32_0 = arith.constant 0 : i32
    %c0_i32_1 = arith.constant 0 : i32
    %c0_i32_2 = arith.constant 0 : i32
    return %c0_i32, %c0_i32_0, %c0_i32_1 : i32, i32, i32
  }
  func.func @transform_15(%arg0: i32) -> (i32, i32, i32) {
    %c0_i32 = arith.constant 0 : i32
    %c0_i32_0 = arith.constant 0 : i32
    %c0_i32_1 = arith.constant 0 : i32
    %c0_i32_2 = arith.constant 0 : i32
    return %c0_i32, %c0_i32_0, %c0_i32_1 : i32, i32, i32
  }
  func.func @transform_16(%arg0: i32) -> (i32, i32, i32) {
    %c0_i32 = arith.constant 0 : i32
    %c0_i32_0 = arith.constant 0 : i32
    %c0_i32_1 = arith.constant 0 : i32
    %c0_i32_2 = arith.constant 0 : i32
    return %c0_i32, %c0_i32_0, %c0_i32_1 : i32, i32, i32
  }
  func.func @transform_17(%arg0: i32) -> (i32, i32) {
    %c0_i32 = arith.constant 0 : i32
    %c0_i32_0 = arith.constant 0 : i32
    %c0_i32_1 = arith.constant 0 : i32
    return %c0_i32, %c0_i32_0 : i32, i32
  }
  func.func @transform_18(%arg0: i32) -> (i32, i32) {
    %c0_i32 = arith.constant 0 : i32
    %c0_i32_0 = arith.constant 0 : i32
    %c0_i32_1 = arith.constant 0 : i32
    return %c0_i32, %c0_i32_0 : i32, i32
  }
  func.func @transform_19(%arg0: i32) -> (i32, i32, i32) {
    %c0_i32 = arith.constant 0 : i32
    %c0_i32_0 = arith.constant 0 : i32
    %c0_i32_1 = arith.constant 0 : i32
    return %arg0, %c0_i32, %c0_i32_0 : i32, i32, i32
  }
}

</mosaic_0001>

<llo_original>
// kernel: tpu_custom_call.1
$region0: #{tpu_custom_call.1}
  #allocation0 [shape = 'u32[]', space=smem, size = 0x4, offset = 0x4, fixed_abs, tag = 'smem constant byte address 0x4 - core index']
  #allocation1 [shape = 'u32[72,128]{1,0:T(1,128)}', space=vmem, size = 0x9000, scoped, tag = 'internal scratch']
  #allocation2 [shape = 'f32[1,1]{1,0:T(1,128)S(1)}', space=vmem, size = 0x200, scoped, tag = 'scoped memory for tpu_custom_call.1']
  %s0 = inlined_call_operand.vmem [shape: f32[2,8,1024], index: 0, kind: input, shape index: {}]
  %s1 = inlined_call_operand.vmem [shape: f32[2,8,1], index: 1, kind: input, shape index: {}]
  %s2 = inlined_call_operand.vmem [shape: f32[8,32], index: 2, kind: input, shape index: {}]
  %s3 = inlined_call_operand.vmem [shape: f32[1024,32], index: 3, kind: input, shape index: {}]
  %s4 = inlined_call_operand.vmem [shape: f32[1,32], index: 4, kind: input, shape index: {}]
  %s5 = inlined_call_operand.vmem [shape: f32[2,12,32,8], index: 5, kind: input, shape index: {}]
  %s6 = inlined_call_operand.vmem [shape: f32[2,12,1,8], index: 6, kind: input, shape index: {}]
  %s7 = inlined_call_operand.vmem [shape: f32[2,4,8,32], index: 7, kind: input, shape index: {}]
  %s8 = inlined_call_operand.vmem [shape: f32[2,1,32], index: 8, kind: input, shape index: {}]
  %s9 = inlined_call_operand.vmem [shape: f32[2,1,32], index: 9, kind: input, shape index: {}]
  %s10 = inlined_call_operand.vmem [shape: f32[2,1,32], index: 10, kind: input, shape index: {}]
  %s11 = inlined_call_operand.vmem [shape: f32[2,1,32], index: 11, kind: input, shape index: {}]
  %s12 = inlined_call_operand.vmem [shape: f32[2,1,32], index: 12, kind: input, shape index: {}]
  %s13 = inlined_call_operand.vmem [shape: f32[2,32,64], index: 13, kind: input, shape index: {}]
  %s14 = inlined_call_operand.vmem [shape: f32[2,1,64], index: 14, kind: input, shape index: {}]
  %s15 = inlined_call_operand.vmem [shape: f32[2,64,32], index: 15, kind: input, shape index: {}]
  %s16 = inlined_call_operand.vmem [shape: f32[2,1,32], index: 16, kind: input, shape index: {}]
  %s17 = inlined_call_operand.vmem [shape: f32[1,32], index: 17, kind: input, shape index: {}]
  %s18 = inlined_call_operand.<no memory space> [shape: f32[1,1], index: 18, kind: input, shape index: {}]
  %s19 = inlined_call_operand.vmem [shape: f32[2,8,1], index: 19, kind: output, shape index: {}]
  %s20 = sld [smem:[#allocation0]]
  $region109: #{tpu_custom_call.1} parent=0
    _
  %s22 = ssub.s32 1, %s20
  %s23 = scalar_select 0, %s22, %s20
  %v24 = vstv %s18
  %25 = vst [vmem:[#allocation2] sm:$0x1] %v24
  loop: start=0, step=1, limit=4
  $region2: #{tpu_custom_call.1} parent=0 // loop_pre_header
    _
  $region3: #{tpu_custom_call.1} parent=0 // loop_header
    %s27 = sphi 0, %s31
    %p28 = scmp.ge.s32.totalorder %s27, 4
    %s37 = sphi 0, %s39
    %s40 = sphi 0, %s37
    %s41 = sphi 0, %s40
    %s57 = sphi 0, %s41
    %s63 = sphi 0, %s65
    %s66 = sphi 0, %s63
    %s67 = sphi 0, %s66
    %s83 = sphi 0, %s67
    %s87 = sphi 0, %s87
    %s89 = sphi 0, %s87
    %s90 = sphi 0, %s89
    %s104 = sphi 0, %s90
    %s108 = sphi 0, %s108
    %s110 = sphi 0, %s108
    %s111 = sphi 0, %s110
    %s125 = sphi 0, %s111
    %s129 = sphi 0, %s129
    %s131 = sphi 0, %s129
    %s132 = sphi 0, %s131
    %s146 = sphi 0, %s132
    %s150 = sphi 0, %s150
    %s152 = sphi 0, %s150
    %s153 = sphi 0, %s152
    %s167 = sphi 0, %s153
    %s171 = sphi 0, %s171
    %s173 = sphi 0, %s171
    %s174 = sphi 0, %s173
    %s188 = sphi 0, %s174
    %s192 = sphi 0, %s192
    %s194 = sphi 0, %s192
    %s195 = sphi 0, %s194
    %s209 = sphi 0, %s195
    %s213 = sphi 0, %s213
    %s215 = sphi 0, %s213
    %s216 = sphi 0, %s215
    %s230 = sphi 0, %s216
    %s234 = sphi 0, %s234
    %s236 = sphi 0, %s234
    %s237 = sphi 0, %s236
    %s251 = sphi 0, %s237
    %s255 = sphi 0, %s255
    %s257 = sphi 0, %s255
    %s258 = sphi 0, %s257
    %s272 = sphi 0, %s258
    %s276 = sphi 0, %s276
    %s278 = sphi 0, %s276
    %s279 = sphi 0, %s278
    %s293 = sphi 0, %s279
    %s297 = sphi 0, %s297
    %s299 = sphi 0, %s297
    %s300 = sphi 0, %s299
    %s314 = sphi 0, %s300
    %s318 = sphi 0, %s318
    %s320 = sphi 0, %s318
    %s321 = sphi 0, %s320
    %s335 = sphi 0, %s321
    %s339 = sphi 0, %s339
    %s341 = sphi 0, %s339
    %s342 = sphi 0, %s341
    %s356 = sphi 0, %s342
    %s360 = sphi 0, %s360
    %s362 = sphi 0, %s360
    %s363 = sphi 0, %s362
    %s377 = sphi 0, %s363
    %s381 = sphi 0, %s381
    %s383 = sphi 0, %s381
    %s384 = sphi 0, %s383
    %s398 = sphi 0, %s384
    %s402 = sphi 0, %s402
    %s404 = sphi 0, %s402
    %s405 = sphi 0, %s404
    %s419 = sphi 0, %s405
    %s423 = sphi 0, %s423
    %s425 = sphi 0, %s423
    %s426 = sphi 0, %s425
    %s440 = sphi 0, %s426
    %s446 = sphi 0, %s448
    %s449 = sphi 0, %s446
    %s450 = sphi 0, %s449
    %s466 = sphi 0, %s450
  $region4: #{tpu_custom_call.1} parent=0 // loop_header_branch
    %30 = sbr.rel (%p28) target = $region8
  $region5: #{tpu_custom_call.1} parent=0 // loop_body
    %s32 = ssub.s32 %s27, 1
    %s33 = ssub.s32 %s27, 2
    %s34 = sadd.s32 %s27, 1
    %s35 = ssub.s32 %s27, %s34
    %p36 = scmp.eq.s32.totalorder %s35, 0
    %s38 = sadd.s32 %s37, 1
    %s39 = scalar_select %p36, %s37, %s38
    %p42 = pneg %p36
    %p43 = scmp.eq.s32.totalorder %s27, 1
    %p44 = por %p42, %p43
    %p45 = scmp.ne.s32.totalorder %s37, %s40
    %p46 = scmp.eq.s32.totalorder %s27, 0
    %p47 = por %p45, %p46
    %p48 = scmp.ne.s32.totalorder %s37, %s40
    %p49 = scmp.eq.s32.totalorder %s32, 1
    %p50 = por %p48, %p49
    %p51 = scmp.ne.s32.totalorder %s40, %s41
    %p52 = scmp.eq.s32.totalorder %s32, 0
    %p53 = por %p51, %p52
    %p54 = scmp.ne.s32.totalorder %s40, %s41
    %p55 = scmp.eq.s32.totalorder %s33, 1
    %p56 = por %p54, %p55
    %p58 = scmp.ne.s32.totalorder %s41, %s57
    %p59 = scmp.eq.s32.totalorder %s33, 0
    %p60 = por %p58, %p59
    %s61 = ssub.s32 %s27, %s34
    %p62 = scmp.eq.s32.totalorder %s61, 0
    %s64 = sadd.s32 %s63, 1
    %s65 = scalar_select %p62, %s63, %s64
    %p68 = pneg %p62
    %p69 = scmp.eq.s32.totalorder %s27, 1
    %p70 = por %p68, %p69
    %p71 = scmp.ne.s32.totalorder %s63, %s66
    %p72 = scmp.eq.s32.totalorder %s27, 0
    %p73 = por %p71, %p72
    %p74 = scmp.ne.s32.totalorder %s63, %s66
    %p75 = scmp.eq.s32.totalorder %s32, 1
    %p76 = por %p74, %p75
    %p77 = scmp.ne.s32.totalorder %s66, %s67
    %p78 = scmp.eq.s32.totalorder %s32, 0
    %p79 = por %p77, %p78
    %p80 = scmp.ne.s32.totalorder %s66, %s67
    %p81 = scmp.eq.s32.totalorder %s33, 1
    %p82 = por %p80, %p81
    %p84 = scmp.ne.s32.totalorder %s67, %s83
    %p85 = scmp.eq.s32.totalorder %s33, 0
    %p86 = por %p84, %p85
    %s88 = sadd.s32 %s87, 1
    %p91 = scmp.eq.s32.totalorder %s27, 1
    %p92 = scmp.ne.s32.totalorder %s87, %s89
    %p93 = scmp.eq.s32.totalorder %s27, 0
    %p94 = por %p92, %p93
    %p95 = scmp.ne.s32.totalorder %s87, %s89
    %p96 = scmp.eq.s32.totalorder %s32, 1
    %p97 = por %p95, %p96
    %p98 = scmp.ne.s32.totalorder %s89, %s90
    %p99 = scmp.eq.s32.totalorder %s32, 0
    %p100 = por %p98, %p99
    %p101 = scmp.ne.s32.totalorder %s89, %s90
    %p102 = scmp.eq.s32.totalorder %s33, 1
    %p103 = por %p101, %p102
    %p105 = scmp.ne.s32.totalorder %s90, %s104
    %p106 = scmp.eq.s32.totalorder %s33, 0
    %p107 = por %p105, %p106
    %s109 = sadd.s32 %s108, 1
    %p112 = scmp.eq.s32.totalorder %s27, 1
    %p113 = scmp.ne.s32.totalorder %s108, %s110
    %p114 = scmp.eq.s32.totalorder %s27, 0
    %p115 = por %p113, %p114
    %p116 = scmp.ne.s32.totalorder %s108, %s110
    %p117 = scmp.eq.s32.totalorder %s32, 1
    %p118 = por %p116, %p117
    %p119 = scmp.ne.s32.totalorder %s110, %s111
    %p120 = scmp.eq.s32.totalorder %s32, 0
    %p121 = por %p119, %p120
    %p122 = scmp.ne.s32.totalorder %s110, %s111
    %p123 = scmp.eq.s32.totalorder %s33, 1
    %p124 = por %p122, %p123
    %p126 = scmp.ne.s32.totalorder %s111, %s125
    %p127 = scmp.eq.s32.totalorder %s33, 0
    %p128 = por %p126, %p127
    %s130 = sadd.s32 %s129, 1
    %p133 = scmp.eq.s32.totalorder %s27, 1
    %p134 = scmp.ne.s32.totalorder %s129, %s131
    %p135 = scmp.eq.s32.totalorder %s27, 0
    %p136 = por %p134, %p135
    %p137 = scmp.ne.s32.totalorder %s129, %s131
    %p138 = scmp.eq.s32.totalorder %s32, 1
    %p139 = por %p137, %p138
    %p140 = scmp.ne.s32.totalorder %s131, %s132
    %p141 = scmp.eq.s32.totalorder %s32, 0
    %p142 = por %p140, %p141
    %p143 = scmp.ne.s32.totalorder %s131, %s132
    %p144 = scmp.eq.s32.totalorder %s33, 1
    %p145 = por %p143, %p144
    %p147 = scmp.ne.s32.totalorder %s132, %s146
    %p148 = scmp.eq.s32.totalorder %s33, 0
    %p149 = por %p147, %p148
    %s151 = sadd.s32 %s150, 1
    %p154 = scmp.eq.s32.totalorder %s27, 1
    %p155 = scmp.ne.s32.totalorder %s150, %s152
    %p156 = scmp.eq.s32.totalorder %s27, 0
    %p157 = por %p155, %p156
    %p158 = scmp.ne.s32.totalorder %s150, %s152
    %p159 = scmp.eq.s32.totalorder %s32, 1
    %p160 = por %p158, %p159
    %p161 = scmp.ne.s32.totalorder %s152, %s153
    %p162 = scmp.eq.s32.totalorder %s32, 0
    %p163 = por %p161, %p162
    %p164 = scmp.ne.s32.totalorder %s152, %s153
    %p165 = scmp.eq.s32.totalorder %s33, 1
    %p166 = por %p164, %p165
    %p168 = scmp.ne.s32.totalorder %s153, %s167
    %p169 = scmp.eq.s32.totalorder %s33, 0
    %p170 = por %p168, %p169
    %s172 = sadd.s32 %s171, 1
    %p175 = scmp.eq.s32.totalorder %s27, 1
    %p176 = scmp.ne.s32.totalorder %s171, %s173
    %p177 = scmp.eq.s32.totalorder %s27, 0
    %p178 = por %p176, %p177
    %p179 = scmp.ne.s32.totalorder %s171, %s173
    %p180 = scmp.eq.s32.totalorder %s32, 1
    %p181 = por %p179, %p180
    %p182 = scmp.ne.s32.totalorder %s173, %s174
    %p183 = scmp.eq.s32.totalorder %s32, 0
    %p184 = por %p182, %p183
    %p185 = scmp.ne.s32.totalorder %s173, %s174
    %p186 = scmp.eq.s32.totalorder %s33, 1
    %p187 = por %p185, %p186
    %p189 = scmp.ne.s32.totalorder %s174, %s188
    %p190 = scmp.eq.s32.totalorder %s33, 0
    %p191 = por %p189, %p190
    %s193 = sadd.s32 %s192, 1
    %p196 = scmp.eq.s32.totalorder %s27, 1
    %p197 = scmp.ne.s32.totalorder %s192, %s194
    %p198 = scmp.eq.s32.totalorder %s27, 0
    %p199 = por %p197, %p198
    %p200 = scmp.ne.s32.totalorder %s192, %s194
    %p201 = scmp.eq.s32.totalorder %s32, 1
    %p202 = por %p200, %p201
    %p203 = scmp.ne.s32.totalorder %s194, %s195
    %p204 = scmp.eq.s32.totalorder %s32, 0
    %p205 = por %p203, %p204
    %p206 = scmp.ne.s32.totalorder %s194, %s195
    %p207 = scmp.eq.s32.totalorder %s33, 1
    %p208 = por %p206, %p207
    %p210 = scmp.ne.s32.totalorder %s195, %s209
    %p211 = scmp.eq.s32.totalorder %s33, 0
    %p212 = por %p210, %p211
    %s214 = sadd.s32 %s213, 1
    %p217 = scmp.eq.s32.totalorder %s27, 1
    %p218 = scmp.ne.s32.totalorder %s213, %s215
    %p219 = scmp.eq.s32.totalorder %s27, 0
    %p220 = por %p218, %p219
    %p221 = scmp.ne.s32.totalorder %s213, %s215
    %p222 = scmp.eq.s32.totalorder %s32, 1
    %p223 = por %p221, %p222
    %p224 = scmp.ne.s32.totalorder %s215, %s216
    %p225 = scmp.eq.s32.totalorder %s32, 0
    %p226 = por %p224, %p225
    %p227 = scmp.ne.s32.totalorder %s215, %s216
    %p228 = scmp.eq.s32.totalorder %s33, 1
    %p229 = por %p227, %p228
    %p231 = scmp.ne.s32.totalorder %s216, %s230
    %p232 = scmp.eq.s32.totalorder %s33, 0
    %p233 = por %p231, %p232
    %s235 = sadd.s32 %s234, 1
    %p238 = scmp.eq.s32.totalorder %s27, 1
    %p239 = scmp.ne.s32.totalorder %s234, %s236
    %p240 = scmp.eq.s32.totalorder %s27, 0
    %p241 = por %p239, %p240
    %p242 = scmp.ne.s32.totalorder %s234, %s236
    %p243 = scmp.eq.s32.totalorder %s32, 1
    %p244 = por %p242, %p243
    %p245 = scmp.ne.s32.totalorder %s236, %s237
    %p246 = scmp.eq.s32.totalorder %s32, 0
    %p247 = por %p245, %p246
    %p248 = scmp.ne.s32.totalorder %s236, %s237
    %p249 = scmp.eq.s32.totalorder %s33, 1
    %p250 = por %p248, %p249
    %p252 = scmp.ne.s32.totalorder %s237, %s251
    %p253 = scmp.eq.s32.totalorder %s33, 0
    %p254 = por %p252, %p253
    %s256 = sadd.s32 %s255, 1
    %p259 = scmp.eq.s32.totalorder %s27, 1
    %p260 = scmp.ne.s32.totalorder %s255, %s257
    %p261 = scmp.eq.s32.totalorder %s27, 0
    %p262 = por %p260, %p261
    %p263 = scmp.ne.s32.totalorder %s255, %s257
    %p264 = scmp.eq.s32.totalorder %s32, 1
    %p265 = por %p263, %p264
    %p266 = scmp.ne.s32.totalorder %s257, %s258
    %p267 = scmp.eq.s32.totalorder %s32, 0
    %p268 = por %p266, %p267
    %p269 = scmp.ne.s32.totalorder %s257, %s258
    %p270 = scmp.eq.s32.totalorder %s33, 1
    %p271 = por %p269, %p270
    %p273 = scmp.ne.s32.totalorder %s258, %s272
    %p274 = scmp.eq.s32.totalorder %s33, 0
    %p275 = por %p273, %p274
    %s277 = sadd.s32 %s276, 1
    %p280 = scmp.eq.s32.totalorder %s27, 1
    %p281 = scmp.ne.s32.totalorder %s276, %s278
    %p282 = scmp.eq.s32.totalorder %s27, 0
    %p283 = por %p281, %p282
    %p284 = scmp.ne.s32.totalorder %s276, %s278
    %p285 = scmp.eq.s32.totalorder %s32, 1
    %p286 = por %p284, %p285
    %p287 = scmp.ne.s32.totalorder %s278, %s279
    %p288 = scmp.eq.s32.totalorder %s32, 0
    %p289 = por %p287, %p288
    %p290 = scmp.ne.s32.totalorder %s278, %s279
    %p291 = scmp.eq.s32.totalorder %s33, 1
    %p292 = por %p290, %p291
    %p294 = scmp.ne.s32.totalorder %s279, %s293
    %p295 = scmp.eq.s32.totalorder %s33, 0
    %p296 = por %p294, %p295
    %s298 = sadd.s32 %s297, 1
    %p301 = scmp.eq.s32.totalorder %s27, 1
    %p302 = scmp.ne.s32.totalorder %s297, %s299
    %p303 = scmp.eq.s32.totalorder %s27, 0
    %p304 = por %p302, %p303
    %p305 = scmp.ne.s32.totalorder %s297, %s299
    %p306 = scmp.eq.s32.totalorder %s32, 1
    %p307 = por %p305, %p306
    %p308 = scmp.ne.s32.totalorder %s299, %s300
    %p309 = scmp.eq.s32.totalorder %s32, 0
    %p310 = por %p308, %p309
    %p311 = scmp.ne.s32.totalorder %s299, %s300
    %p312 = scmp.eq.s32.totalorder %s33, 1
    %p313 = por %p311, %p312
    %p315 = scmp.ne.s32.totalorder %s300, %s314
    %p316 = scmp.eq.s32.totalorder %s33, 0
    %p317 = por %p315, %p316
    %s319 = sadd.s32 %s318, 1
    %p322 = scmp.eq.s32.totalorder %s27, 1
    %p323 = scmp.ne.s32.totalorder %s318, %s320
    %p324 = scmp.eq.s32.totalorder %s27, 0
    %p325 = por %p323, %p324
    %p326 = scmp.ne.s32.totalorder %s318, %s320
    %p327 = scmp.eq.s32.totalorder %s32, 1
    %p328 = por %p326, %p327
    %p329 = scmp.ne.s32.totalorder %s320, %s321
    %p330 = scmp.eq.s32.totalorder %s32, 0
    %p331 = por %p329, %p330
    %p332 = scmp.ne.s32.totalorder %s320, %s321
    %p333 = scmp.eq.s32.totalorder %s33, 1
    %p334 = por %p332, %p333
    %p336 = scmp.ne.s32.totalorder %s321, %s335
    %p337 = scmp.eq.s32.totalorder %s33, 0
    %p338 = por %p336, %p337
    %s340 = sadd.s32 %s339, 1
    %p343 = scmp.eq.s32.totalorder %s27, 1
    %p344 = scmp.ne.s32.totalorder %s339, %s341
    %p345 = scmp.eq.s32.totalorder %s27, 0
    %p346 = por %p344, %p345
    %p347 = scmp.ne.s32.totalorder %s339, %s341
    %p348 = scmp.eq.s32.totalorder %s32, 1
    %p349 = por %p347, %p348
    %p350 = scmp.ne.s32.totalorder %s341, %s342
    %p351 = scmp.eq.s32.totalorder %s32, 0
    %p352 = por %p350, %p351
    %p353 = scmp.ne.s32.totalorder %s341, %s342
    %p354 = scmp.eq.s32.totalorder %s33, 1
    %p355 = por %p353, %p354
    %p357 = scmp.ne.s32.totalorder %s342, %s356
    %p358 = scmp.eq.s32.totalorder %s33, 0
    %p359 = por %p357, %p358
    %s361 = sadd.s32 %s360, 1
    %p364 = scmp.eq.s32.totalorder %s27, 1
    %p365 = scmp.ne.s32.totalorder %s360, %s362
    %p366 = scmp.eq.s32.totalorder %s27, 0
    %p367 = por %p365, %p366
    %p368 = scmp.ne.s32.totalorder %s360, %s362
    %p369 = scmp.eq.s32.totalorder %s32, 1
    %p370 = por %p368, %p369
    %p371 = scmp.ne.s32.totalorder %s362, %s363
    %p372 = scmp.eq.s32.totalorder %s32, 0
    %p373 = por %p371, %p372
    %p374 = scmp.ne.s32.totalorder %s362, %s363
    %p375 = scmp.eq.s32.totalorder %s33, 1
    %p376 = por %p374, %p375
    %p378 = scmp.ne.s32.totalorder %s363, %s377
    %p379 = scmp.eq.s32.totalorder %s33, 0
    %p380 = por %p378, %p379
    %s382 = sadd.s32 %s381, 1
    %p385 = scmp.eq.s32.totalorder %s27, 1
    %p386 = scmp.ne.s32.totalorder %s381, %s383
    %p387 = scmp.eq.s32.totalorder %s27, 0
    %p388 = por %p386, %p387
    %p389 = scmp.ne.s32.totalorder %s381, %s383
    %p390 = scmp.eq.s32.totalorder %s32, 1
    %p391 = por %p389, %p390
    %p392 = scmp.ne.s32.totalorder %s383, %s384
    %p393 = scmp.eq.s32.totalorder %s32, 0
    %p394 = por %p392, %p393
    %p395 = scmp.ne.s32.totalorder %s383, %s384
    %p396 = scmp.eq.s32.totalorder %s33, 1
    %p397 = por %p395, %p396
    %p399 = scmp.ne.s32.totalorder %s384, %s398
    %p400 = scmp.eq.s32.totalorder %s33, 0
    %p401 = por %p399, %p400
    %s403 = sadd.s32 %s402, 1
    %p406 = scmp.eq.s32.totalorder %s27, 1
    %p407 = scmp.ne.s32.totalorder %s402, %s404
    %p408 = scmp.eq.s32.totalorder %s27, 0
    %p409 = por %p407, %p408
    %p410 = scmp.ne.s32.totalorder %s402, %s404
    %p411 = scmp.eq.s32.totalorder %s32, 1
    %p412 = por %p410, %p411
    %p413 = scmp.ne.s32.totalorder %s404, %s405
    %p414 = scmp.eq.s32.totalorder %s32, 0
    %p415 = por %p413, %p414
    %p416 = scmp.ne.s32.totalorder %s404, %s405
    %p417 = scmp.eq.s32.totalorder %s33, 1
    %p418 = por %p416, %p417
    %p420 = scmp.ne.s32.totalorder %s405, %s419
    %p421 = scmp.eq.s32.totalorder %s33, 0
    %p422 = por %p420, %p421
    %s424 = sadd.s32 %s423, 1
    %p427 = scmp.eq.s32.totalorder %s27, 1
    %p428 = scmp.ne.s32.totalorder %s423, %s425
    %p429 = scmp.eq.s32.totalorder %s27, 0
    %p430 = por %p428, %p429
    %p431 = scmp.ne.s32.totalorder %s423, %s425
    %p432 = scmp.eq.s32.totalorder %s32, 1
    %p433 = por %p431, %p432
    %p434 = scmp.ne.s32.totalorder %s425, %s426
    %p435 = scmp.eq.s32.totalorder %s32, 0
    %p436 = por %p434, %p435
    %p437 = scmp.ne.s32.totalorder %s425, %s426
    %p438 = scmp.eq.s32.totalorder %s33, 1
    %p439 = por %p437, %p438
    %p441 = scmp.ne.s32.totalorder %s426, %s440
    %p442 = scmp.eq.s32.totalorder %s33, 0
    %p443 = por %p441, %p442
    %s444 = ssub.s32 %s27, %s34
    %p445 = scmp.eq.s32.totalorder %s444, 0
    %s447 = sadd.s32 %s446, 1
    %s448 = scalar_select %p445, %s446, %s447
    %p451 = pneg %p445
    %p452 = scmp.eq.s32.totalorder %s27, 1
    %p453 = por %p451, %p452
    %p454 = scmp.ne.s32.totalorder %s446, %s449
    %p455 = scmp.eq.s32.totalorder %s27, 0
    %p456 = por %p454, %p455
    %p457 = scmp.ne.s32.totalorder %s446, %s449
    %p458 = scmp.eq.s32.totalorder %s32, 1
    %p459 = por %p457, %p458
    %p460 = scmp.ne.s32.totalorder %s449, %s450
    %p461 = scmp.eq.s32.totalorder %s32, 0
    %p462 = por %p460, %p461
    %p463 = scmp.ne.s32.totalorder %s449, %s450
    %p464 = scmp.eq.s32.totalorder %s33, 1
    %p465 = por %p463, %p464
    %p467 = scmp.ne.s32.totalorder %s450, %s466
    %p468 = scmp.eq.s32.totalorder %s33, 0
    %p469 = por %p467, %p468
    %p470 = scmp.le.s32.totalorder 1, %s27
    %p471 = scmp.lt.s32.totalorder %s27, 3
    %p472 = pnand %p470, %p471
    %p473 = pneg %p472
    // Predicated region
    $region9: #{tpu_custom_call.1} parent=5 // pred_check
      _
    $region10: #{tpu_custom_call.1} parent=5 // pred_check_branch
      %475 = sbr.rel (%p472) target = $region12
    $region11: #{tpu_custom_call.1} parent=5 // pred_region
      %s476 = ssub.s32 %s27, 1
      // Predicated region
      $region13: #{tpu_custom_call.1} parent=11 // pred_check
        %p477 = pneg %p100
      $region14: #{tpu_custom_call.1} parent=11 // pred_check_branch
        %479 = sbr.rel (%p477) target = $region16
      $region15: #{tpu_custom_call.1} parent=11 // pred_region
        _
      $region16: #{tpu_custom_call.1} parent=11 // pred_fallthru
        _
      // Predicated region
      $region17: #{tpu_custom_call.1} parent=11 // pred_check
        %p480 = pneg %p121
      $region18: #{tpu_custom_call.1} parent=11 // pred_check_branch
        %482 = sbr.rel (%p480) target = $region20
      $region19: #{tpu_custom_call.1} parent=11 // pred_region
        _
      $region20: #{tpu_custom_call.1} parent=11 // pred_fallthru
        _
      // Predicated region
      $region21: #{tpu_custom_call.1} parent=11 // pred_check
        %p483 = pneg %p142
      $region22: #{tpu_custom_call.1} parent=11 // pred_check_branch
        %485 = sbr.rel (%p483) target = $region24
      $region23: #{tpu_custom_call.1} parent=11 // pred_region
        _
      $region24: #{tpu_custom_call.1} parent=11 // pred_fallthru
        _
      // Predicated region
      $region25: #{tpu_custom_call.1} parent=11 // pred_check
        %p486 = pneg %p163
      $region26: #{tpu_custom_call.1} parent=11 // pred_check_branch
        %488 = sbr.rel (%p486) target = $region28
      $region27: #{tpu_custom_call.1} parent=11 // pred_region
        _
      $region28: #{tpu_custom_call.1} parent=11 // pred_fallthru
        _
      // Predicated region
      $region29: #{tpu_custom_call.1} parent=11 // pred_check
        %p489 = pneg %p184
      $region30: #{tpu_custom_call.1} parent=11 // pred_check_branch
        %491 = sbr.rel (%p489) target = $region32
      $region31: #{tpu_custom_call.1} parent=11 // pred_region
        _
      $region32: #{tpu_custom_call.1} parent=11 // pred_fallthru
        _
      // Predicated region
      $region33: #{tpu_custom_call.1} parent=11 // pred_check
        %p492 = pneg %p205
      $region34: #{tpu_custom_call.1} parent=11 // pred_check_branch
        %494 = sbr.rel (%p492) target = $region36
      $region35: #{tpu_custom_call.1} parent=11 // pred_region
        _
      $region36: #{tpu_custom_call.1} parent=11 // pred_fallthru
        _
      // Predicated region
      $region37: #{tpu_custom_call.1} parent=11 // pred_check
        %p495 = pneg %p226
      $region38: #{tpu_custom_call.1} parent=11 // pred_check_branch
        %497 = sbr.rel (%p495) target = $region40
      $region39: #{tpu_custom_call.1} parent=11 // pred_region
        _
      $region40: #{tpu_custom_call.1} parent=11 // pred_fallthru
        _
      // Predicated region
      $region41: #{tpu_custom_call.1} parent=11 // pred_check
        %p498 = pneg %p247
      $region42: #{tpu_custom_call.1} parent=11 // pred_check_branch
        %500 = sbr.rel (%p498) target = $region44
      $region43: #{tpu_custom_call.1} parent=11 // pred_region
        _
      $region44: #{tpu_custom_call.1} parent=11 // pred_fallthru
        _
      // Predicated region
      $region45: #{tpu_custom_call.1} parent=11 // pred_check
        %p501 = pneg %p268
      $region46: #{tpu_custom_call.1} parent=11 // pred_check_branch
        %503 = sbr.rel (%p501) target = $region48
      $region47: #{tpu_custom_call.1} parent=11 // pred_region
        _
      $region48: #{tpu_custom_call.1} parent=11 // pred_fallthru
        _
      // Predicated region
      $region49: #{tpu_custom_call.1} parent=11 // pred_check
        %p504 = pneg %p289
      $region50: #{tpu_custom_call.1} parent=11 // pred_check_branch
        %506 = sbr.rel (%p504) target = $region52
      $region51: #{tpu_custom_call.1} parent=11 // pred_region
        _
      $region52: #{tpu_custom_call.1} parent=11 // pred_fallthru
        _
      // Predicated region
      $region53: #{tpu_custom_call.1} parent=11 // pred_check
        %p507 = pneg %p310
      $region54: #{tpu_custom_call.1} parent=11 // pred_check_branch
        %509 = sbr.rel (%p507) target = $region56
      $region55: #{tpu_custom_call.1} parent=11 // pred_region
        _
      $region56: #{tpu_custom_call.1} parent=11 // pred_fallthru
        _
      // Predicated region
      $region57: #{tpu_custom_call.1} parent=11 // pred_check
        %p510 = pneg %p331
      $region58: #{tpu_custom_call.1} parent=11 // pred_check_branch
        %512 = sbr.rel (%p510) target = $region60
      $region59: #{tpu_custom_call.1} parent=11 // pred_region
        _
      $region60: #{tpu_custom_call.1} parent=11 // pred_fallthru
        _
      // Predicated region
      $region61: #{tpu_custom_call.1} parent=11 // pred_check
        %p513 = pneg %p352
      $region62: #{tpu_custom_call.1} parent=11 // pred_check_branch
        %515 = sbr.rel (%p513) target = $region64
      $region63: #{tpu_custom_call.1} parent=11 // pred_region
        _
      $region64: #{tpu_custom_call.1} parent=11 // pred_fallthru
        _
      // Predicated region
      $region65: #{tpu_custom_call.1} parent=11 // pred_check
        %p516 = pneg %p373
      $region66: #{tpu_custom_call.1} parent=11 // pred_check_branch
        %518 = sbr.rel (%p516) target = $region68
      $region67: #{tpu_custom_call.1} parent=11 // pred_region
        _
      $region68: #{tpu_custom_call.1} parent=11 // pred_fallthru
        _
      // Predicated region
      $region69: #{tpu_custom_call.1} parent=11 // pred_check
        %p519 = pneg %p394
      $region70: #{tpu_custom_call.1} parent=11 // pred_check_branch
        %521 = sbr.rel (%p519) target = $region72
      $region71: #{tpu_custom_call.1} parent=11 // pred_region
        _
      $region72: #{tpu_custom_call.1} parent=11 // pred_fallthru
        _
      // Predicated region
      $region73: #{tpu_custom_call.1} parent=11 // pred_check
        %p522 = pneg %p415
      $region74: #{tpu_custom_call.1} parent=11 // pred_check_branch
        %524 = sbr.rel (%p522) target = $region76
      $region75: #{tpu_custom_call.1} parent=11 // pred_region
        _
      $region76: #{tpu_custom_call.1} parent=11 // pred_fallthru
        _
      // Predicated region
      $region77: #{tpu_custom_call.1} parent=11 // pred_check
        %p525 = pneg %p436
      $region78: #{tpu_custom_call.1} parent=11 // pred_check_branch
        %527 = sbr.rel (%p525) target = $region80
      $region79: #{tpu_custom_call.1} parent=11 // pred_region
        _
      $region80: #{tpu_custom_call.1} parent=11 // pred_fallthru
        _
    $region12: #{tpu_custom_call.1} parent=5 // pred_fallthru
      _
    %p528 = scmp.lt.s32.totalorder %s27, 2
    // Predicated region
    $region81: #{tpu_custom_call.1} parent=5 // pred_check
      %p529 = pneg %p528
    $region82: #{tpu_custom_call.1} parent=5 // pred_check_branch
      %531 = sbr.rel (%p529) target = $region84
    $region83: #{tpu_custom_call.1} parent=5 // pred_region
      // Predicated region
      $region85: #{tpu_custom_call.1} parent=83 // pred_check
        %p532 = pneg %p47
      $region86: #{tpu_custom_call.1} parent=83 // pred_check_branch
        %534 = sbr.rel (%p532) target = $region88
      $region87: #{tpu_custom_call.1} parent=83 // pred_region
        %p535 = scmp.lt.s32.totalorder %s27, 1
        %s536 = scalar_select %p535, %s27, 1
        %s537 = smul.addr %s536, 8
        %s538 = smul.addr %s537, 8
        %s539 = scalar_lea.vmem %s0, %s538
      $region88: #{tpu_custom_call.1} parent=83 // pred_fallthru
        _
      // Predicated region
      $region89: #{tpu_custom_call.1} parent=83 // pred_check
        %p540 = pneg %p73
      $region90: #{tpu_custom_call.1} parent=83 // pred_check_branch
        %542 = sbr.rel (%p540) target = $region92
      $region91: #{tpu_custom_call.1} parent=83 // pred_region
        %p543 = scmp.lt.s32.totalorder %s27, 1
        %s544 = scalar_select %p543, %s27, 1
        %s545 = smul.addr %s544, 8
        %s546 = scalar_lea.vmem %s1, %s545
      $region92: #{tpu_custom_call.1} parent=83 // pred_fallthru
        _
    $region84: #{tpu_custom_call.1} parent=5 // pred_fallthru
      _
    %p547 = scmp.le.s32.totalorder 1, %s27
    %p548 = scmp.lt.s32.totalorder %s27, 3
    %p549 = pnand %p547, %p548
    %p550 = pneg %p549
    // Predicated region
    $region93: #{tpu_custom_call.1} parent=5 // pred_check
      _
    $region94: #{tpu_custom_call.1} parent=5 // pred_check_branch
      %552 = sbr.rel (%p549) target = $region96
    $region95: #{tpu_custom_call.1} parent=5 // pred_region
      %s553 = ssub.s32 %s27, 1
      %p554 = scmp.lt.s32.totalorder %s32, 1
      %s555 = scalar_select %p554, %s32, 1
      %s556 = smul.addr %s555, 8
      %s557 = smul.addr %s556, 8
      %s558 = scalar_lea.vmem %s0, %s557
      %p559 = pneg %p53
      %p560 = pneg %p50
      %p561 = scmp.lt.s32.totalorder %s32, 1
      %s562 = scalar_select %p561, %s32, 1
      %s563 = smul.addr %s562, 8
      %s564 = scalar_lea.vmem %s1, %s563
      %p565 = pneg %p79
      %p566 = pneg %p76
      %p567 = pneg %p100
      %p568 = pneg %p97
      %p569 = pneg %p121
      %p570 = pneg %p118
      %p571 = pneg %p142
      %p572 = pneg %p139
      %p573 = pneg %p163
      %p574 = pneg %p160
      %p575 = pneg %p184
      %p576 = pneg %p181
      %p577 = pneg %p205
      %p578 = pneg %p202
      %p579 = pneg %p226
      %p580 = pneg %p223
      %p581 = pneg %p247
      %p582 = pneg %p244
      %p583 = pneg %p268
      %p584 = pneg %p265
      %p585 = pneg %p289
      %p586 = pneg %p286
      %p587 = pneg %p310
      %p588 = pneg %p307
      %p589 = pneg %p331
      %p590 = pneg %p328
      %p591 = pneg %p352
      %p592 = pneg %p349
      %p593 = pneg %p373
      %p594 = pneg %p370
      %p595 = pneg %p394
      %p596 = pneg %p391
      %p597 = pneg %p415
      %p598 = pneg %p412
      %p599 = pneg %p436
      %p600 = pneg %p433
      %p601 = pneg %p462
      %p602 = pneg %p459
      %p603 = scmp.lt.s32.totalorder %s32, 1
      %s604 = scalar_select %p603, %s32, 1
      %s605 = smul.addr %s604, 8
      %s606 = scalar_lea.vmem %s19, %s605
      %p607 = scmp.lt.s32.totalorder %s32, 1
      %s608 = scalar_select %p607, %s32, 1
      %s609 = smul.addr %s608, 8
      %s610 = smul.addr %s609, 8
      %s611 = scalar_lea.vmem %s0, %s610
      %p612 = scmp.lt.s32.totalorder %s32, 1
      %s613 = scalar_select %p612, %s32, 1
      %s614 = smul.addr %s613, 8
      %s615 = scalar_lea.vmem %s1, %s614
      %p616 = scmp.lt.s32.totalorder %s32, 1
      %s617 = scalar_select %p616, %s32, 1
      %s618 = smul.addr %s617, 8
      %s619 = scalar_lea.vmem %s19, %s618
      %v620 = vld [vmem:[%s611] sm:$0xff]
      %v621 = vld [vmem:[%s611 + $0x8] sm:$0xff]
      %v622 = vld [vmem:[%s611 + $0x10] sm:$0xff]
      %v623 = vld [vmem:[%s611 + $0x18] sm:$0xff]
      %v624 = vld [vmem:[%s611 + $0x20] sm:$0xff]
      %v625 = vld [vmem:[%s611 + $0x28] sm:$0xff]
      %v626 = vld [vmem:[%s611 + $0x30] sm:$0xff]
      %v627 = vld [vmem:[%s611 + $0x38] sm:$0xff]
      %v628 = vld [vmem:[%s3] sm:$0xff]
      %v629 = vld [vmem:[%s3 + $0x8] sm:$0xff]
      %v630 = vld [vmem:[%s3 + $0x10] sm:$0xff]
      %v631 = vld [vmem:[%s3 + $0x18] sm:$0xff]
      %v632 = vld [vmem:[%s3 + $0x20] sm:$0xff]
      %v633 = vld [vmem:[%s3 + $0x28] sm:$0xff]
      %v634 = vld [vmem:[%s3 + $0x30] sm:$0xff]
      %v635 = vld [vmem:[%s3 + $0x38] sm:$0xff]
      %v636 = vld [vmem:[%s3 + $0x40] sm:$0xff]
      %v637 = vld [vmem:[%s3 + $0x48] sm:$0xff]
      %v638 = vld [vmem:[%s3 + $0x50] sm:$0xff]
      %v639 = vld [vmem:[%s3 + $0x58] sm:$0xff]
      %v640 = vld [vmem:[%s3 + $0x60] sm:$0xff]
      %v641 = vld [vmem:[%s3 + $0x68] sm:$0xff]
      %v642 = vld [vmem:[%s3 + $0x70] sm:$0xff]
      %v643 = vld [vmem:[%s3 + $0x78] sm:$0xff]
      %v644 = vld [vmem:[%s3 + $0x80] sm:$0xff]
      %v645 = vld [vmem:[%s3 + $0x88] sm:$0xff]
      %v646 = vld [vmem:[%s3 + $0x90] sm:$0xff]
      %v647 = vld [vmem:[%s3 + $0x98] sm:$0xff]
      %v648 = vld [vmem:[%s3 + $0xa0] sm:$0xff]
      %v649 = vld [vmem:[%s3 + $0xa8] sm:$0xff]
      %v650 = vld [vmem:[%s3 + $0xb0] sm:$0xff]
      %v651 = vld [vmem:[%s3 + $0xb8] sm:$0xff]
      %v652 = vld [vmem:[%s3 + $0xc0] sm:$0xff]
      %v653 = vld [vmem:[%s3 + $0xc8] sm:$0xff]
      %v654 = vld [vmem:[%s3 + $0xd0] sm:$0xff]
      %v655 = vld [vmem:[%s3 + $0xd8] sm:$0xff]
      %v656 = vld [vmem:[%s3 + $0xe0] sm:$0xff]
      %v657 = vld [vmem:[%s3 + $0xe8] sm:$0xff]
      %v658 = vld [vmem:[%s3 + $0xf0] sm:$0xff]
      %v659 = vld [vmem:[%s3 + $0xf8] sm:$0xff]
      %v660 = vld [vmem:[%s3 + $0x100] sm:$0xff]
      %v661 = vld [vmem:[%s3 + $0x108] sm:$0xff]
      %v662 = vld [vmem:[%s3 + $0x110] sm:$0xff]
      %v663 = vld [vmem:[%s3 + $0x118] sm:$0xff]
      %v664 = vld [vmem:[%s3 + $0x120] sm:$0xff]
      %v665 = vld [vmem:[%s3 + $0x128] sm:$0xff]
      %v666 = vld [vmem:[%s3 + $0x130] sm:$0xff]
      %v667 = vld [vmem:[%s3 + $0x138] sm:$0xff]
      %v668 = vld [vmem:[%s3 + $0x140] sm:$0xff]
      %v669 = vld [vmem:[%s3 + $0x148] sm:$0xff]
      %v670 = vld [vmem:[%s3 + $0x150] sm:$0xff]
      %v671 = vld [vmem:[%s3 + $0x158] sm:$0xff]
      %v672 = vld [vmem:[%s3 + $0x160] sm:$0xff]
      %v673 = vld [vmem:[%s3 + $0x168] sm:$0xff]
      %v674 = vld [vmem:[%s3 + $0x170] sm:$0xff]
      %v675 = vld [vmem:[%s3 + $0x178] sm:$0xff]
      %v676 = vld [vmem:[%s3 + $0x180] sm:$0xff]
      %v677 = vld [vmem:[%s3 + $0x188] sm:$0xff]
      %v678 = vld [vmem:[%s3 + $0x190] sm:$0xff]
      %v679 = vld [vmem:[%s3 + $0x198] sm:$0xff]
      %v680 = vld [vmem:[%s3 + $0x1a0] sm:$0xff]
      %v681 = vld [vmem:[%s3 + $0x1a8] sm:$0xff]
      %v682 = vld [vmem:[%s3 + $0x1b0] sm:$0xff]
      %v683 = vld [vmem:[%s3 + $0x1b8] sm:$0xff]
      %v684 = vld [vmem:[%s3 + $0x1c0] sm:$0xff]
      %v685 = vld [vmem:[%s3 + $0x1c8] sm:$0xff]
      %v686 = vld [vmem:[%s3 + $0x1d0] sm:$0xff]
      %v687 = vld [vmem:[%s3 + $0x1d8] sm:$0xff]
      %v688 = vld [vmem:[%s3 + $0x1e0] sm:$0xff]
      %v689 = vld [vmem:[%s3 + $0x1e8] sm:$0xff]
      %v690 = vld [vmem:[%s3 + $0x1f0] sm:$0xff]
      %v691 = vld [vmem:[%s3 + $0x1f8] sm:$0xff]
      %v692 = vld [vmem:[%s3 + $0x200] sm:$0xff]
      %v693 = vld [vmem:[%s3 + $0x208] sm:$0xff]
      %v694 = vld [vmem:[%s3 + $0x210] sm:$0xff]
      %v695 = vld [vmem:[%s3 + $0x218] sm:$0xff]
      %v696 = vld [vmem:[%s3 + $0x220] sm:$0xff]
      %v697 = vld [vmem:[%s3 + $0x228] sm:$0xff]
      %v698 = vld [vmem:[%s3 + $0x230] sm:$0xff]
      %v699 = vld [vmem:[%s3 + $0x238] sm:$0xff]
      %v700 = vld [vmem:[%s3 + $0x240] sm:$0xff]
      %v701 = vld [vmem:[%s3 + $0x248] sm:$0xff]
      %v702 = vld [vmem:[%s3 + $0x250] sm:$0xff]
      %v703 = vld [vmem:[%s3 + $0x258] sm:$0xff]
      %v704 = vld [vmem:[%s3 + $0x260] sm:$0xff]
      %v705 = vld [vmem:[%s3 + $0x268] sm:$0xff]
      %v706 = vld [vmem:[%s3 + $0x270] sm:$0xff]
      %v707 = vld [vmem:[%s3 + $0x278] sm:$0xff]
      %v708 = vld [vmem:[%s3 + $0x280] sm:$0xff]
      %v709 = vld [vmem:[%s3 + $0x288] sm:$0xff]
      %v710 = vld [vmem:[%s3 + $0x290] sm:$0xff]
      %v711 = vld [vmem:[%s3 + $0x298] sm:$0xff]
      %v712 = vld [vmem:[%s3 + $0x2a0] sm:$0xff]
      %v713 = vld [vmem:[%s3 + $0x2a8] sm:$0xff]
      %v714 = vld [vmem:[%s3 + $0x2b0] sm:$0xff]
      %v715 = vld [vmem:[%s3 + $0x2b8] sm:$0xff]
      %v716 = vld [vmem:[%s3 + $0x2c0] sm:$0xff]
      %v717 = vld [vmem:[%s3 + $0x2c8] sm:$0xff]
      %v718 = vld [vmem:[%s3 + $0x2d0] sm:$0xff]
      %v719 = vld [vmem:[%s3 + $0x2d8] sm:$0xff]
      %v720 = vld [vmem:[%s3 + $0x2e0] sm:$0xff]
      %v721 = vld [vmem:[%s3 + $0x2e8] sm:$0xff]
      %v722 = vld [vmem:[%s3 + $0x2f0] sm:$0xff]
      %v723 = vld [vmem:[%s3 + $0x2f8] sm:$0xff]
      %v724 = vld [vmem:[%s3 + $0x300] sm:$0xff]
      %v725 = vld [vmem:[%s3 + $0x308] sm:$0xff]
      %v726 = vld [vmem:[%s3 + $0x310] sm:$0xff]
      %v727 = vld [vmem:[%s3 + $0x318] sm:$0xff]
      %v728 = vld [vmem:[%s3 + $0x320] sm:$0xff]
      %v729 = vld [vmem:[%s3 + $0x328] sm:$0xff]
      %v730 = vld [vmem:[%s3 + $0x330] sm:$0xff]
      %v731 = vld [vmem:[%s3 + $0x338] sm:$0xff]
      %v732 = vld [vmem:[%s3 + $0x340] sm:$0xff]
      %v733 = vld [vmem:[%s3 + $0x348] sm:$0xff]
      %v734 = vld [vmem:[%s3 + $0x350] sm:$0xff]
      %v735 = vld [vmem:[%s3 + $0x358] sm:$0xff]
      %v736 = vld [vmem:[%s3 + $0x360] sm:$0xff]
      %v737 = vld [vmem:[%s3 + $0x368] sm:$0xff]
      %v738 = vld [vmem:[%s3 + $0x370] sm:$0xff]
      %v739 = vld [vmem:[%s3 + $0x378] sm:$0xff]
      %v740 = vld [vmem:[%s3 + $0x380] sm:$0xff]
      %v741 = vld [vmem:[%s3 + $0x388] sm:$0xff]
      %v742 = vld [vmem:[%s3 + $0x390] sm:$0xff]
      %v743 = vld [vmem:[%s3 + $0x398] sm:$0xff]
      %v744 = vld [vmem:[%s3 + $0x3a0] sm:$0xff]
      %v745 = vld [vmem:[%s3 + $0x3a8] sm:$0xff]
      %v746 = vld [vmem:[%s3 + $0x3b0] sm:$0xff]
      %v747 = vld [vmem:[%s3 + $0x3b8] sm:$0xff]
      %v748 = vld [vmem:[%s3 + $0x3c0] sm:$0xff]
      %v749 = vld [vmem:[%s3 + $0x3c8] sm:$0xff]
      %v750 = vld [vmem:[%s3 + $0x3d0] sm:$0xff]
      %v751 = vld [vmem:[%s3 + $0x3d8] sm:$0xff]
      %v752 = vld [vmem:[%s3 + $0x3e0] sm:$0xff]
      %v753 = vld [vmem:[%s3 + $0x3e8] sm:$0xff]
      %v754 = vld [vmem:[%s3 + $0x3f0] sm:$0xff]
      %v755 = vld [vmem:[%s3 + $0x3f8] sm:$0xff]
      %v756 = vld [vmem:[%s4] sm:$0x1]
      %v758 = vperm.slane %v756, 0
      %760 = vmatpush.msra.mxu0 %v643
      %761 = vmatpush.msra.mxu0 %v642
      %762 = vmatpush.msra.mxu0 %v641
      %763 = vmatpush.msra.mxu0 %v640
      %764 = vmatpush.msra.mxu0 %v639
      %765 = vmatpush.msra.mxu0 %v638
      %766 = vmatpush.msra.mxu0 %v637
      %767 = vmatpush.msra.mxu0 %v636
      %768 = vmatpush.msra.mxu0 %v635
      %769 = vmatpush.msra.mxu0 %v634
      %770 = vmatpush.msra.mxu0 %v633
      %771 = vmatpush.msra.mxu0 %v632
      %772 = vmatpush.msra.mxu0 %v631
      %773 = vmatpush.msra.mxu0 %v630
      %774 = vmatpush.msra.mxu0 %v629
      %775 = vmatpush.msra.mxu0 %v628
      %776 = vmatmul.f32.gmra.mxu0 %v620
      %v777 = vpop.f32.mrf.mxu0
      %v778 = vadd.f32 %v758, %v777
      %779 = vdwg.mxu0
      %780 = vmatpush.msra.mxu0 %v659
      %781 = vmatpush.msra.mxu0 %v658
      %782 = vmatpush.msra.mxu0 %v657
      %783 = vmatpush.msra.mxu0 %v656
      %784 = vmatpush.msra.mxu0 %v655
      %785 = vmatpush.msra.mxu0 %v654
      %786 = vmatpush.msra.mxu0 %v653
      %787 = vmatpush.msra.mxu0 %v652
      %788 = vmatpush.msra.mxu0 %v651
      %789 = vmatpush.msra.mxu0 %v650
      %790 = vmatpush.msra.mxu0 %v649
      %791 = vmatpush.msra.mxu0 %v648
      %792 = vmatpush.msra.mxu0 %v647
      %793 = vmatpush.msra.mxu0 %v646
      %794 = vmatpush.msra.mxu0 %v645
      %795 = vmatpush.msra.mxu0 %v644
      %796 = vmatmul.f32.gmra.mxu0 %v621
      %v797 = vpop.f32.mrf.mxu0
      %v798 = vadd.f32 %v778, %v797
      %799 = vdwg.mxu0
      %800 = vmatpush.msra.mxu0 %v675
      %801 = vmatpush.msra.mxu0 %v674
      %802 = vmatpush.msra.mxu0 %v673
      %803 = vmatpush.msra.mxu0 %v672
      %804 = vmatpush.msra.mxu0 %v671
      %805 = vmatpush.msra.mxu0 %v670
      %806 = vmatpush.msra.mxu0 %v669
      %807 = vmatpush.msra.mxu0 %v668
      %808 = vmatpush.msra.mxu0 %v667
      %809 = vmatpush.msra.mxu0 %v666
      %810 = vmatpush.msra.mxu0 %v665
      %811 = vmatpush.msra.mxu0 %v664
      %812 = vmatpush.msra.mxu0 %v663
      %813 = vmatpush.msra.mxu0 %v662
      %814 = vmatpush.msra.mxu0 %v661
      %815 = vmatpush.msra.mxu0 %v660
      %816 = vmatmul.f32.gmra.mxu0 %v622
      %v817 = vpop.f32.mrf.mxu0
      %v818 = vadd.f32 %v798, %v817
      %819 = vdwg.mxu0
      %820 = vmatpush.msra.mxu0 %v691
      %821 = vmatpush.msra.mxu0 %v690
      %822 = vmatpush.msra.mxu0 %v689
      %823 = vmatpush.msra.mxu0 %v688
      %824 = vmatpush.msra.mxu0 %v687
      %825 = vmatpush.msra.mxu0 %v686
      %826 = vmatpush.msra.mxu0 %v685
      %827 = vmatpush.msra.mxu0 %v684
      %828 = vmatpush.msra.mxu0 %v683
      %829 = vmatpush.msra.mxu0 %v682
      %830 = vmatpush.msra.mxu0 %v681
      %831 = vmatpush.msra.mxu0 %v680
      %832 = vmatpush.msra.mxu0 %v679
      %833 = vmatpush.msra.mxu0 %v678
      %834 = vmatpush.msra.mxu0 %v677
      %835 = vmatpush.msra.mxu0 %v676
      %836 = vmatmul.f32.gmra.mxu0 %v623
      %v837 = vpop.f32.mrf.mxu0
      %v838 = vadd.f32 %v818, %v837
      %839 = vdwg.mxu0
      %840 = vmatpush.msra.mxu0 %v707
      %841 = vmatpush.msra.mxu0 %v706
      %842 = vmatpush.msra.mxu0 %v705
      %843 = vmatpush.msra.mxu0 %v704
      %844 = vmatpush.msra.mxu0 %v703
      %845 = vmatpush.msra.mxu0 %v702
      %846 = vmatpush.msra.mxu0 %v701
      %847 = vmatpush.msra.mxu0 %v700
      %848 = vmatpush.msra.mxu0 %v699
      %849 = vmatpush.msra.mxu0 %v698
      %850 = vmatpush.msra.mxu0 %v697
      %851 = vmatpush.msra.mxu0 %v696
      %852 = vmatpush.msra.mxu0 %v695
      %853 = vmatpush.msra.mxu0 %v694
      %854 = vmatpush.msra.mxu0 %v693
      %855 = vmatpush.msra.mxu0 %v692
      %856 = vmatmul.f32.gmra.mxu0 %v624
      %v857 = vpop.f32.mrf.mxu0
      %v858 = vadd.f32 %v838, %v857
      %859 = vdwg.mxu0
      %860 = vmatpush.msra.mxu0 %v723
      %861 = vmatpush.msra.mxu0 %v722
      %862 = vmatpush.msra.mxu0 %v721
      %863 = vmatpush.msra.mxu0 %v720
      %864 = vmatpush.msra.mxu0 %v719
      %865 = vmatpush.msra.mxu0 %v718
      %866 = vmatpush.msra.mxu0 %v717
      %867 = vmatpush.msra.mxu0 %v716
      %868 = vmatpush.msra.mxu0 %v715
      %869 = vmatpush.msra.mxu0 %v714
      %870 = vmatpush.msra.mxu0 %v713
      %871 = vmatpush.msra.mxu0 %v712
      %872 = vmatpush.msra.mxu0 %v711
      %873 = vmatpush.msra.mxu0 %v710
      %874 = vmatpush.msra.mxu0 %v709
      %875 = vmatpush.msra.mxu0 %v708
      %876 = vmatmul.f32.gmra.mxu0 %v625
      %v877 = vpop.f32.mrf.mxu0
      %v878 = vadd.f32 %v858, %v877
      %879 = vdwg.mxu0
      %880 = vmatpush.msra.mxu0 %v739
      %881 = vmatpush.msra.mxu0 %v738
      %882 = vmatpush.msra.mxu0 %v737
      %883 = vmatpush.msra.mxu0 %v736
      %884 = vmatpush.msra.mxu0 %v735
      %885 = vmatpush.msra.mxu0 %v734
      %886 = vmatpush.msra.mxu0 %v733
      %887 = vmatpush.msra.mxu0 %v732
      %888 = vmatpush.msra.mxu0 %v731
      %889 = vmatpush.msra.mxu0 %v730
      %890 = vmatpush.msra.mxu0 %v729
      %891 = vmatpush.msra.mxu0 %v728
      %892 = vmatpush.msra.mxu0 %v727
      %893 = vmatpush.msra.mxu0 %v726
      %894 = vmatpush.msra.mxu0 %v725
      %895 = vmatpush.msra.mxu0 %v724
      %896 = vmatmul.f32.gmra.mxu0 %v626
      %v897 = vpop.f32.mrf.mxu0
      %v898 = vadd.f32 %v878, %v897
      %899 = vdwg.mxu0
      %900 = vmatpush.msra.mxu0 %v755
      %901 = vmatpush.msra.mxu0 %v754
      %902 = vmatpush.msra.mxu0 %v753
      %903 = vmatpush.msra.mxu0 %v752
      %904 = vmatpush.msra.mxu0 %v751
      %905 = vmatpush.msra.mxu0 %v750
      %906 = vmatpush.msra.mxu0 %v749
      %907 = vmatpush.msra.mxu0 %v748
      %908 = vmatpush.msra.mxu0 %v747
      %909 = vmatpush.msra.mxu0 %v746
      %910 = vmatpush.msra.mxu0 %v745
      %911 = vmatpush.msra.mxu0 %v744
      %912 = vmatpush.msra.mxu0 %v743
      %913 = vmatpush.msra.mxu0 %v742
      %914 = vmatpush.msra.mxu0 %v741
      %915 = vmatpush.msra.mxu0 %v740
      %916 = vmatmul.f32.gmra.mxu0 %v627
      %v917 = vpop.f32.mrf.mxu0
      %v918 = vadd.f32 %v898, %v917
      %919 = vdwg.mxu0
      %v920 = vmax.f32 %v918, 0.0
      %v921 = vld [vmem:[%s2] sm:$0xff]
      %v922 = vadd.f32 %v920, %v921
      %v923 = vld [vmem:[%s5] sm:$0xff]
      %v924 = vld [vmem:[%s5 + $0x8] sm:$0xff]
      %v925 = vld [vmem:[%s5 + $0x10] sm:$0xff]
      %v926 = vld [vmem:[%s5 + $0x18] sm:$0xff]
      %v927 = vld [vmem:[%s5 + $0x20] sm:$0xff]
      %v928 = vld [vmem:[%s5 + $0x28] sm:$0xff]
      %v929 = vld [vmem:[%s5 + $0x30] sm:$0xff]
      %v930 = vld [vmem:[%s5 + $0x38] sm:$0xff]
      %v931 = vld [vmem:[%s5 + $0x40] sm:$0xff]
      %v932 = vld [vmem:[%s5 + $0x48] sm:$0xff]
      %v933 = vld [vmem:[%s5 + $0x50] sm:$0xff]
      %v934 = vld [vmem:[%s5 + $0x58] sm:$0xff]
      %v935 = vld [vmem:[%s5 + $0x60] sm:$0xff]
      %v936 = vld [vmem:[%s5 + $0x68] sm:$0xff]
      %v937 = vld [vmem:[%s5 + $0x70] sm:$0xff]
      %v938 = vld [vmem:[%s5 + $0x78] sm:$0xff]
      %v939 = vld [vmem:[%s5 + $0x80] sm:$0xff]
      %v940 = vld [vmem:[%s5 + $0x88] sm:$0xff]
      %v941 = vld [vmem:[%s5 + $0x90] sm:$0xff]
      %v942 = vld [vmem:[%s5 + $0x98] sm:$0xff]
      %v943 = vld [vmem:[%s5 + $0xa0] sm:$0xff]
      %v944 = vld [vmem:[%s5 + $0xa8] sm:$0xff]
      %v945 = vld [vmem:[%s5 + $0xb0] sm:$0xff]
      %v946 = vld [vmem:[%s5 + $0xb8] sm:$0xff]
      %v947 = vld [vmem:[%s5 + $0xc0] sm:$0xff]
      %v948 = vld [vmem:[%s5 + $0xc8] sm:$0xff]
      %v949 = vld [vmem:[%s5 + $0xd0] sm:$0xff]
      %v950 = vld [vmem:[%s5 + $0xd8] sm:$0xff]
      %v951 = vld [vmem:[%s5 + $0xe0] sm:$0xff]
      %v952 = vld [vmem:[%s5 + $0xe8] sm:$0xff]
      %v953 = vld [vmem:[%s5 + $0xf0] sm:$0xff]
      %v954 = vld [vmem:[%s5 + $0xf8] sm:$0xff]
      %v955 = vld [vmem:[%s5 + $0x100] sm:$0xff]
      %v956 = vld [vmem:[%s5 + $0x108] sm:$0xff]
      %v957 = vld [vmem:[%s5 + $0x110] sm:$0xff]
      %v958 = vld [vmem:[%s5 + $0x118] sm:$0xff]
      %v959 = vld [vmem:[%s5 + $0x120] sm:$0xff]
      %v960 = vld [vmem:[%s5 + $0x128] sm:$0xff]
      %v961 = vld [vmem:[%s5 + $0x130] sm:$0xff]
      %v962 = vld [vmem:[%s5 + $0x138] sm:$0xff]
      %v963 = vld [vmem:[%s5 + $0x140] sm:$0xff]
      %v964 = vld [vmem:[%s5 + $0x148] sm:$0xff]
      %v965 = vld [vmem:[%s5 + $0x150] sm:$0xff]
      %v966 = vld [vmem:[%s5 + $0x158] sm:$0xff]
      %v967 = vld [vmem:[%s5 + $0x160] sm:$0xff]
      %v968 = vld [vmem:[%s5 + $0x168] sm:$0xff]
      %v969 = vld [vmem:[%s5 + $0x170] sm:$0xff]
      %v970 = vld [vmem:[%s5 + $0x178] sm:$0xff]
      %v971 = vld [vmem:[%s6] sm:$0x1]
      %v972 = vld [vmem:[%s6 + $0x1] sm:$0x1]
      %v973 = vld [vmem:[%s6 + $0x2] sm:$0x1]
      %v974 = vld [vmem:[%s6 + $0x3] sm:$0x1]
      %v975 = vld [vmem:[%s6 + $0x4] sm:$0x1]
      %v976 = vld [vmem:[%s6 + $0x5] sm:$0x1]
      %v977 = vld [vmem:[%s6 + $0x6] sm:$0x1]
      %v978 = vld [vmem:[%s6 + $0x7] sm:$0x1]
      %v979 = vld [vmem:[%s6 + $0x8] sm:$0x1]
      %v980 = vld [vmem:[%s6 + $0x9] sm:$0x1]
      %v981 = vld [vmem:[%s6 + $0xa] sm:$0x1]
      %v982 = vld [vmem:[%s6 + $0xb] sm:$0x1]
      %v995 = vperm.slane %v971, 0
      %v996 = vperm.slane %v972, 0
      %v997 = vperm.slane %v973, 0
      %v998 = vperm.slane %v974, 0
      %v999 = vperm.slane %v975, 0
      %v1000 = vperm.slane %v976, 0
      %v1001 = vperm.slane %v977, 0
      %v1002 = vperm.slane %v978, 0
      %v1003 = vperm.slane %v979, 0
      %v1004 = vperm.slane %v980, 0
      %v1005 = vperm.slane %v981, 0
      %v1006 = vperm.slane %v982, 0
      %vm1019 = vcmask 261120
      %v1021 = vsel %vm1019, %v922, 0
      %1023 = vmatpush.msra.mxu0 0.0
      %1024 = vmatpush.msra.mxu0 0.0
      %1025 = vmatpush.msra.mxu0 0.0
      %1026 = vmatpush.msra.mxu0 0.0
      %1027 = vmatpush.msra.mxu0 0.0
      %1028 = vmatpush.msra.mxu0 0.0
      %1029 = vmatpush.msra.mxu0 0.0
      %1030 = vmatpush.msra.mxu0 0.0
      %1031 = vmatpush.msra.mxu0 0.0
      %1032 = vmatpush.msra.mxu0 0.0
      %1033 = vmatpush.msra.mxu0 0.0
      %1034 = vmatpush.msra.mxu0 0.0
      %1035 = vmatpush.msra.mxu0 %v926
      %1036 = vmatpush.msra.mxu0 %v925
      %1037 = vmatpush.msra.mxu0 %v924
      %1038 = vmatpush.msra.mxu0 %v923
      %1039 = vmatmul.f32.gmra.mxu0 %v1021
      %v1040 = vpop.f32.mrf.mxu0
      %v1041 = vadd.f32 %v995, %v1040
      %1042 = vdwg.mxu0
      %1043 = vmatpush.msra.mxu0 0.0
      %1044 = vmatpush.msra.mxu0 0.0
      %1045 = vmatpush.msra.mxu0 0.0
      %1046 = vmatpush.msra.mxu0 0.0
      %1047 = vmatpush.msra.mxu0 0.0
      %1048 = vmatpush.msra.mxu0 0.0
      %1049 = vmatpush.msra.mxu0 0.0
      %1050 = vmatpush.msra.mxu0 0.0
      %1051 = vmatpush.msra.mxu0 0.0
      %1052 = vmatpush.msra.mxu0 0.0
      %1053 = vmatpush.msra.mxu0 0.0
      %1054 = vmatpush.msra.mxu0 0.0
      %1055 = vmatpush.msra.mxu0 %v930
      %1056 = vmatpush.msra.mxu0 %v929
      %1057 = vmatpush.msra.mxu0 %v928
      %1058 = vmatpush.msra.mxu0 %v927
      %1059 = vmatmul.f32.gmra.mxu0 %v1021
      %v1060 = vpop.f32.mrf.mxu0
      %v1061 = vadd.f32 %v996, %v1060
      %1062 = vdwg.mxu0
      %1063 = vmatpush.msra.mxu0 0.0
      %1064 = vmatpush.msra.mxu0 0.0
      %1065 = vmatpush.msra.mxu0 0.0
      %1066 = vmatpush.msra.mxu0 0.0
      %1067 = vmatpush.msra.mxu0 0.0
      %1068 = vmatpush.msra.mxu0 0.0
      %1069 = vmatpush.msra.mxu0 0.0
      %1070 = vmatpush.msra.mxu0 0.0
      %1071 = vmatpush.msra.mxu0 0.0
      %1072 = vmatpush.msra.mxu0 0.0
      %1073 = vmatpush.msra.mxu0 0.0
      %1074 = vmatpush.msra.mxu0 0.0
      %1075 = vmatpush.msra.mxu0 %v934
      %1076 = vmatpush.msra.mxu0 %v933
      %1077 = vmatpush.msra.mxu0 %v932
      %1078 = vmatpush.msra.mxu0 %v931
      %1079 = vmatmul.f32.gmra.mxu0 %v1021
      %v1080 = vpop.f32.mrf.mxu0
      %v1081 = vadd.f32 %v997, %v1080
      %1082 = vdwg.mxu0
      %1083 = vmatpush.msra.mxu0 0.0
      %1084 = vmatpush.msra.mxu0 0.0
      %1085 = vmatpush.msra.mxu0 0.0
      %1086 = vmatpush.msra.mxu0 0.0
      %1087 = vmatpush.msra.mxu0 0.0
      %1088 = vmatpush.msra.mxu0 0.0
      %1089 = vmatpush.msra.mxu0 0.0
      %1090 = vmatpush.msra.mxu0 0.0
      %1091 = vmatpush.msra.mxu0 0.0
      %1092 = vmatpush.msra.mxu0 0.0
      %1093 = vmatpush.msra.mxu0 0.0
      %1094 = vmatpush.msra.mxu0 0.0
      %1095 = vmatpush.msra.mxu0 %v938
      %1096 = vmatpush.msra.mxu0 %v937
      %1097 = vmatpush.msra.mxu0 %v936
      %1098 = vmatpush.msra.mxu0 %v935
      %1099 = vmatmul.f32.gmra.mxu0 %v1021
      %v1100 = vpop.f32.mrf.mxu0
      %v1101 = vadd.f32 %v998, %v1100
      %1102 = vdwg.mxu0
      %1103 = vmatpush.msra.mxu0 0.0
      %1104 = vmatpush.msra.mxu0 0.0
      %1105 = vmatpush.msra.mxu0 0.0
      %1106 = vmatpush.msra.mxu0 0.0
      %1107 = vmatpush.msra.mxu0 0.0
      %1108 = vmatpush.msra.mxu0 0.0
      %1109 = vmatpush.msra.mxu0 0.0
      %1110 = vmatpush.msra.mxu0 0.0
      %1111 = vmatpush.msra.mxu0 0.0
      %1112 = vmatpush.msra.mxu0 0.0
      %1113 = vmatpush.msra.mxu0 0.0
      %1114 = vmatpush.msra.mxu0 0.0
      %1115 = vmatpush.msra.mxu0 %v942
      %1116 = vmatpush.msra.mxu0 %v941
      %1117 = vmatpush.msra.mxu0 %v940
      %1118 = vmatpush.msra.mxu0 %v939
      %1119 = vmatmul.f32.gmra.mxu0 %v1021
      %v1120 = vpop.f32.mrf.mxu0
      %v1121 = vadd.f32 %v999, %v1120
      %1122 = vdwg.mxu0
      %1123 = vmatpush.msra.mxu0 0.0
      %1124 = vmatpush.msra.mxu0 0.0
      %1125 = vmatpush.msra.mxu0 0.0
      %1126 = vmatpush.msra.mxu0 0.0
      %1127 = vmatpush.msra.mxu0 0.0
      %1128 = vmatpush.msra.mxu0 0.0
      %1129 = vmatpush.msra.mxu0 0.0
      %1130 = vmatpush.msra.mxu0 0.0
      %1131 = vmatpush.msra.mxu0 0.0
      %1132 = vmatpush.msra.mxu0 0.0
      %1133 = vmatpush.msra.mxu0 0.0
      %1134 = vmatpush.msra.mxu0 0.0
      %1135 = vmatpush.msra.mxu0 %v946
      %1136 = vmatpush.msra.mxu0 %v945
      %1137 = vmatpush.msra.mxu0 %v944
      %1138 = vmatpush.msra.mxu0 %v943
      %1139 = vmatmul.f32.gmra.mxu0 %v1021
      %v1140 = vpop.f32.mrf.mxu0
      %v1141 = vadd.f32 %v1000, %v1140
      %1142 = vdwg.mxu0
      %1143 = vmatpush.msra.mxu0 0.0
      %1144 = vmatpush.msra.mxu0 0.0
      %1145 = vmatpush.msra.mxu0 0.0
      %1146 = vmatpush.msra.mxu0 0.0
      %1147 = vmatpush.msra.mxu0 0.0
      %1148 = vmatpush.msra.mxu0 0.0
      %1149 = vmatpush.msra.mxu0 0.0
      %1150 = vmatpush.msra.mxu0 0.0
      %1151 = vmatpush.msra.mxu0 0.0
      %1152 = vmatpush.msra.mxu0 0.0
      %1153 = vmatpush.msra.mxu0 0.0
      %1154 = vmatpush.msra.mxu0 0.0
      %1155 = vmatpush.msra.mxu0 %v950
      %1156 = vmatpush.msra.mxu0 %v949
      %1157 = vmatpush.msra.mxu0 %v948
      %1158 = vmatpush.msra.mxu0 %v947
      %1159 = vmatmul.f32.gmra.mxu0 %v1021
      %v1160 = vpop.f32.mrf.mxu0
      %v1161 = vadd.f32 %v1001, %v1160
      %1162 = vdwg.mxu0
      %1163 = vmatpush.msra.mxu0 0.0
      %1164 = vmatpush.msra.mxu0 0.0
      %1165 = vmatpush.msra.mxu0 0.0
      %1166 = vmatpush.msra.mxu0 0.0
      %1167 = vmatpush.msra.mxu0 0.0
      %1168 = vmatpush.msra.mxu0 0.0
      %1169 = vmatpush.msra.mxu0 0.0
      %1170 = vmatpush.msra.mxu0 0.0
      %1171 = vmatpush.msra.mxu0 0.0
      %1172 = vmatpush.msra.mxu0 0.0
      %1173 = vmatpush.msra.mxu0 0.0
      %1174 = vmatpush.msra.mxu0 0.0
      %1175 = vmatpush.msra.mxu0 %v954
      %1176 = vmatpush.msra.mxu0 %v953
      %1177 = vmatpush.msra.mxu0 %v952
      %1178 = vmatpush.msra.mxu0 %v951
      %1179 = vmatmul.f32.gmra.mxu0 %v1021
      %v1180 = vpop.f32.mrf.mxu0
      %v1181 = vadd.f32 %v1002, %v1180
      %1182 = vdwg.mxu0
      %1183 = vmatpush.msra.mxu0 0.0
      %1184 = vmatpush.msra.mxu0 0.0
      %1185 = vmatpush.msra.mxu0 0.0
      %1186 = vmatpush.msra.mxu0 0.0
      %1187 = vmatpush.msra.mxu0 0.0
      %1188 = vmatpush.msra.mxu0 0.0
      %1189 = vmatpush.msra.mxu0 0.0
      %1190 = vmatpush.msra.mxu0 0.0
      %1191 = vmatpush.msra.mxu0 0.0
      %1192 = vmatpush.msra.mxu0 0.0
      %1193 = vmatpush.msra.mxu0 0.0
      %1194 = vmatpush.msra.mxu0 0.0
      %1195 = vmatpush.msra.mxu0 %v958
      %1196 = vmatpush.msra.mxu0 %v957
      %1197 = vmatpush.msra.mxu0 %v956
      %1198 = vmatpush.msra.mxu0 %v955
      %1199 = vmatmul.f32.gmra.mxu0 %v1021
      %v1200 = vpop.f32.mrf.mxu0
      %v1201 = vadd.f32 %v1003, %v1200
      %1202 = vdwg.mxu0
      %1203 = vmatpush.msra.mxu0 0.0
      %1204 = vmatpush.msra.mxu0 0.0
      %1205 = vmatpush.msra.mxu0 0.0
      %1206 = vmatpush.msra.mxu0 0.0
      %1207 = vmatpush.msra.mxu0 0.0
      %1208 = vmatpush.msra.mxu0 0.0
      %1209 = vmatpush.msra.mxu0 0.0
      %1210 = vmatpush.msra.mxu0 0.0
      %1211 = vmatpush.msra.mxu0 0.0
      %1212 = vmatpush.msra.mxu0 0.0
      %1213 = vmatpush.msra.mxu0 0.0
      %1214 = vmatpush.msra.mxu0 0.0
      %1215 = vmatpush.msra.mxu0 %v962
      %1216 = vmatpush.msra.mxu0 %v961
      %1217 = vmatpush.msra.mxu0 %v960
      %1218 = vmatpush.msra.mxu0 %v959
      %1219 = vmatmul.f32.gmra.mxu0 %v1021
      %v1220 = vpop.f32.mrf.mxu0
      %v1221 = vadd.f32 %v1004, %v1220
      %1222 = vdwg.mxu0
      %1223 = vmatpush.msra.mxu0 0.0
      %1224 = vmatpush.msra.mxu0 0.0
      %1225 = vmatpush.msra.mxu0 0.0
      %1226 = vmatpush.msra.mxu0 0.0
      %1227 = vmatpush.msra.mxu0 0.0
      %1228 = vmatpush.msra.mxu0 0.0
      %1229 = vmatpush.msra.mxu0 0.0
      %1230 = vmatpush.msra.mxu0 0.0
      %1231 = vmatpush.msra.mxu0 0.0
      %1232 = vmatpush.msra.mxu0 0.0
      %1233 = vmatpush.msra.mxu0 0.0
      %1234 = vmatpush.msra.mxu0 0.0
      %1235 = vmatpush.msra.mxu0 %v966
      %1236 = vmatpush.msra.mxu0 %v965
      %1237 = vmatpush.msra.mxu0 %v964
      %1238 = vmatpush.msra.mxu0 %v963
      %1239 = vmatmul.f32.gmra.mxu0 %v1021
      %v1240 = vpop.f32.mrf.mxu0
      %v1241 = vadd.f32 %v1005, %v1240
      %1242 = vdwg.mxu0
      %1243 = vmatpush.msra.mxu0 0.0
      %1244 = vmatpush.msra.mxu0 0.0
      %1245 = vmatpush.msra.mxu0 0.0
      %1246 = vmatpush.msra.mxu0 0.0
      %1247 = vmatpush.msra.mxu0 0.0
      %1248 = vmatpush.msra.mxu0 0.0
      %1249 = vmatpush.msra.mxu0 0.0
      %1250 = vmatpush.msra.mxu0 0.0
      %1251 = vmatpush.msra.mxu0 0.0
      %1252 = vmatpush.msra.mxu0 0.0
      %1253 = vmatpush.msra.mxu0 0.0
      %1254 = vmatpush.msra.mxu0 0.0
      %1255 = vmatpush.msra.mxu0 %v970
      %1256 = vmatpush.msra.mxu0 %v969
      %1257 = vmatpush.msra.mxu0 %v968
      %1258 = vmatpush.msra.mxu0 %v967
      %1259 = vmatmul.f32.gmra.mxu0 %v1021
      %v1260 = vpop.f32.mrf.mxu0
      %v1261 = vadd.f32 %v1006, %v1260
      %1262 = vdwg.mxu0
      %vm1263 = vcmask 64512
      %v1265 = vsel %vm1263, %v1041, 0
      %v1268 = vsel %vm1263, %v1121, 0
      %1270 = vmatpush.xpose.msra.mxu0 0.0
      %1271 = vmatpush.xpose.msra.mxu0 0.0
      %1272 = vmatpush.xpose.msra.mxu0 0.0
      %1273 = vmatpush.xpose.msra.mxu0 0.0
      %1274 = vmatpush.xpose.msra.mxu0 0.0
      %1275 = vmatpush.xpose.msra.mxu0 0.0
      %1276 = vmatpush.xpose.msra.mxu0 0.0
      %1277 = vmatpush.xpose.msra.mxu0 0.0
      %1278 = vmatpush.xpose.msra.mxu0 0.0
      %1279 = vmatpush.xpose.msra.mxu0 0.0
      %1280 = vmatpush.xpose.msra.mxu0 0.0
      %1281 = vmatpush.xpose.msra.mxu0 0.0
      %1282 = vmatpush.xpose.msra.mxu0 0.0
      %1283 = vmatpush.xpose.msra.mxu0 0.0
      %1284 = vmatpush.xpose.msra.mxu0 0.0
      %1285 = vmatpush.xpose.msra.mxu0 %v1268
      %1286 = vmatmul.f32.gmra.mxu0 %v1265
      %v1287 = vpop.f32.mrf.mxu0
      %v1288 = vadd.f32 0.0, %v1287
      %1289 = vdwg.mxu0
      %v1291 = vsel %vm1263, %v1061, 0
      %v1294 = vsel %vm1263, %v1141, 0
      %1296 = vmatpush.xpose.msra.mxu0 0.0
      %1297 = vmatpush.xpose.msra.mxu0 0.0
      %1298 = vmatpush.xpose.msra.mxu0 0.0
      %1299 = vmatpush.xpose.msra.mxu0 0.0
      %1300 = vmatpush.xpose.msra.mxu0 0.0
      %1301 = vmatpush.xpose.msra.mxu0 0.0
      %1302 = vmatpush.xpose.msra.mxu0 0.0
      %1303 = vmatpush.xpose.msra.mxu0 0.0
      %1304 = vmatpush.xpose.msra.mxu0 0.0
      %1305 = vmatpush.xpose.msra.mxu0 0.0
      %1306 = vmatpush.xpose.msra.mxu0 0.0
      %1307 = vmatpush.xpose.msra.mxu0 0.0
      %1308 = vmatpush.xpose.msra.mxu0 0.0
      %1309 = vmatpush.xpose.msra.mxu0 0.0
      %1310 = vmatpush.xpose.msra.mxu0 0.0
      %1311 = vmatpush.xpose.msra.mxu0 %v1294
      %1312 = vmatmul.f32.gmra.mxu0 %v1291
      %v1313 = vpop.f32.mrf.mxu0
      %v1314 = vadd.f32 0.0, %v1313
      %1315 = vdwg.mxu0
      %v1317 = vsel %vm1263, %v1081, 0
      %v1320 = vsel %vm1263, %v1161, 0
      %1322 = vmatpush.xpose.msra.mxu0 0.0
      %1323 = vmatpush.xpose.msra.mxu0 0.0
      %1324 = vmatpush.xpose.msra.mxu0 0.0
      %1325 = vmatpush.xpose.msra.mxu0 0.0
      %1326 = vmatpush.xpose.msra.mxu0 0.0
      %1327 = vmatpush.xpose.msra.mxu0 0.0
      %1328 = vmatpush.xpose.msra.mxu0 0.0
      %1329 = vmatpush.xpose.msra.mxu0 0.0
      %1330 = vmatpush.xpose.msra.mxu0 0.0
      %1331 = vmatpush.xpose.msra.mxu0 0.0
      %1332 = vmatpush.xpose.msra.mxu0 0.0
      %1333 = vmatpush.xpose.msra.mxu0 0.0
      %1334 = vmatpush.xpose.msra.mxu0 0.0
      %1335 = vmatpush.xpose.msra.mxu0 0.0
      %1336 = vmatpush.xpose.msra.mxu0 0.0
      %1337 = vmatpush.xpose.msra.mxu0 %v1320
      %1338 = vmatmul.f32.gmra.mxu0 %v1317
      %v1339 = vpop.f32.mrf.mxu0
      %v1340 = vadd.f32 0.0, %v1339
      %1341 = vdwg.mxu0
      %v1343 = vsel %vm1263, %v1101, 0
      %v1346 = vsel %vm1263, %v1181, 0
      %1348 = vmatpush.xpose.msra.mxu0 0.0
      %1349 = vmatpush.xpose.msra.mxu0 0.0
      %1350 = vmatpush.xpose.msra.mxu0 0.0
      %1351 = vmatpush.xpose.msra.mxu0 0.0
      %1352 = vmatpush.xpose.msra.mxu0 0.0
      %1353 = vmatpush.xpose.msra.mxu0 0.0
      %1354 = vmatpush.xpose.msra.mxu0 0.0
      %1355 = vmatpush.xpose.msra.mxu0 0.0
      %1356 = vmatpush.xpose.msra.mxu0 0.0
      %1357 = vmatpush.xpose.msra.mxu0 0.0
      %1358 = vmatpush.xpose.msra.mxu0 0.0
      %1359 = vmatpush.xpose.msra.mxu0 0.0
      %1360 = vmatpush.xpose.msra.mxu0 0.0
      %1361 = vmatpush.xpose.msra.mxu0 0.0
      %1362 = vmatpush.xpose.msra.mxu0 0.0
      %1363 = vmatpush.xpose.msra.mxu0 %v1346
      %1364 = vmatmul.f32.gmra.mxu0 %v1343
      %v1365 = vpop.f32.mrf.mxu0
      %v1366 = vadd.f32 0.0, %v1365
      %1367 = vdwg.mxu0
      %v1368 = vmul.f32 %v1288, 0.35355338
      %v1369 = vmul.f32 %v1314, 0.35355338
      %v1370 = vmul.f32 %v1340, 0.35355338
      %v1371 = vmul.f32 %v1366, 0.35355338
      %v1372 = vsel %vm1263, %v1368, -inf
      %1373 = vmax.xlane.f32.xlu0 %v1372
      %v1374 = vpop.xlane.xlu0 %1373
      %v1375 = vsel %vm1263, %v1369, -inf
      %1376 = vmax.xlane.f32.xlu0 %v1375
      %v1377 = vpop.xlane.xlu0 %1376
      %v1378 = vsel %vm1263, %v1370, -inf
      %1379 = vmax.xlane.f32.xlu0 %v1378
      %v1380 = vpop.xlane.xlu0 %1379
      %v1381 = vsel %vm1263, %v1371, -inf
      %1382 = vmax.xlane.f32.xlu0 %v1381
      %v1383 = vpop.xlane.xlu0 %1382
      %v1384 = vsub.f32 %v1368, %v1374
      %v1385 = vsub.f32 %v1369, %v1377
      %v1386 = vsub.f32 %v1370, %v1380
      %v1387 = vsub.f32 %v1371, %v1383
      %v1388 = vmul.f32 %v1384, 1.442695
      %v1389 = vpow.pop %v1388
      %v1390 = vmul.f32 %v1385, 1.442695
      %v1391 = vpow.pop %v1390
      %v1392 = vmul.f32 %v1386, 1.442695
      %v1393 = vpow.pop %v1392
      %v1394 = vmul.f32 %v1387, 1.442695
      %v1395 = vpow.pop %v1394
      %v1396 = vsel %vm1263, %v1389, 0.0
      %1397 = vadd.xlane.f32.xlu0 %v1396
      %v1398 = vpop.xlane.xlu0 %1397
      %v1399 = vsel %vm1263, %v1391, 0.0
      %1400 = vadd.xlane.f32.xlu0 %v1399
      %v1401 = vpop.xlane.xlu0 %1400
      %v1402 = vsel %vm1263, %v1393, 0.0
      %1403 = vadd.xlane.f32.xlu0 %v1402
      %v1404 = vpop.xlane.xlu0 %1403
      %v1405 = vsel %vm1263, %v1395, 0.0
      %1406 = vadd.xlane.f32.xlu0 %v1405
      %v1407 = vpop.xlane.xlu0 %1406
      %v1408 = vrcp.pop %v1398
      %v1409 = vmul.f32 %v1398, %v1408
      %v1410 = vsub.f32 1.0, %v1409
      %v1411 = vmul.f32 %v1408, %v1410
      %v1412 = vadd.f32 %v1408, %v1411
      %vm1413 = vweird.f32 %v1398
      %vm1414 = vweird.f32 %v1408
      %vm1415 = vmor %vm1413, %vm1414
      %v1416 = vsel %vm1415, %v1408, %v1412
      %v1417 = vand.u32 2147483647, %v1398
      %vm1418 = vcmp.eq.f32.partialorder %v1417, 8.507059e+37
      %v1419 = vand.u32 %v1398, 2147483648
      %v1420 = vor.u32 1.1754944e-38, %v1419
      %v1421 = vsel %vm1418, %v1420, %v1416
      %v1422 = vrcp.pop %v1401
      %v1423 = vmul.f32 %v1401, %v1422
      %v1424 = vsub.f32 1.0, %v1423
      %v1425 = vmul.f32 %v1422, %v1424
      %v1426 = vadd.f32 %v1422, %v1425
      %vm1427 = vweird.f32 %v1401
      %vm1428 = vweird.f32 %v1422
      %vm1429 = vmor %vm1427, %vm1428
      %v1430 = vsel %vm1429, %v1422, %v1426
      %v1431 = vand.u32 2147483647, %v1401
      %vm1432 = vcmp.eq.f32.partialorder %v1431, 8.507059e+37
      %v1433 = vand.u32 %v1401, 2147483648
      %v1434 = vor.u32 1.1754944e-38, %v1433
      %v1435 = vsel %vm1432, %v1434, %v1430
      %v1436 = vrcp.pop %v1404
      %v1437 = vmul.f32 %v1404, %v1436
      %v1438 = vsub.f32 1.0, %v1437
      %v1439 = vmul.f32 %v1436, %v1438
      %v1440 = vadd.f32 %v1436, %v1439
      %vm1441 = vweird.f32 %v1404
      %vm1442 = vweird.f32 %v1436
      %vm1443 = vmor %vm1441, %vm1442
      %v1444 = vsel %vm1443, %v1436, %v1440
      %v1445 = vand.u32 2147483647, %v1404
      %vm1446 = vcmp.eq.f32.partialorder %v1445, 8.507059e+37
      %v1447 = vand.u32 %v1404, 2147483648
      %v1448 = vor.u32 1.1754944e-38, %v1447
      %v1449 = vsel %vm1446, %v1448, %v1444
      %v1450 = vrcp.pop %v1407
      %v1451 = vmul.f32 %v1407, %v1450
      %v1452 = vsub.f32 1.0, %v1451
      %v1453 = vmul.f32 %v1450, %v1452
      %v1454 = vadd.f32 %v1450, %v1453
      %vm1455 = vweird.f32 %v1407
      %vm1456 = vweird.f32 %v1450
      %vm1457 = vmor %vm1455, %vm1456
      %v1458 = vsel %vm1457, %v1450, %v1454
      %v1459 = vand.u32 2147483647, %v1407
      %vm1460 = vcmp.eq.f32.partialorder %v1459, 8.507059e+37
      %v1461 = vand.u32 %v1407, 2147483648
      %v1462 = vor.u32 1.1754944e-38, %v1461
      %v1463 = vsel %vm1460, %v1462, %v1458
      %v1464 = vmul.f32 %v1389, %v1421
      %v1465 = vmul.f32 %v1391, %v1435
      %v1466 = vmul.f32 %v1393, %v1449
      %v1467 = vmul.f32 %v1395, %v1463
      %v1469 = vsel %vm1263, %v1464, 0
      %1471 = vmatpush.msra.mxu0 0.0
      %1472 = vmatpush.msra.mxu0 0.0
      %1473 = vmatpush.msra.mxu0 0.0
      %1474 = vmatpush.msra.mxu0 0.0
      %1475 = vmatpush.msra.mxu0 0.0
      %1476 = vmatpush.msra.mxu0 0.0
      %1477 = vmatpush.msra.mxu0 0.0
      %1478 = vmatpush.msra.mxu0 0.0
      %1479 = vmatpush.msra.mxu0 0.0
      %1480 = vmatpush.msra.mxu0 0.0
      %1481 = vmatpush.msra.mxu0 0.0
      %1482 = vmatpush.msra.mxu0 0.0
      %1483 = vmatpush.msra.mxu0 0.0
      %1484 = vmatpush.msra.mxu0 0.0
      %1485 = vmatpush.msra.mxu0 0.0
      %1486 = vmatpush.msra.mxu0 %v1201
      %1487 = vmatmul.f32.gmra.mxu0 %v1469
      %v1488 = vpop.f32.mrf.mxu0
      %v1489 = vadd.f32 0.0, %v1488
      %1490 = vdwg.mxu0
      %v1492 = vsel %vm1263, %v1465, 0
      %1494 = vmatpush.msra.mxu0 0.0
      %1495 = vmatpush.msra.mxu0 0.0
      %1496 = vmatpush.msra.mxu0 0.0
      %1497 = vmatpush.msra.mxu0 0.0
      %1498 = vmatpush.msra.mxu0 0.0
      %1499 = vmatpush.msra.mxu0 0.0
      %1500 = vmatpush.msra.mxu0 0.0
      %1501 = vmatpush.msra.mxu0 0.0
      %1502 = vmatpush.msra.mxu0 0.0
      %1503 = vmatpush.msra.mxu0 0.0
      %1504 = vmatpush.msra.mxu0 0.0
      %1505 = vmatpush.msra.mxu0 0.0
      %1506 = vmatpush.msra.mxu0 0.0
      %1507 = vmatpush.msra.mxu0 0.0
      %1508 = vmatpush.msra.mxu0 0.0
      %1509 = vmatpush.msra.mxu0 %v1221
      %1510 = vmatmul.f32.gmra.mxu0 %v1492
      %v1511 = vpop.f32.mrf.mxu0
      %v1512 = vadd.f32 0.0, %v1511
      %1513 = vdwg.mxu0
      %v1515 = vsel %vm1263, %v1466, 0
      %1517 = vmatpush.msra.mxu0 0.0
      %1518 = vmatpush.msra.mxu0 0.0
      %1519 = vmatpush.msra.mxu0 0.0
      %1520 = vmatpush.msra.mxu0 0.0
      %1521 = vmatpush.msra.mxu0 0.0
      %1522 = vmatpush.msra.mxu0 0.0
      %1523 = vmatpush.msra.mxu0 0.0
      %1524 = vmatpush.msra.mxu0 0.0
      %1525 = vmatpush.msra.mxu0 0.0
      %1526 = vmatpush.msra.mxu0 0.0
      %1527 = vmatpush.msra.mxu0 0.0
      %1528 = vmatpush.msra.mxu0 0.0
      %1529 = vmatpush.msra.mxu0 0.0
      %1530 = vmatpush.msra.mxu0 0.0
      %1531 = vmatpush.msra.mxu0 0.0
      %1532 = vmatpush.msra.mxu0 %v1241
      %1533 = vmatmul.f32.gmra.mxu0 %v1515
      %v1534 = vpop.f32.mrf.mxu0
      %v1535 = vadd.f32 0.0, %v1534
      %1536 = vdwg.mxu0
      %v1538 = vsel %vm1263, %v1467, 0
      %1540 = vmatpush.msra.mxu0 0.0
      %1541 = vmatpush.msra.mxu0 0.0
      %1542 = vmatpush.msra.mxu0 0.0
      %1543 = vmatpush.msra.mxu0 0.0
      %1544 = vmatpush.msra.mxu0 0.0
      %1545 = vmatpush.msra.mxu0 0.0
      %1546 = vmatpush.msra.mxu0 0.0
      %1547 = vmatpush.msra.mxu0 0.0
      %1548 = vmatpush.msra.mxu0 0.0
      %1549 = vmatpush.msra.mxu0 0.0
      %1550 = vmatpush.msra.mxu0 0.0
      %1551 = vmatpush.msra.mxu0 0.0
      %1552 = vmatpush.msra.mxu0 0.0
      %1553 = vmatpush.msra.mxu0 0.0
      %1554 = vmatpush.msra.mxu0 0.0
      %1555 = vmatpush.msra.mxu0 %v1261
      %1556 = vmatmul.f32.gmra.mxu0 %v1538
      %v1557 = vpop.f32.mrf.mxu0
      %v1558 = vadd.f32 0.0, %v1557
      %1559 = vdwg.mxu0
      %v1560 = vld [vmem:[%s7] sm:$0xff]
      %v1561 = vld [vmem:[%s7 + $0x8] sm:$0xff]
      %v1562 = vld [vmem:[%s7 + $0x10] sm:$0xff]
      %v1563 = vld [vmem:[%s7 + $0x18] sm:$0xff]
      %v1565 = vsel %vm1263, %v1489, 0
      %1567 = vmatpush.msra.mxu0 0.0
      %1568 = vmatpush.msra.mxu0 0.0
      %1569 = vmatpush.msra.mxu0 0.0
      %1570 = vmatpush.msra.mxu0 0.0
      %1571 = vmatpush.msra.mxu0 0.0
      %1572 = vmatpush.msra.mxu0 0.0
      %1573 = vmatpush.msra.mxu0 0.0
      %1574 = vmatpush.msra.mxu0 0.0
      %1575 = vmatpush.msra.mxu0 0.0
      %1576 = vmatpush.msra.mxu0 0.0
      %1577 = vmatpush.msra.mxu0 0.0
      %1578 = vmatpush.msra.mxu0 0.0
      %1579 = vmatpush.msra.mxu0 0.0
      %1580 = vmatpush.msra.mxu0 0.0
      %1581 = vmatpush.msra.mxu0 0.0
      %1582 = vmatpush.msra.mxu0 %v1560
      %1583 = vmatmul.f32.gmra.mxu0 %v1565
      %v1584 = vpop.f32.mrf.mxu0
      %v1585 = vadd.f32 0.0, %v1584
      %1586 = vdwg.mxu0
      %v1588 = vsel %vm1263, %v1512, 0
      %1590 = vmatpush.msra.mxu0 0.0
      %1591 = vmatpush.msra.mxu0 0.0
      %1592 = vmatpush.msra.mxu0 0.0
      %1593 = vmatpush.msra.mxu0 0.0
      %1594 = vmatpush.msra.mxu0 0.0
      %1595 = vmatpush.msra.mxu0 0.0
      %1596 = vmatpush.msra.mxu0 0.0
      %1597 = vmatpush.msra.mxu0 0.0
      %1598 = vmatpush.msra.mxu0 0.0
      %1599 = vmatpush.msra.mxu0 0.0
      %1600 = vmatpush.msra.mxu0 0.0
      %1601 = vmatpush.msra.mxu0 0.0
      %1602 = vmatpush.msra.mxu0 0.0
      %1603 = vmatpush.msra.mxu0 0.0
      %1604 = vmatpush.msra.mxu0 0.0
      %1605 = vmatpush.msra.mxu0 %v1561
      %1606 = vmatmul.f32.gmra.mxu0 %v1588
      %v1607 = vpop.f32.mrf.mxu0
      %v1608 = vadd.f32 0.0, %v1607
      %1609 = vdwg.mxu0
      %v1611 = vsel %vm1263, %v1535, 0
      %1613 = vmatpush.msra.mxu0 0.0
      %1614 = vmatpush.msra.mxu0 0.0
      %1615 = vmatpush.msra.mxu0 0.0
      %1616 = vmatpush.msra.mxu0 0.0
      %1617 = vmatpush.msra.mxu0 0.0
      %1618 = vmatpush.msra.mxu0 0.0
      %1619 = vmatpush.msra.mxu0 0.0
      %1620 = vmatpush.msra.mxu0 0.0
      %1621 = vmatpush.msra.mxu0 0.0
      %1622 = vmatpush.msra.mxu0 0.0
      %1623 = vmatpush.msra.mxu0 0.0
      %1624 = vmatpush.msra.mxu0 0.0
      %1625 = vmatpush.msra.mxu0 0.0
      %1626 = vmatpush.msra.mxu0 0.0
      %1627 = vmatpush.msra.mxu0 0.0
      %1628 = vmatpush.msra.mxu0 %v1562
      %1629 = vmatmul.f32.gmra.mxu0 %v1611
      %v1630 = vpop.f32.mrf.mxu0
      %v1631 = vadd.f32 0.0, %v1630
      %1632 = vdwg.mxu0
      %v1634 = vsel %vm1263, %v1558, 0
      %1636 = vmatpush.msra.mxu0 0.0
      %1637 = vmatpush.msra.mxu0 0.0
      %1638 = vmatpush.msra.mxu0 0.0
      %1639 = vmatpush.msra.mxu0 0.0
      %1640 = vmatpush.msra.mxu0 0.0
      %1641 = vmatpush.msra.mxu0 0.0
      %1642 = vmatpush.msra.mxu0 0.0
      %1643 = vmatpush.msra.mxu0 0.0
      %1644 = vmatpush.msra.mxu0 0.0
      %1645 = vmatpush.msra.mxu0 0.0
      %1646 = vmatpush.msra.mxu0 0.0
      %1647 = vmatpush.msra.mxu0 0.0
      %1648 = vmatpush.msra.mxu0 0.0
      %1649 = vmatpush.msra.mxu0 0.0
      %1650 = vmatpush.msra.mxu0 0.0
      %1651 = vmatpush.msra.mxu0 %v1563
      %1652 = vmatmul.f32.gmra.mxu0 %v1634
      %v1653 = vpop.f32.mrf.mxu0
      %v1654 = vadd.f32 0.0, %v1653
      %1655 = vdwg.mxu0
      %v1656 = vsel %vm1019, %v1585, 0.0
      %v1657 = vsel %vm1019, %v1608, 0.0
      %v1658 = vadd.f32 %v1656, %v1657
      %v1659 = vsel %vm1019, %v1631, 0.0
      %v1660 = vadd.f32 %v1658, %v1659
      %v1661 = vsel %vm1019, %v1654, 0.0
      %v1662 = vadd.f32 %v1660, %v1661
      %v1663 = vld [vmem:[%s8] sm:$0x1]
      %v1665 = vperm.slane %v1663, 0
      %v1667 = vadd.f32 %v1662, %v1665
      %v1668 = vadd.f32 %v922, %v1667
      %v1669 = vsel %vm1019, %v1668, 0.0
      %1670 = vadd.xlane.f32.xlu0 %v1669
      %v1671 = vpop.xlane.xlu0 %1670
      %v1672 = vrcp.pop 32.0
      %v1673 = vmul.f32 32.0, %v1672
      %v1674 = vsub.f32 1.0, %v1673
      %v1675 = vmul.f32 %v1672, %v1674
      %v1676 = vadd.f32 %v1672, %v1675
      %vm1677 = vweird.f32 %v1672
      %v1678 = vsel %vm1677, %v1672, %v1676
      %v1679 = vmul.f32 %v1671, %v1678
      %v1680 = vsub.f32 %v1668, %v1679
      %v1681 = vmul.f32 %v1680, %v1680
      %v1682 = vsel %vm1019, %v1681, 0.0
      %1683 = vadd.xlane.f32.xlu0 %v1682
      %v1684 = vpop.xlane.xlu0 %1683
      %v1685 = vmul.f32 %v1684, %v1678
      %v1686 = vadd.f32 %v1685, 1e-05
      %v1687 = vrsqrt.pop %v1686
      %v1688 = vmul.f32 %v1687, %v1686
      %v1689 = vmul.f32 %v1688, %v1687
      %v1690 = vmul.f32 0.5, %v1689
      %v1691 = vsub.f32 1.5, %v1690
      %v1692 = vmul.f32 %v1687, %v1691
      %vm1693 = vweird.f32 %v1686
      %vm1694 = vweird.f32 %v1687
      %vm1695 = vmor %vm1693, %vm1694
      %v1696 = vsel %vm1695, %v1687, %v1692
      %v1697 = vmul.f32 %v1680, %v1696
      %v1698 = vld [vmem:[%s9] sm:$0x1]
      %v1700 = vperm.slane %v1698, 0
      %v1702 = vmul.f32 %v1697, %v1700
      %v1703 = vld [vmem:[%s10] sm:$0x1]
      %v1705 = vperm.slane %v1703, 0
      %v1707 = vadd.f32 %v1702, %v1705
      %v1708 = vld [vmem:[%s13] sm:$0xff]
      %v1709 = vld [vmem:[%s13 + $0x8] sm:$0xff]
      %v1710 = vld [vmem:[%s13 + $0x10] sm:$0xff]
      %v1711 = vld [vmem:[%s13 + $0x18] sm:$0xff]
      %v1712 = vld [vmem:[%s14] sm:$0x1]
      %v1714 = vperm.slane %v1712, 0
      %v1717 = vsel %vm1019, %v1707, 0
      %1719 = vmatpush.msra.mxu0 0.0
      %1720 = vmatpush.msra.mxu0 0.0
      %1721 = vmatpush.msra.mxu0 0.0
      %1722 = vmatpush.msra.mxu0 0.0
      %1723 = vmatpush.msra.mxu0 0.0
      %1724 = vmatpush.msra.mxu0 0.0
      %1725 = vmatpush.msra.mxu0 0.0
      %1726 = vmatpush.msra.mxu0 0.0
      %1727 = vmatpush.msra.mxu0 0.0
      %1728 = vmatpush.msra.mxu0 0.0
      %1729 = vmatpush.msra.mxu0 0.0
      %1730 = vmatpush.msra.mxu0 0.0
      %1731 = vmatpush.msra.mxu0 %v1711
      %1732 = vmatpush.msra.mxu0 %v1710
      %1733 = vmatpush.msra.mxu0 %v1709
      %1734 = vmatpush.msra.mxu0 %v1708
      %1735 = vmatmul.f32.gmra.mxu0 %v1717
      %v1736 = vpop.f32.mrf.mxu0
      %v1737 = vadd.f32 %v1714, %v1736
      %1738 = vdwg.mxu0
      %v1739 = vmax.f32 %v1737, 0.0
      %v1740 = vld [vmem:[%s15] sm:$0xff]
      %v1741 = vld [vmem:[%s15 + $0x8] sm:$0xff]
      %v1742 = vld [vmem:[%s15 + $0x10] sm:$0xff]
      %v1743 = vld [vmem:[%s15 + $0x18] sm:$0xff]
      %v1744 = vld [vmem:[%s15 + $0x20] sm:$0xff]
      %v1745 = vld [vmem:[%s15 + $0x28] sm:$0xff]
      %v1746 = vld [vmem:[%s15 + $0x30] sm:$0xff]
      %v1747 = vld [vmem:[%s15 + $0x38] sm:$0xff]
      %v1748 = vld [vmem:[%s16] sm:$0x1]
      %v1750 = vperm.slane %v1748, 0
      %vm1752 = vcmask 523264
      %v1754 = vsel %vm1752, %v1739, 0
      %1756 = vmatpush.msra.mxu0 0.0
      %1757 = vmatpush.msra.mxu0 0.0
      %1758 = vmatpush.msra.mxu0 0.0
      %1759 = vmatpush.msra.mxu0 0.0
      %1760 = vmatpush.msra.mxu0 0.0
      %1761 = vmatpush.msra.mxu0 0.0
      %1762 = vmatpush.msra.mxu0 0.0
      %1763 = vmatpush.msra.mxu0 0.0
      %1764 = vmatpush.msra.mxu0 %v1747
      %1765 = vmatpush.msra.mxu0 %v1746
      %1766 = vmatpush.msra.mxu0 %v1745
      %1767 = vmatpush.msra.mxu0 %v1744
      %1768 = vmatpush.msra.mxu0 %v1743
      %1769 = vmatpush.msra.mxu0 %v1742
      %1770 = vmatpush.msra.mxu0 %v1741
      %1771 = vmatpush.msra.mxu0 %v1740
      %1772 = vmatmul.f32.gmra.mxu0 %v1754
      %v1773 = vpop.f32.mrf.mxu0
      %v1774 = vadd.f32 %v1750, %v1773
      %1775 = vdwg.mxu0
      %v1776 = vadd.f32 %v1707, %v1774
      %v1777 = vsel %vm1019, %v1776, 0.0
      %1778 = vadd.xlane.f32.xlu0 %v1777
      %v1779 = vpop.xlane.xlu0 %1778
      %v1780 = vmul.f32 %v1779, %v1678
      %v1781 = vsub.f32 %v1776, %v1780
      %v1782 = vmul.f32 %v1781, %v1781
      %v1783 = vsel %vm1019, %v1782, 0.0
      %1784 = vadd.xlane.f32.xlu0 %v1783
      %v1785 = vpop.xlane.xlu0 %1784
      %v1786 = vmul.f32 %v1785, %v1678
      %v1787 = vadd.f32 %v1786, 1e-05
      %v1788 = vrsqrt.pop %v1787
      %v1789 = vmul.f32 %v1788, %v1787
      %v1790 = vmul.f32 %v1789, %v1788
      %v1791 = vmul.f32 0.5, %v1790
      %v1792 = vsub.f32 1.5, %v1791
      %v1793 = vmul.f32 %v1788, %v1792
      %vm1794 = vweird.f32 %v1787
      %vm1795 = vweird.f32 %v1788
      %vm1796 = vmor %vm1794, %vm1795
      %v1797 = vsel %vm1796, %v1788, %v1793
      %v1798 = vmul.f32 %v1781, %v1797
      %v1799 = vld [vmem:[%s11] sm:$0x1]
      %v1801 = vperm.slane %v1799, 0
      %v1803 = vmul.f32 %v1798, %v1801
      %v1804 = vld [vmem:[%s12] sm:$0x1]
      %v1806 = vperm.slane %v1804, 0
      %v1808 = vadd.f32 %v1803, %v1806
      %s1809 = scalar_lea.vmem %s5, 384
      %v1810 = vld [vmem:[%s1809] sm:$0xff]
      %v1811 = vld [vmem:[%s1809 + $0x8] sm:$0xff]
      %v1812 = vld [vmem:[%s1809 + $0x10] sm:$0xff]
      %v1813 = vld [vmem:[%s1809 + $0x18] sm:$0xff]
      %v1814 = vld [vmem:[%s1809 + $0x20] sm:$0xff]
      %v1815 = vld [vmem:[%s1809 + $0x28] sm:$0xff]
      %v1816 = vld [vmem:[%s1809 + $0x30] sm:$0xff]
      %v1817 = vld [vmem:[%s1809 + $0x38] sm:$0xff]
      %v1818 = vld [vmem:[%s1809 + $0x40] sm:$0xff]
      %v1819 = vld [vmem:[%s1809 + $0x48] sm:$0xff]
      %v1820 = vld [vmem:[%s1809 + $0x50] sm:$0xff]
      %v1821 = vld [vmem:[%s1809 + $0x58] sm:$0xff]
      %v1822 = vld [vmem:[%s1809 + $0x60] sm:$0xff]
      %v1823 = vld [vmem:[%s1809 + $0x68] sm:$0xff]
      %v1824 = vld [vmem:[%s1809 + $0x70] sm:$0xff]
      %v1825 = vld [vmem:[%s1809 + $0x78] sm:$0xff]
      %v1826 = vld [vmem:[%s1809 + $0x80] sm:$0xff]
      %v1827 = vld [vmem:[%s1809 + $0x88] sm:$0xff]
      %v1828 = vld [vmem:[%s1809 + $0x90] sm:$0xff]
      %v1829 = vld [vmem:[%s1809 + $0x98] sm:$0xff]
      %v1830 = vld [vmem:[%s1809 + $0xa0] sm:$0xff]
      %v1831 = vld [vmem:[%s1809 + $0xa8] sm:$0xff]
      %v1832 = vld [vmem:[%s1809 + $0xb0] sm:$0xff]
      %v1833 = vld [vmem:[%s1809 + $0xb8] sm:$0xff]
      %v1834 = vld [vmem:[%s1809 + $0xc0] sm:$0xff]
      %v1835 = vld [vmem:[%s1809 + $0xc8] sm:$0xff]
      %v1836 = vld [vmem:[%s1809 + $0xd0] sm:$0xff]
      %v1837 = vld [vmem:[%s1809 + $0xd8] sm:$0xff]
      %v1838 = vld [vmem:[%s1809 + $0xe0] sm:$0xff]
      %v1839 = vld [vmem:[%s1809 + $0xe8] sm:$0xff]
      %v1840 = vld [vmem:[%s1809 + $0xf0] sm:$0xff]
      %v1841 = vld [vmem:[%s1809 + $0xf8] sm:$0xff]
      %v1842 = vld [vmem:[%s1809 + $0x100] sm:$0xff]
      %v1843 = vld [vmem:[%s1809 + $0x108] sm:$0xff]
      %v1844 = vld [vmem:[%s1809 + $0x110] sm:$0xff]
      %v1845 = vld [vmem:[%s1809 + $0x118] sm:$0xff]
      %v1846 = vld [vmem:[%s1809 + $0x120] sm:$0xff]
      %v1847 = vld [vmem:[%s1809 + $0x128] sm:$0xff]
      %v1848 = vld [vmem:[%s1809 + $0x130] sm:$0xff]
      %v1849 = vld [vmem:[%s1809 + $0x138] sm:$0xff]
      %v1850 = vld [vmem:[%s1809 + $0x140] sm:$0xff]
      %v1851 = vld [vmem:[%s1809 + $0x148] sm:$0xff]
      %v1852 = vld [vmem:[%s1809 + $0x150] sm:$0xff]
      %v1853 = vld [vmem:[%s1809 + $0x158] sm:$0xff]
      %v1854 = vld [vmem:[%s1809 + $0x160] sm:$0xff]
      %v1855 = vld [vmem:[%s1809 + $0x168] sm:$0xff]
      %v1856 = vld [vmem:[%s1809 + $0x170] sm:$0xff]
      %v1857 = vld [vmem:[%s1809 + $0x178] sm:$0xff]
      %s1858 = scalar_lea.vmem %s6, 12
      %v1859 = vld [vmem:[%s1858] sm:$0x1]
      %v1860 = vld [vmem:[%s1858 + $0x1] sm:$0x1]
      %v1861 = vld [vmem:[%s1858 + $0x2] sm:$0x1]
      %v1862 = vld [vmem:[%s1858 + $0x3] sm:$0x1]
      %v1863 = vld [vmem:[%s1858 + $0x4] sm:$0x1]
      %v1864 = vld [vmem:[%s1858 + $0x5] sm:$0x1]
      %v1865 = vld [vmem:[%s1858 + $0x6] sm:$0x1]
      %v1866 = vld [vmem:[%s1858 + $0x7] sm:$0x1]
      %v1867 = vld [vmem:[%s1858 + $0x8] sm:$0x1]
      %v1868 = vld [vmem:[%s1858 + $0x9] sm:$0x1]
      %v1869 = vld [vmem:[%s1858 + $0xa] sm:$0x1]
      %v1870 = vld [vmem:[%s1858 + $0xb] sm:$0x1]
      %v1883 = vperm.slane %v1859, 0
      %v1884 = vperm.slane %v1860, 0
      %v1885 = vperm.slane %v1861, 0
      %v1886 = vperm.slane %v1862, 0
      %v1887 = vperm.slane %v1863, 0
      %v1888 = vperm.slane %v1864, 0
      %v1889 = vperm.slane %v1865, 0
      %v1890 = vperm.slane %v1866, 0
      %v1891 = vperm.slane %v1867, 0
      %v1892 = vperm.slane %v1868, 0
      %v1893 = vperm.slane %v1869, 0
      %v1894 = vperm.slane %v1870, 0
      %v1908 = vsel %vm1019, %v1808, 0
      %1910 = vmatpush.msra.mxu0 0.0
      %1911 = vmatpush.msra.mxu0 0.0
      %1912 = vmatpush.msra.mxu0 0.0
      %1913 = vmatpush.msra.mxu0 0.0
      %1914 = vmatpush.msra.mxu0 0.0
      %1915 = vmatpush.msra.mxu0 0.0
      %1916 = vmatpush.msra.mxu0 0.0
      %1917 = vmatpush.msra.mxu0 0.0
      %1918 = vmatpush.msra.mxu0 0.0
      %1919 = vmatpush.msra.mxu0 0.0
      %1920 = vmatpush.msra.mxu0 0.0
      %1921 = vmatpush.msra.mxu0 0.0
      %1922 = vmatpush.msra.mxu0 %v1813
      %1923 = vmatpush.msra.mxu0 %v1812
      %1924 = vmatpush.msra.mxu0 %v1811
      %1925 = vmatpush.msra.mxu0 %v1810
      %1926 = vmatmul.f32.gmra.mxu0 %v1908
      %v1927 = vpop.f32.mrf.mxu0
      %v1928 = vadd.f32 %v1883, %v1927
      %1929 = vdwg.mxu0
      %1930 = vmatpush.msra.mxu0 0.0
      %1931 = vmatpush.msra.mxu0 0.0
      %1932 = vmatpush.msra.mxu0 0.0
      %1933 = vmatpush.msra.mxu0 0.0
      %1934 = vmatpush.msra.mxu0 0.0
      %1935 = vmatpush.msra.mxu0 0.0
      %1936 = vmatpush.msra.mxu0 0.0
      %1937 = vmatpush.msra.mxu0 0.0
      %1938 = vmatpush.msra.mxu0 0.0
      %1939 = vmatpush.msra.mxu0 0.0
      %1940 = vmatpush.msra.mxu0 0.0
      %1941 = vmatpush.msra.mxu0 0.0
      %1942 = vmatpush.msra.mxu0 %v1817
      %1943 = vmatpush.msra.mxu0 %v1816
      %1944 = vmatpush.msra.mxu0 %v1815
      %1945 = vmatpush.msra.mxu0 %v1814
      %1946 = vmatmul.f32.gmra.mxu0 %v1908
      %v1947 = vpop.f32.mrf.mxu0
      %v1948 = vadd.f32 %v1884, %v1947
      %1949 = vdwg.mxu0
      %1950 = vmatpush.msra.mxu0 0.0
      %1951 = vmatpush.msra.mxu0 0.0
      %1952 = vmatpush.msra.mxu0 0.0
      %1953 = vmatpush.msra.mxu0 0.0
      %1954 = vmatpush.msra.mxu0 0.0
      %1955 = vmatpush.msra.mxu0 0.0
      %1956 = vmatpush.msra.mxu0 0.0
      %1957 = vmatpush.msra.mxu0 0.0
      %1958 = vmatpush.msra.mxu0 0.0
      %1959 = vmatpush.msra.mxu0 0.0
      %1960 = vmatpush.msra.mxu0 0.0
      %1961 = vmatpush.msra.mxu0 0.0
      %1962 = vmatpush.msra.mxu0 %v1821
      %1963 = vmatpush.msra.mxu0 %v1820
      %1964 = vmatpush.msra.mxu0 %v1819
      %1965 = vmatpush.msra.mxu0 %v1818
      %1966 = vmatmul.f32.gmra.mxu0 %v1908
      %v1967 = vpop.f32.mrf.mxu0
      %v1968 = vadd.f32 %v1885, %v1967
      %1969 = vdwg.mxu0
      %1970 = vmatpush.msra.mxu0 0.0
      %1971 = vmatpush.msra.mxu0 0.0
      %1972 = vmatpush.msra.mxu0 0.0
      %1973 = vmatpush.msra.mxu0 0.0
      %1974 = vmatpush.msra.mxu0 0.0
      %1975 = vmatpush.msra.mxu0 0.0
      %1976 = vmatpush.msra.mxu0 0.0
      %1977 = vmatpush.msra.mxu0 0.0
      %1978 = vmatpush.msra.mxu0 0.0
      %1979 = vmatpush.msra.mxu0 0.0
      %1980 = vmatpush.msra.mxu0 0.0
      %1981 = vmatpush.msra.mxu0 0.0
      %1982 = vmatpush.msra.mxu0 %v1825
      %1983 = vmatpush.msra.mxu0 %v1824
      %1984 = vmatpush.msra.mxu0 %v1823
      %1985 = vmatpush.msra.mxu0 %v1822
      %1986 = vmatmul.f32.gmra.mxu0 %v1908
      %v1987 = vpop.f32.mrf.mxu0
      %v1988 = vadd.f32 %v1886, %v1987
      %1989 = vdwg.mxu0
      %1990 = vmatpush.msra.mxu0 0.0
      %1991 = vmatpush.msra.mxu0 0.0
      %1992 = vmatpush.msra.mxu0 0.0
      %1993 = vmatpush.msra.mxu0 0.0
      %1994 = vmatpush.msra.mxu0 0.0
      %1995 = vmatpush.msra.mxu0 0.0
      %1996 = vmatpush.msra.mxu0 0.0
      %1997 = vmatpush.msra.mxu0 0.0
      %1998 = vmatpush.msra.mxu0 0.0
      %1999 = vmatpush.msra.mxu0 0.0
      %2000 = vmatpush.msra.mxu0 0.0
      %2001 = vmatpush.msra.mxu0 0.0
      %2002 = vmatpush.msra.mxu0 %v1829
      %2003 = vmatpush.msra.mxu0 %v1828
      %2004 = vmatpush.msra.mxu0 %v1827
      %2005 = vmatpush.msra.mxu0 %v1826
      %2006 = vmatmul.f32.gmra.mxu0 %v1908
      %v2007 = vpop.f32.mrf.mxu0
      %v2008 = vadd.f32 %v1887, %v2007
      %2009 = vdwg.mxu0
      %2010 = vmatpush.msra.mxu0 0.0
      %2011 = vmatpush.msra.mxu0 0.0
      %2012 = vmatpush.msra.mxu0 0.0
      %2013 = vmatpush.msra.mxu0 0.0
      %2014 = vmatpush.msra.mxu0 0.0
      %2015 = vmatpush.msra.mxu0 0.0
      %2016 = vmatpush.msra.mxu0 0.0
      %2017 = vmatpush.msra.mxu0 0.0
      %2018 = vmatpush.msra.mxu0 0.0
      %2019 = vmatpush.msra.mxu0 0.0
      %2020 = vmatpush.msra.mxu0 0.0
      %2021 = vmatpush.msra.mxu0 0.0
      %2022 = vmatpush.msra.mxu0 %v1833
      %2023 = vmatpush.msra.mxu0 %v1832
      %2024 = vmatpush.msra.mxu0 %v1831
      %2025 = vmatpush.msra.mxu0 %v1830
      %2026 = vmatmul.f32.gmra.mxu0 %v1908
      %v2027 = vpop.f32.mrf.mxu0
      %v2028 = vadd.f32 %v1888, %v2027
      %2029 = vdwg.mxu0
      %2030 = vmatpush.msra.mxu0 0.0
      %2031 = vmatpush.msra.mxu0 0.0
      %2032 = vmatpush.msra.mxu0 0.0
      %2033 = vmatpush.msra.mxu0 0.0
      %2034 = vmatpush.msra.mxu0 0.0
      %2035 = vmatpush.msra.mxu0 0.0
      %2036 = vmatpush.msra.mxu0 0.0
      %2037 = vmatpush.msra.mxu0 0.0
      %2038 = vmatpush.msra.mxu0 0.0
      %2039 = vmatpush.msra.mxu0 0.0
      %2040 = vmatpush.msra.mxu0 0.0
      %2041 = vmatpush.msra.mxu0 0.0
      %2042 = vmatpush.msra.mxu0 %v1837
      %2043 = vmatpush.msra.mxu0 %v1836
      %2044 = vmatpush.msra.mxu0 %v1835
      %2045 = vmatpush.msra.mxu0 %v1834
      %2046 = vmatmul.f32.gmra.mxu0 %v1908
      %v2047 = vpop.f32.mrf.mxu0
      %v2048 = vadd.f32 %v1889, %v2047
      %2049 = vdwg.mxu0
      %2050 = vmatpush.msra.mxu0 0.0
      %2051 = vmatpush.msra.mxu0 0.0
      %2052 = vmatpush.msra.mxu0 0.0
      %2053 = vmatpush.msra.mxu0 0.0
      %2054 = vmatpush.msra.mxu0 0.0
      %2055 = vmatpush.msra.mxu0 0.0
      %2056 = vmatpush.msra.mxu0 0.0
      %2057 = vmatpush.msra.mxu0 0.0
      %2058 = vmatpush.msra.mxu0 0.0
      %2059 = vmatpush.msra.mxu0 0.0
      %2060 = vmatpush.msra.mxu0 0.0
      %2061 = vmatpush.msra.mxu0 0.0
      %2062 = vmatpush.msra.mxu0 %v1841
      %2063 = vmatpush.msra.mxu0 %v1840
      %2064 = vmatpush.msra.mxu0 %v1839
      %2065 = vmatpush.msra.mxu0 %v1838
      %2066 = vmatmul.f32.gmra.mxu0 %v1908
      %v2067 = vpop.f32.mrf.mxu0
      %v2068 = vadd.f32 %v1890, %v2067
      %2069 = vdwg.mxu0
      %2070 = vmatpush.msra.mxu0 0.0
      %2071 = vmatpush.msra.mxu0 0.0
      %2072 = vmatpush.msra.mxu0 0.0
      %2073 = vmatpush.msra.mxu0 0.0
      %2074 = vmatpush.msra.mxu0 0.0
      %2075 = vmatpush.msra.mxu0 0.0
      %2076 = vmatpush.msra.mxu0 0.0
      %2077 = vmatpush.msra.mxu0 0.0
      %2078 = vmatpush.msra.mxu0 0.0
      %2079 = vmatpush.msra.mxu0 0.0
      %2080 = vmatpush.msra.mxu0 0.0
      %2081 = vmatpush.msra.mxu0 0.0
      %2082 = vmatpush.msra.mxu0 %v1845
      %2083 = vmatpush.msra.mxu0 %v1844
      %2084 = vmatpush.msra.mxu0 %v1843
      %2085 = vmatpush.msra.mxu0 %v1842
      %2086 = vmatmul.f32.gmra.mxu0 %v1908
      %v2087 = vpop.f32.mrf.mxu0
      %v2088 = vadd.f32 %v1891, %v2087
      %2089 = vdwg.mxu0
      %2090 = vmatpush.msra.mxu0 0.0
      %2091 = vmatpush.msra.mxu0 0.0
      %2092 = vmatpush.msra.mxu0 0.0
      %2093 = vmatpush.msra.mxu0 0.0
      %2094 = vmatpush.msra.mxu0 0.0
      %2095 = vmatpush.msra.mxu0 0.0
      %2096 = vmatpush.msra.mxu0 0.0
      %2097 = vmatpush.msra.mxu0 0.0
      %2098 = vmatpush.msra.mxu0 0.0
      %2099 = vmatpush.msra.mxu0 0.0
      %2100 = vmatpush.msra.mxu0 0.0
      %2101 = vmatpush.msra.mxu0 0.0
      %2102 = vmatpush.msra.mxu0 %v1849
      %2103 = vmatpush.msra.mxu0 %v1848
      %2104 = vmatpush.msra.mxu0 %v1847
      %2105 = vmatpush.msra.mxu0 %v1846
      %2106 = vmatmul.f32.gmra.mxu0 %v1908
      %v2107 = vpop.f32.mrf.mxu0
      %v2108 = vadd.f32 %v1892, %v2107
      %2109 = vdwg.mxu0
      %2110 = vmatpush.msra.mxu0 0.0
      %2111 = vmatpush.msra.mxu0 0.0
      %2112 = vmatpush.msra.mxu0 0.0
      %2113 = vmatpush.msra.mxu0 0.0
      %2114 = vmatpush.msra.mxu0 0.0
      %2115 = vmatpush.msra.mxu0 0.0
      %2116 = vmatpush.msra.mxu0 0.0
      %2117 = vmatpush.msra.mxu0 0.0
      %2118 = vmatpush.msra.mxu0 0.0
      %2119 = vmatpush.msra.mxu0 0.0
      %2120 = vmatpush.msra.mxu0 0.0
      %2121 = vmatpush.msra.mxu0 0.0
      %2122 = vmatpush.msra.mxu0 %v1853
      %2123 = vmatpush.msra.mxu0 %v1852
      %2124 = vmatpush.msra.mxu0 %v1851
      %2125 = vmatpush.msra.mxu0 %v1850
      %2126 = vmatmul.f32.gmra.mxu0 %v1908
      %v2127 = vpop.f32.mrf.mxu0
      %v2128 = vadd.f32 %v1893, %v2127
      %2129 = vdwg.mxu0
      %2130 = vmatpush.msra.mxu0 0.0
      %2131 = vmatpush.msra.mxu0 0.0
      %2132 = vmatpush.msra.mxu0 0.0
      %2133 = vmatpush.msra.mxu0 0.0
      %2134 = vmatpush.msra.mxu0 0.0
      %2135 = vmatpush.msra.mxu0 0.0
      %2136 = vmatpush.msra.mxu0 0.0
      %2137 = vmatpush.msra.mxu0 0.0
      %2138 = vmatpush.msra.mxu0 0.0
      %2139 = vmatpush.msra.mxu0 0.0
      %2140 = vmatpush.msra.mxu0 0.0
      %2141 = vmatpush.msra.mxu0 0.0
      %2142 = vmatpush.msra.mxu0 %v1857
      %2143 = vmatpush.msra.mxu0 %v1856
      %2144 = vmatpush.msra.mxu0 %v1855
      %2145 = vmatpush.msra.mxu0 %v1854
      %2146 = vmatmul.f32.gmra.mxu0 %v1908
      %v2147 = vpop.f32.mrf.mxu0
      %v2148 = vadd.f32 %v1894, %v2147
      %2149 = vdwg.mxu0
      %v2151 = vsel %vm1263, %v1928, 0
      %v2154 = vsel %vm1263, %v2008, 0
      %2156 = vmatpush.xpose.msra.mxu0 0.0
      %2157 = vmatpush.xpose.msra.mxu0 0.0
      %2158 = vmatpush.xpose.msra.mxu0 0.0
      %2159 = vmatpush.xpose.msra.mxu0 0.0
      %2160 = vmatpush.xpose.msra.mxu0 0.0
      %2161 = vmatpush.xpose.msra.mxu0 0.0
      %2162 = vmatpush.xpose.msra.mxu0 0.0
      %2163 = vmatpush.xpose.msra.mxu0 0.0
      %2164 = vmatpush.xpose.msra.mxu0 0.0
      %2165 = vmatpush.xpose.msra.mxu0 0.0
      %2166 = vmatpush.xpose.msra.mxu0 0.0
      %2167 = vmatpush.xpose.msra.mxu0 0.0
      %2168 = vmatpush.xpose.msra.mxu0 0.0
      %2169 = vmatpush.xpose.msra.mxu0 0.0
      %2170 = vmatpush.xpose.msra.mxu0 0.0
      %2171 = vmatpush.xpose.msra.mxu0 %v2154
      %2172 = vmatmul.f32.gmra.mxu0 %v2151
      %v2173 = vpop.f32.mrf.mxu0
      %v2174 = vadd.f32 0.0, %v2173
      %2175 = vdwg.mxu0
      %v2177 = vsel %vm1263, %v1948, 0
      %v2180 = vsel %vm1263, %v2028, 0
      %2182 = vmatpush.xpose.msra.mxu0 0.0
      %2183 = vmatpush.xpose.msra.mxu0 0.0
      %2184 = vmatpush.xpose.msra.mxu0 0.0
      %2185 = vmatpush.xpose.msra.mxu0 0.0
      %2186 = vmatpush.xpose.msra.mxu0 0.0
      %2187 = vmatpush.xpose.msra.mxu0 0.0
      %2188 = vmatpush.xpose.msra.mxu0 0.0
      %2189 = vmatpush.xpose.msra.mxu0 0.0
      %2190 = vmatpush.xpose.msra.mxu0 0.0
      %2191 = vmatpush.xpose.msra.mxu0 0.0
      %2192 = vmatpush.xpose.msra.mxu0 0.0
      %2193 = vmatpush.xpose.msra.mxu0 0.0
      %2194 = vmatpush.xpose.msra.mxu0 0.0
      %2195 = vmatpush.xpose.msra.mxu0 0.0
      %2196 = vmatpush.xpose.msra.mxu0 0.0
      %2197 = vmatpush.xpose.msra.mxu0 %v2180
      %2198 = vmatmul.f32.gmra.mxu0 %v2177
      %v2199 = vpop.f32.mrf.mxu0
      %v2200 = vadd.f32 0.0, %v2199
      %2201 = vdwg.mxu0
      %v2203 = vsel %vm1263, %v1968, 0
      %v2206 = vsel %vm1263, %v2048, 0
      %2208 = vmatpush.xpose.msra.mxu0 0.0
      %2209 = vmatpush.xpose.msra.mxu0 0.0
      %2210 = vmatpush.xpose.msra.mxu0 0.0
      %2211 = vmatpush.xpose.msra.mxu0 0.0
      %2212 = vmatpush.xpose.msra.mxu0 0.0
      %2213 = vmatpush.xpose.msra.mxu0 0.0
      %2214 = vmatpush.xpose.msra.mxu0 0.0
      %2215 = vmatpush.xpose.msra.mxu0 0.0
      %2216 = vmatpush.xpose.msra.mxu0 0.0
      %2217 = vmatpush.xpose.msra.mxu0 0.0
      %2218 = vmatpush.xpose.msra.mxu0 0.0
      %2219 = vmatpush.xpose.msra.mxu0 0.0
      %2220 = vmatpush.xpose.msra.mxu0 0.0
      %2221 = vmatpush.xpose.msra.mxu0 0.0
      %2222 = vmatpush.xpose.msra.mxu0 0.0
      %2223 = vmatpush.xpose.msra.mxu0 %v2206
      %2224 = vmatmul.f32.gmra.mxu0 %v2203
      %v2225 = vpop.f32.mrf.mxu0
      %v2226 = vadd.f32 0.0, %v2225
      %2227 = vdwg.mxu0
      %v2229 = vsel %vm1263, %v1988, 0
      %v2232 = vsel %vm1263, %v2068, 0
      %2234 = vmatpush.xpose.msra.mxu0 0.0
      %2235 = vmatpush.xpose.msra.mxu0 0.0
      %2236 = vmatpush.xpose.msra.mxu0 0.0
      %2237 = vmatpush.xpose.msra.mxu0 0.0
      %2238 = vmatpush.xpose.msra.mxu0 0.0
      %2239 = vmatpush.xpose.msra.mxu0 0.0
      %2240 = vmatpush.xpose.msra.mxu0 0.0
      %2241 = vmatpush.xpose.msra.mxu0 0.0
      %2242 = vmatpush.xpose.msra.mxu0 0.0
      %2243 = vmatpush.xpose.msra.mxu0 0.0
      %2244 = vmatpush.xpose.msra.mxu0 0.0
      %2245 = vmatpush.xpose.msra.mxu0 0.0
      %2246 = vmatpush.xpose.msra.mxu0 0.0
      %2247 = vmatpush.xpose.msra.mxu0 0.0
      %2248 = vmatpush.xpose.msra.mxu0 0.0
      %2249 = vmatpush.xpose.msra.mxu0 %v2232
      %2250 = vmatmul.f32.gmra.mxu0 %v2229
      %v2251 = vpop.f32.mrf.mxu0
      %v2252 = vadd.f32 0.0, %v2251
      %2253 = vdwg.mxu0
      %v2254 = vmul.f32 %v2174, 0.35355338
      %v2255 = vmul.f32 %v2200, 0.35355338
      %v2256 = vmul.f32 %v2226, 0.35355338
      %v2257 = vmul.f32 %v2252, 0.35355338
      %v2258 = vsel %vm1263, %v2254, -inf
      %2259 = vmax.xlane.f32.xlu0 %v2258
      %v2260 = vpop.xlane.xlu0 %2259
      %v2261 = vsel %vm1263, %v2255, -inf
      %2262 = vmax.xlane.f32.xlu0 %v2261
      %v2263 = vpop.xlane.xlu0 %2262
      %v2264 = vsel %vm1263, %v2256, -inf
      %2265 = vmax.xlane.f32.xlu0 %v2264
      %v2266 = vpop.xlane.xlu0 %2265
      %v2267 = vsel %vm1263, %v2257, -inf
      %2268 = vmax.xlane.f32.xlu0 %v2267
      %v2269 = vpop.xlane.xlu0 %2268
      %v2270 = vsub.f32 %v2254, %v2260
      %v2271 = vsub.f32 %v2255, %v2263
      %v2272 = vsub.f32 %v2256, %v2266
      %v2273 = vsub.f32 %v2257, %v2269
      %v2274 = vmul.f32 %v2270, 1.442695
      %v2275 = vpow.pop %v2274
      %v2276 = vmul.f32 %v2271, 1.442695
      %v2277 = vpow.pop %v2276
      %v2278 = vmul.f32 %v2272, 1.442695
      %v2279 = vpow.pop %v2278
      %v2280 = vmul.f32 %v2273, 1.442695
      %v2281 = vpow.pop %v2280
      %v2282 = vsel %vm1263, %v2275, 0.0
      %2283 = vadd.xlane.f32.xlu0 %v2282
      %v2284 = vpop.xlane.xlu0 %2283
      %v2285 = vsel %vm1263, %v2277, 0.0
      %2286 = vadd.xlane.f32.xlu0 %v2285
      %v2287 = vpop.xlane.xlu0 %2286
      %v2288 = vsel %vm1263, %v2279, 0.0
      %2289 = vadd.xlane.f32.xlu0 %v2288
      %v2290 = vpop.xlane.xlu0 %2289
      %v2291 = vsel %vm1263, %v2281, 0.0
      %2292 = vadd.xlane.f32.xlu0 %v2291
      %v2293 = vpop.xlane.xlu0 %2292
      %v2294 = vrcp.pop %v2284
      %v2295 = vmul.f32 %v2284, %v2294
      %v2296 = vsub.f32 1.0, %v2295
      %v2297 = vmul.f32 %v2294, %v2296
      %v2298 = vadd.f32 %v2294, %v2297
      %vm2299 = vweird.f32 %v2284
      %vm2300 = vweird.f32 %v2294
      %vm2301 = vmor %vm2299, %vm2300
      %v2302 = vsel %vm2301, %v2294, %v2298
      %v2303 = vand.u32 2147483647, %v2284
      %vm2304 = vcmp.eq.f32.partialorder %v2303, 8.507059e+37
      %v2305 = vand.u32 %v2284, 2147483648
      %v2306 = vor.u32 1.1754944e-38, %v2305
      %v2307 = vsel %vm2304, %v2306, %v2302
      %v2308 = vrcp.pop %v2287
      %v2309 = vmul.f32 %v2287, %v2308
      %v2310 = vsub.f32 1.0, %v2309
      %v2311 = vmul.f32 %v2308, %v2310
      %v2312 = vadd.f32 %v2308, %v2311
      %vm2313 = vweird.f32 %v2287
      %vm2314 = vweird.f32 %v2308
      %vm2315 = vmor %vm2313, %vm2314
      %v2316 = vsel %vm2315, %v2308, %v2312
      %v2317 = vand.u32 2147483647, %v2287
      %vm2318 = vcmp.eq.f32.partialorder %v2317, 8.507059e+37
      %v2319 = vand.u32 %v2287, 2147483648
      %v2320 = vor.u32 1.1754944e-38, %v2319
      %v2321 = vsel %vm2318, %v2320, %v2316
      %v2322 = vrcp.pop %v2290
      %v2323 = vmul.f32 %v2290, %v2322
      %v2324 = vsub.f32 1.0, %v2323
      %v2325 = vmul.f32 %v2322, %v2324
      %v2326 = vadd.f32 %v2322, %v2325
      %vm2327 = vweird.f32 %v2290
      %vm2328 = vweird.f32 %v2322
      %vm2329 = vmor %vm2327, %vm2328
      %v2330 = vsel %vm2329, %v2322, %v2326
      %v2331 = vand.u32 2147483647, %v2290
      %vm2332 = vcmp.eq.f32.partialorder %v2331, 8.507059e+37
      %v2333 = vand.u32 %v2290, 2147483648
      %v2334 = vor.u32 1.1754944e-38, %v2333
      %v2335 = vsel %vm2332, %v2334, %v2330
      %v2336 = vrcp.pop %v2293
      %v2337 = vmul.f32 %v2293, %v2336
      %v2338 = vsub.f32 1.0, %v2337
      %v2339 = vmul.f32 %v2336, %v2338
      %v2340 = vadd.f32 %v2336, %v2339
      %vm2341 = vweird.f32 %v2293
      %vm2342 = vweird.f32 %v2336
      %vm2343 = vmor %vm2341, %vm2342
      %v2344 = vsel %vm2343, %v2336, %v2340
      %v2345 = vand.u32 2147483647, %v2293
      %vm2346 = vcmp.eq.f32.partialorder %v2345, 8.507059e+37
      %v2347 = vand.u32 %v2293, 2147483648
      %v2348 = vor.u32 1.1754944e-38, %v2347
      %v2349 = vsel %vm2346, %v2348, %v2344
      %v2350 = vmul.f32 %v2275, %v2307
      %v2351 = vmul.f32 %v2277, %v2321
      %v2352 = vmul.f32 %v2279, %v2335
      %v2353 = vmul.f32 %v2281, %v2349
      %v2355 = vsel %vm1263, %v2350, 0
      %2357 = vmatpush.msra.mxu0 0.0
      %2358 = vmatpush.msra.mxu0 0.0
      %2359 = vmatpush.msra.mxu0 0.0
      %2360 = vmatpush.msra.mxu0 0.0
      %2361 = vmatpush.msra.mxu0 0.0
      %2362 = vmatpush.msra.mxu0 0.0
      %2363 = vmatpush.msra.mxu0 0.0
      %2364 = vmatpush.msra.mxu0 0.0
      %2365 = vmatpush.msra.mxu0 0.0
      %2366 = vmatpush.msra.mxu0 0.0
      %2367 = vmatpush.msra.mxu0 0.0
      %2368 = vmatpush.msra.mxu0 0.0
      %2369 = vmatpush.msra.mxu0 0.0
      %2370 = vmatpush.msra.mxu0 0.0
      %2371 = vmatpush.msra.mxu0 0.0
      %2372 = vmatpush.msra.mxu0 %v2088
      %2373 = vmatmul.f32.gmra.mxu0 %v2355
      %v2374 = vpop.f32.mrf.mxu0
      %v2375 = vadd.f32 0.0, %v2374
      %2376 = vdwg.mxu0
      %v2378 = vsel %vm1263, %v2351, 0
      %2380 = vmatpush.msra.mxu0 0.0
      %2381 = vmatpush.msra.mxu0 0.0
      %2382 = vmatpush.msra.mxu0 0.0
      %2383 = vmatpush.msra.mxu0 0.0
      %2384 = vmatpush.msra.mxu0 0.0
      %2385 = vmatpush.msra.mxu0 0.0
      %2386 = vmatpush.msra.mxu0 0.0
      %2387 = vmatpush.msra.mxu0 0.0
      %2388 = vmatpush.msra.mxu0 0.0
      %2389 = vmatpush.msra.mxu0 0.0
      %2390 = vmatpush.msra.mxu0 0.0
      %2391 = vmatpush.msra.mxu0 0.0
      %2392 = vmatpush.msra.mxu0 0.0
      %2393 = vmatpush.msra.mxu0 0.0
      %2394 = vmatpush.msra.mxu0 0.0
      %2395 = vmatpush.msra.mxu0 %v2108
      %2396 = vmatmul.f32.gmra.mxu0 %v2378
      %v2397 = vpop.f32.mrf.mxu0
      %v2398 = vadd.f32 0.0, %v2397
      %2399 = vdwg.mxu0
      %v2401 = vsel %vm1263, %v2352, 0
      %2403 = vmatpush.msra.mxu0 0.0
      %2404 = vmatpush.msra.mxu0 0.0
      %2405 = vmatpush.msra.mxu0 0.0
      %2406 = vmatpush.msra.mxu0 0.0
      %2407 = vmatpush.msra.mxu0 0.0
      %2408 = vmatpush.msra.mxu0 0.0
      %2409 = vmatpush.msra.mxu0 0.0
      %2410 = vmatpush.msra.mxu0 0.0
      %2411 = vmatpush.msra.mxu0 0.0
      %2412 = vmatpush.msra.mxu0 0.0
      %2413 = vmatpush.msra.mxu0 0.0
      %2414 = vmatpush.msra.mxu0 0.0
      %2415 = vmatpush.msra.mxu0 0.0
      %2416 = vmatpush.msra.mxu0 0.0
      %2417 = vmatpush.msra.mxu0 0.0
      %2418 = vmatpush.msra.mxu0 %v2128
      %2419 = vmatmul.f32.gmra.mxu0 %v2401
      %v2420 = vpop.f32.mrf.mxu0
      %v2421 = vadd.f32 0.0, %v2420
      %2422 = vdwg.mxu0
      %v2424 = vsel %vm1263, %v2353, 0
      %2426 = vmatpush.msra.mxu0 0.0
      %2427 = vmatpush.msra.mxu0 0.0
      %2428 = vmatpush.msra.mxu0 0.0
      %2429 = vmatpush.msra.mxu0 0.0
      %2430 = vmatpush.msra.mxu0 0.0
      %2431 = vmatpush.msra.mxu0 0.0
      %2432 = vmatpush.msra.mxu0 0.0
      %2433 = vmatpush.msra.mxu0 0.0
      %2434 = vmatpush.msra.mxu0 0.0
      %2435 = vmatpush.msra.mxu0 0.0
      %2436 = vmatpush.msra.mxu0 0.0
      %2437 = vmatpush.msra.mxu0 0.0
      %2438 = vmatpush.msra.mxu0 0.0
      %2439 = vmatpush.msra.mxu0 0.0
      %2440 = vmatpush.msra.mxu0 0.0
      %2441 = vmatpush.msra.mxu0 %v2148
      %2442 = vmatmul.f32.gmra.mxu0 %v2424
      %v2443 = vpop.f32.mrf.mxu0
      %v2444 = vadd.f32 0.0, %v2443
      %2445 = vdwg.mxu0
      %s2446 = scalar_lea.vmem %s7, 32
      %v2447 = vld [vmem:[%s2446] sm:$0xff]
      %v2448 = vld [vmem:[%s2446 + $0x8] sm:$0xff]
      %v2449 = vld [vmem:[%s2446 + $0x10] sm:$0xff]
      %v2450 = vld [vmem:[%s2446 + $0x18] sm:$0xff]
      %v2452 = vsel %vm1263, %v2375, 0
      %2454 = vmatpush.msra.mxu0 0.0
      %2455 = vmatpush.msra.mxu0 0.0
      %2456 = vmatpush.msra.mxu0 0.0
      %2457 = vmatpush.msra.mxu0 0.0
      %2458 = vmatpush.msra.mxu0 0.0
      %2459 = vmatpush.msra.mxu0 0.0
      %2460 = vmatpush.msra.mxu0 0.0
      %2461 = vmatpush.msra.mxu0 0.0
      %2462 = vmatpush.msra.mxu0 0.0
      %2463 = vmatpush.msra.mxu0 0.0
      %2464 = vmatpush.msra.mxu0 0.0
      %2465 = vmatpush.msra.mxu0 0.0
      %2466 = vmatpush.msra.mxu0 0.0
      %2467 = vmatpush.msra.mxu0 0.0
      %2468 = vmatpush.msra.mxu0 0.0
      %2469 = vmatpush.msra.mxu0 %v2447
      %2470 = vmatmul.f32.gmra.mxu0 %v2452
      %v2471 = vpop.f32.mrf.mxu0
      %v2472 = vadd.f32 0.0, %v2471
      %2473 = vdwg.mxu0
      %v2475 = vsel %vm1263, %v2398, 0
      %2477 = vmatpush.msra.mxu0 0.0
      %2478 = vmatpush.msra.mxu0 0.0
      %2479 = vmatpush.msra.mxu0 0.0
      %2480 = vmatpush.msra.mxu0 0.0
      %2481 = vmatpush.msra.mxu0 0.0
      %2482 = vmatpush.msra.mxu0 0.0
      %2483 = vmatpush.msra.mxu0 0.0
      %2484 = vmatpush.msra.mxu0 0.0
      %2485 = vmatpush.msra.mxu0 0.0
      %2486 = vmatpush.msra.mxu0 0.0
      %2487 = vmatpush.msra.mxu0 0.0
      %2488 = vmatpush.msra.mxu0 0.0
      %2489 = vmatpush.msra.mxu0 0.0
      %2490 = vmatpush.msra.mxu0 0.0
      %2491 = vmatpush.msra.mxu0 0.0
      %2492 = vmatpush.msra.mxu0 %v2448
      %2493 = vmatmul.f32.gmra.mxu0 %v2475
      %v2494 = vpop.f32.mrf.mxu0
      %v2495 = vadd.f32 0.0, %v2494
      %2496 = vdwg.mxu0
      %v2498 = vsel %vm1263, %v2421, 0
      %2500 = vmatpush.msra.mxu0 0.0
      %2501 = vmatpush.msra.mxu0 0.0
      %2502 = vmatpush.msra.mxu0 0.0
      %2503 = vmatpush.msra.mxu0 0.0
      %2504 = vmatpush.msra.mxu0 0.0
      %2505 = vmatpush.msra.mxu0 0.0
      %2506 = vmatpush.msra.mxu0 0.0
      %2507 = vmatpush.msra.mxu0 0.0
      %2508 = vmatpush.msra.mxu0 0.0
      %2509 = vmatpush.msra.mxu0 0.0
      %2510 = vmatpush.msra.mxu0 0.0
      %2511 = vmatpush.msra.mxu0 0.0
      %2512 = vmatpush.msra.mxu0 0.0
      %2513 = vmatpush.msra.mxu0 0.0
      %2514 = vmatpush.msra.mxu0 0.0
      %2515 = vmatpush.msra.mxu0 %v2449
      %2516 = vmatmul.f32.gmra.mxu0 %v2498
      %v2517 = vpop.f32.mrf.mxu0
      %v2518 = vadd.f32 0.0, %v2517
      %2519 = vdwg.mxu0
      %v2521 = vsel %vm1263, %v2444, 0
      %2523 = vmatpush.msra.mxu0 0.0
      %2524 = vmatpush.msra.mxu0 0.0
      %2525 = vmatpush.msra.mxu0 0.0
      %2526 = vmatpush.msra.mxu0 0.0
      %2527 = vmatpush.msra.mxu0 0.0
      %2528 = vmatpush.msra.mxu0 0.0
      %2529 = vmatpush.msra.mxu0 0.0
      %2530 = vmatpush.msra.mxu0 0.0
      %2531 = vmatpush.msra.mxu0 0.0
      %2532 = vmatpush.msra.mxu0 0.0
      %2533 = vmatpush.msra.mxu0 0.0
      %2534 = vmatpush.msra.mxu0 0.0
      %2535 = vmatpush.msra.mxu0 0.0
      %2536 = vmatpush.msra.mxu0 0.0
      %2537 = vmatpush.msra.mxu0 0.0
      %2538 = vmatpush.msra.mxu0 %v2450
      %2539 = vmatmul.f32.gmra.mxu0 %v2521
      %v2540 = vpop.f32.mrf.mxu0
      %v2541 = vadd.f32 0.0, %v2540
      %2542 = vdwg.mxu0
      %v2543 = vsel %vm1019, %v2472, 0.0
      %v2544 = vsel %vm1019, %v2495, 0.0
      %v2545 = vadd.f32 %v2543, %v2544
      %v2546 = vsel %vm1019, %v2518, 0.0
      %v2547 = vadd.f32 %v2545, %v2546
      %v2548 = vsel %vm1019, %v2541, 0.0
      %v2549 = vadd.f32 %v2547, %v2548
      %s2550 = scalar_lea.vmem %s8, 1
      %v2551 = vld [vmem:[%s2550] sm:$0x1]
      %v2553 = vperm.slane %v2551, 0
      %v2555 = vadd.f32 %v2549, %v2553
      %v2556 = vadd.f32 %v1808, %v2555
      %v2557 = vsel %vm1019, %v2556, 0.0
      %2558 = vadd.xlane.f32.xlu0 %v2557
      %v2559 = vpop.xlane.xlu0 %2558
      %v2560 = vmul.f32 %v2559, %v1678
      %v2561 = vsub.f32 %v2556, %v2560
      %v2562 = vmul.f32 %v2561, %v2561
      %v2563 = vsel %vm1019, %v2562, 0.0
      %2564 = vadd.xlane.f32.xlu0 %v2563
      %v2565 = vpop.xlane.xlu0 %2564
      %v2566 = vmul.f32 %v2565, %v1678
      %v2567 = vadd.f32 %v2566, 1e-05
      %v2568 = vrsqrt.pop %v2567
      %v2569 = vmul.f32 %v2568, %v2567
      %v2570 = vmul.f32 %v2569, %v2568
      %v2571 = vmul.f32 0.5, %v2570
      %v2572 = vsub.f32 1.5, %v2571
      %v2573 = vmul.f32 %v2568, %v2572
      %vm2574 = vweird.f32 %v2567
      %vm2575 = vweird.f32 %v2568
      %vm2576 = vmor %vm2574, %vm2575
      %v2577 = vsel %vm2576, %v2568, %v2573
      %v2578 = vmul.f32 %v2561, %v2577
      %s2579 = scalar_lea.vmem %s9, 1
      %v2580 = vld [vmem:[%s2579] sm:$0x1]
      %v2582 = vperm.slane %v2580, 0
      %v2584 = vmul.f32 %v2578, %v2582
      %s2585 = scalar_lea.vmem %s10, 1
      %v2586 = vld [vmem:[%s2585] sm:$0x1]
      %v2588 = vperm.slane %v2586, 0
      %v2590 = vadd.f32 %v2584, %v2588
      %s2591 = scalar_lea.vmem %s13, 32
      %v2592 = vld [vmem:[%s2591] sm:$0xff]
      %v2593 = vld [vmem:[%s2591 + $0x8] sm:$0xff]
      %v2594 = vld [vmem:[%s2591 + $0x10] sm:$0xff]
      %v2595 = vld [vmem:[%s2591 + $0x18] sm:$0xff]
      %s2596 = scalar_lea.vmem %s14, 1
      %v2597 = vld [vmem:[%s2596] sm:$0x1]
      %v2599 = vperm.slane %v2597, 0
      %v2602 = vsel %vm1019, %v2590, 0
      %2604 = vmatpush.msra.mxu0 0.0
      %2605 = vmatpush.msra.mxu0 0.0
      %2606 = vmatpush.msra.mxu0 0.0
      %2607 = vmatpush.msra.mxu0 0.0
      %2608 = vmatpush.msra.mxu0 0.0
      %2609 = vmatpush.msra.mxu0 0.0
      %2610 = vmatpush.msra.mxu0 0.0
      %2611 = vmatpush.msra.mxu0 0.0
      %2612 = vmatpush.msra.mxu0 0.0
      %2613 = vmatpush.msra.mxu0 0.0
      %2614 = vmatpush.msra.mxu0 0.0
      %2615 = vmatpush.msra.mxu0 0.0
      %2616 = vmatpush.msra.mxu0 %v2595
      %2617 = vmatpush.msra.mxu0 %v2594
      %2618 = vmatpush.msra.mxu0 %v2593
      %2619 = vmatpush.msra.mxu0 %v2592
      %2620 = vmatmul.f32.gmra.mxu0 %v2602
      %v2621 = vpop.f32.mrf.mxu0
      %v2622 = vadd.f32 %v2599, %v2621
      %2623 = vdwg.mxu0
      %v2624 = vmax.f32 %v2622, 0.0
      %s2625 = scalar_lea.vmem %s15, 64
      %v2626 = vld [vmem:[%s2625] sm:$0xff]
      %v2627 = vld [vmem:[%s2625 + $0x8] sm:$0xff]
      %v2628 = vld [vmem:[%s2625 + $0x10] sm:$0xff]
      %v2629 = vld [vmem:[%s2625 + $0x18] sm:$0xff]
      %v2630 = vld [vmem:[%s2625 + $0x20] sm:$0xff]
      %v2631 = vld [vmem:[%s2625 + $0x28] sm:$0xff]
      %v2632 = vld [vmem:[%s2625 + $0x30] sm:$0xff]
      %v2633 = vld [vmem:[%s2625 + $0x38] sm:$0xff]
      %s2634 = scalar_lea.vmem %s16, 1
      %v2635 = vld [vmem:[%s2634] sm:$0x1]
      %v2637 = vperm.slane %v2635, 0
      %v2640 = vsel %vm1752, %v2624, 0
      %2642 = vmatpush.msra.mxu0 0.0
      %2643 = vmatpush.msra.mxu0 0.0
      %2644 = vmatpush.msra.mxu0 0.0
      %2645 = vmatpush.msra.mxu0 0.0
      %2646 = vmatpush.msra.mxu0 0.0
      %2647 = vmatpush.msra.mxu0 0.0
      %2648 = vmatpush.msra.mxu0 0.0
      %2649 = vmatpush.msra.mxu0 0.0
      %2650 = vmatpush.msra.mxu0 %v2633
      %2651 = vmatpush.msra.mxu0 %v2632
      %2652 = vmatpush.msra.mxu0 %v2631
      %2653 = vmatpush.msra.mxu0 %v2630
      %2654 = vmatpush.msra.mxu0 %v2629
      %2655 = vmatpush.msra.mxu0 %v2628
      %2656 = vmatpush.msra.mxu0 %v2627
      %2657 = vmatpush.msra.mxu0 %v2626
      %2658 = vmatmul.f32.gmra.mxu0 %v2640
      %v2659 = vpop.f32.mrf.mxu0
      %v2660 = vadd.f32 %v2637, %v2659
      %2661 = vdwg.mxu0
      %v2662 = vadd.f32 %v2590, %v2660
      %v2663 = vsel %vm1019, %v2662, 0.0
      %2664 = vadd.xlane.f32.xlu0 %v2663
      %v2665 = vpop.xlane.xlu0 %2664
      %v2666 = vmul.f32 %v2665, %v1678
      %v2667 = vsub.f32 %v2662, %v2666
      %v2668 = vmul.f32 %v2667, %v2667
      %v2669 = vsel %vm1019, %v2668, 0.0
      %2670 = vadd.xlane.f32.xlu0 %v2669
      %v2671 = vpop.xlane.xlu0 %2670
      %v2672 = vmul.f32 %v2671, %v1678
      %v2673 = vadd.f32 %v2672, 1e-05
      %v2674 = vrsqrt.pop %v2673
      %v2675 = vmul.f32 %v2674, %v2673
      %v2676 = vmul.f32 %v2675, %v2674
      %v2677 = vmul.f32 0.5, %v2676
      %v2678 = vsub.f32 1.5, %v2677
      %v2679 = vmul.f32 %v2674, %v2678
      %vm2680 = vweird.f32 %v2673
      %vm2681 = vweird.f32 %v2674
      %vm2682 = vmor %vm2680, %vm2681
      %v2683 = vsel %vm2682, %v2674, %v2679
      %v2684 = vmul.f32 %v2667, %v2683
      %s2685 = scalar_lea.vmem %s11, 1
      %v2686 = vld [vmem:[%s2685] sm:$0x1]
      %v2688 = vperm.slane %v2686, 0
      %v2690 = vmul.f32 %v2684, %v2688
      %s2691 = scalar_lea.vmem %s12, 1
      %v2692 = vld [vmem:[%s2691] sm:$0x1]
      %v2694 = vperm.slane %v2692, 0
      %v2696 = vadd.f32 %v2690, %v2694
      %v2697 = vld [vmem:[%s17] sm:$0x1]
      %v2699 = vperm.slane %v2697, 0
      %v2701 = vmul.f32 %v2696, %v2699
      %v2702 = vsel %vm1019, %v2701, 0.0
      %2703 = vadd.xlane.f32.xlu0 %v2702
      %v2704 = vpop.xlane.xlu0 %2703
      %v2705 = vld [vmem:[#allocation2] sm:$0x1]
      %v2707 = vperm.slane %v2705, 0
      %v2709 = vadd.f32 %v2704, %v2707
      %v2710 = vmax.f32 %v2709, 0.0
      %v2711 = vld [vmem:[%s615] sm:$0xff]
      %v2712 = vmul.f32 %v2710, %v2711
      %vm2713 = vcmask 7168
      %2714 = vst.msk [vmem:[%s619] sm:$0xff] %vm2713, %v2712
      %p2715 = scmp.lt.s32.totalorder %s32, 1
      %s2716 = scalar_select %p2715, %s32, 1
      %s2717 = smul.addr %s2716, 8
      %s2718 = scalar_lea.vmem %s19, %s2717
      // Predicated region
      $region97: #{tpu_custom_call.1} parent=95 // pred_check
        %p2719 = pneg %p459
      $region98: #{tpu_custom_call.1} parent=95 // pred_check_branch
        %2721 = sbr.rel (%p2719) target = $region100
      $region99: #{tpu_custom_call.1} parent=95 // pred_region
        _
      $region100: #{tpu_custom_call.1} parent=95 // pred_fallthru
        _
    $region96: #{tpu_custom_call.1} parent=5 // pred_fallthru
      _
    %p2722 = scmp.le.s32.totalorder 2, %s27
    // Predicated region
    $region101: #{tpu_custom_call.1} parent=5 // pred_check
      %p2723 = pneg %p2722
    $region102: #{tpu_custom_call.1} parent=5 // pred_check_branch
      %2725 = sbr.rel (%p2723) target = $region104
    $region103: #{tpu_custom_call.1} parent=5 // pred_region
      %s2726 = ssub.s32 %s27, 2
      // Predicated region
      $region105: #{tpu_custom_call.1} parent=103 // pred_check
        %p2727 = pneg %p465
      $region106: #{tpu_custom_call.1} parent=103 // pred_check_branch
        %2729 = sbr.rel (%p2727) target = $region108
      $region107: #{tpu_custom_call.1} parent=103 // pred_region
        %p2730 = scmp.lt.s32.totalorder %s33, 1
        %s2731 = scalar_select %p2730, %s33, 1
        %s2732 = smul.addr %s2731, 8
        %s2733 = scalar_lea.vmem %s19, %s2732
      $region108: #{tpu_custom_call.1} parent=103 // pred_fallthru
        _
    $region104: #{tpu_custom_call.1} parent=5 // pred_fallthru
      _
  $region6: #{tpu_custom_call.1} parent=0 // loop_footer
    %s31 = sadd.s32 1, %s27
  $region7: #{tpu_custom_call.1} parent=0 // loop_footer_branch
    %26 = sbr.rel target = $region3
  $region8: #{tpu_custom_call.1} parent=0 // loop_exit
    _

</llo_original>
